<compile_context>
chip_gen: v7x
topology: tpu7x:2x2x1
jax: 0.10.0
libtpu: 0.0.40
codegen_flags: <defaults>
</compile_context>

<pallas_src>
import functools

import jax
import jax.numpy as jnp
from jax.experimental import pallas as pl
from jax.experimental.pallas import tpu as pltpu


N_ACTION = 4
CONVSIZE = 16384          # module hard-codes convsize = 16384
ADDITIONAL = 48           # extra features when activateAdditional=True
ADD_PAD = 128             # additional features zero-padded to one lane tile
HIDDEN = 256
N_PAD = 128               # output lane dim padded 4 -> 128 (lane-dense stores)


def _mlp_kernel(x_ref, y_ref, w1x_ref, s1_ref, w1y_ref, b1_ref, w2_ref, b2_ref,
                out_ref, acc_ref):
    """out = relu(x @ (W1x_q * s1) + y @ W1y + b1) @ W2 + b2.

    Grid axis 0 ("arbitrary") tiles the 16384-wide K reduction; the f32
    accumulator persists in VMEM scratch across K steps (k is the only grid
    axis, so all K steps of a call run consecutively on one core).
    """
    k = pl.program_id(0)

    @pl.when(k == 0)
    def _():
        # Fold the small "additional"-feature tail (bf16) in on the first step.
        acc_ref[...] = jnp.dot(
            y_ref[...], w1y_ref[...], preferred_element_type=jnp.float32
        )

    # Weight-only int8: int8 values are exactly representable in bf16, so the
    # in-kernel cast is lossless; the per-column dequant scale is applied to
    # this block's f32 partial sum (equivalent to scaling the weights).
    w_blk = w1x_ref[...].astype(jnp.bfloat16)
    acc_ref[...] += s1_ref[...] * jnp.dot(
        x_ref[...], w_blk, preferred_element_type=jnp.float32
    )

    @pl.when(k == pl.num_programs(0) - 1)
    def _():
        h = jnp.maximum(acc_ref[...] + b1_ref[...], 0.0)
        out = jnp.dot(h, w2_ref[...], preferred_element_type=jnp.float32)
        out_ref[...] = (out + b2_ref[...]).astype(out_ref.dtype)


@functools.partial(jax.jit, static_argnames=("tk",))
def dqn_fully_forward(x, y, w1x_q, w1x_scale, w1y, b1, w2, b2, *, tk=8192):
    """Pallas implementation of DQN_fully.forward (activateAdditional=True).

    x        : (B, C, H, W) f32, flattens to (B, 16384)
    y        : (B, ...)     f32, flattens to (B, 48)
    w1x_q    : (16384, 256) int8  (per-column quantized conv-feature rows)
    w1x_scale: (1, 256)     f32   dequant scale
    w1y      : (128, 256)   bf16  (rows 48..127 are zero)
    b1       : (1, 256)     f32
    w2       : (256, 128)   f32   (cols 4..127 zero)
    b2       : (1, 128)     f32   (cols 4..127 zero)
    """
    if CONVSIZE % tk != 0 or tk < 2048:
        raise ValueError("tk must be a large divisor of 16384 (>= 2048)")

    B = x.shape[0]
    x_feat = x.reshape(B, -1).astype(jnp.bfloat16)              # (B, 16384)
    y_flat = y.reshape(B, -1)                                   # (B, 48)
    y_feat = jnp.pad(
        y_flat, ((0, 0), (0, ADD_PAD - y_flat.shape[1]))
    ).astype(jnp.bfloat16)                                      # (B, 128)

    nk = CONVSIZE // tk

    cost = pl.CostEstimate(
        flops=2 * B * (CONVSIZE + ADD_PAD) * HIDDEN + 2 * B * HIDDEN * N_PAD,
        transcendentals=0,
        bytes_accessed=(
            x_feat.size * 2 + y_feat.size * 2          # bf16 activations
            + w1x_q.size * 1                           # int8 W1x (dominant)
            + w1y.size * 2                             # bf16 W1y
            + (w1x_scale.size + b1.size + w2.size + b2.size + B * N_PAD) * 4
        ),
    )

    out = pl.pallas_call(
        _mlp_kernel,
        out_shape=jax.ShapeDtypeStruct((B, N_PAD), jnp.float32),
        grid_spec=pltpu.PrefetchScalarGridSpec(
            num_scalar_prefetch=0,
            grid=(nk,),
            in_specs=[
                pl.BlockSpec((B, tk), lambda k: (0, k)),          # x feats (bf16)
                pl.BlockSpec((B, ADD_PAD), lambda k: (0, 0)),     # y tail  (bf16)
                pl.BlockSpec((tk, HIDDEN), lambda k: (k, 0)),     # W1x rows (int8)
                pl.BlockSpec((1, HIDDEN), lambda k: (0, 0)),      # dequant scale
                pl.BlockSpec((ADD_PAD, HIDDEN), lambda k: (0, 0)),  # W1y (bf16)
                pl.BlockSpec((1, HIDDEN), lambda k: (0, 0)),      # b1
                pl.BlockSpec((HIDDEN, N_PAD), lambda k: (0, 0)),  # W2 (padded)
                pl.BlockSpec((1, N_PAD), lambda k: (0, 0)),       # b2 (padded)
            ],
            out_specs=pl.BlockSpec((B, N_PAD), lambda k: (0, 0)),
            scratch_shapes=[pltpu.VMEM((B, HIDDEN), jnp.float32)],
        ),
        compiler_params=pltpu.CompilerParams(
            dimension_semantics=("arbitrary",),
            vmem_limit_bytes=24 * 1024 * 1024,
        ),
        cost_estimate=cost,
    )(x_feat, y_feat, w1x_q, w1x_scale, w1y, b1, w2, b2)

    # Drop the output lane padding.
    return out[:, :N_ACTION]


def _init_params(key):
    """PyTorch-Linear-like init (uniform +-1/sqrt(fan_in)), kernel layout.

    Returns (kernel_params, f32_reference_params).
    """
    k1, k2, k3, k4 = jax.random.split(key, 4)
    k_in = CONVSIZE + ADDITIONAL
    lim1 = 1.0 / jnp.sqrt(jnp.float32(k_in))
    lim2 = 1.0 / jnp.sqrt(jnp.float32(HIDDEN))
    # Stored transposed relative to PyTorch: (in, out).
    w1 = jax.random.uniform(k1, (k_in, HIDDEN), jnp.float32, -lim1, lim1)
    b1 = jax.random.uniform(k2, (1, HIDDEN), jnp.float32, -lim1, lim1)
    w2 = jax.random.uniform(k3, (HIDDEN, N_ACTION), jnp.float32, -lim2, lim2)
    b2 = jax.random.uniform(k4, (1, N_ACTION), jnp.float32, -lim2, lim2)

    # Weight-only int8 quantization of the conv-feature rows of W1
    # (per output column, symmetric).
    w1x_f = w1[:CONVSIZE]                                           # (16384, 256)
    w1x_scale = jnp.maximum(
        jnp.max(jnp.abs(w1x_f), axis=0, keepdims=True), 1e-12) / 127.0
    w1x_q = jnp.clip(jnp.round(w1x_f / w1x_scale), -127, 127).astype(jnp.int8)

    w1y = jnp.pad(w1[CONVSIZE:],                                    # (128, 256)
                  ((0, ADD_PAD - ADDITIONAL), (0, 0))).astype(jnp.bfloat16)
    w2p = jnp.pad(w2, ((0, 0), (0, N_PAD - N_ACTION)))              # (256, 128)
    b2p = jnp.pad(b2, ((0, 0), (0, N_PAD - N_ACTION)))              # (1, 128)

    kernel_params = (w1x_q, w1x_scale, w1y, b1, w2p, b2p)
    ref_params = (w1, b1, w2, b2)
    return kernel_params, ref_params


if __name__ == "__main__":
    # activateAdditional = True path (covers the concat).
    B = 2
    x_shape = (B, 4, 64, 64)      # flattens to convsize = 16384
    y_shape = (B, ADDITIONAL)

    key = jax.random.PRNGKey(0)
    kx, ky, kp = jax.random.split(key, 3)
    x = jax.random.normal(kx, x_shape, jnp.float32)
    y = jax.random.normal(ky, y_shape, jnp.float32)
    (w1x_q, w1x_scale, w1y, b1, w2p, b2p), (w1_f, b1_f, w2_f, b2_f) = \
        _init_params(kp)

    out = dqn_fully_forward(x, y, w1x_q, w1x_scale, w1y, b1, w2p, b2p)
    out = jax.block_until_ready(out)
    assert out.shape == (B, N_ACTION)

    hp = jax.lax.Precision.HIGHEST

    # Reference 1: same quantization as the kernel (int8-dequant W1x, bf16
    # activations / W1y) -> should match tightly.
    feat_x = x.reshape(B, -1).astype(jnp.bfloat16).astype(jnp.float32)
    feat_y = y.reshape(B, -1).astype(jnp.bfloat16).astype(jnp.float32)
    w1x_deq = w1x_q.astype(jnp.float32) * w1x_scale
    w1y_f = w1y[:ADDITIONAL].astype(jnp.float32)
    h_q = jnp.maximum(
        jnp.dot(feat_x, w1x_deq, precision=hp)
        + jnp.dot(feat_y, w1y_f, precision=hp) + b1, 0.0)
    ref_q = jnp.dot(h_q, w2p[:, :N_ACTION], precision=hp) + b2p[:, :N_ACTION]
    assert jnp.allclose(out, ref_q, atol=1e-2, rtol=1e-2), (out, ref_q)

    # Reference 2: the true f32 PyTorch semantics (un-quantized) with a looser
    # tolerance, to validate the weight-only quantization error is small.
    feat = jnp.concatenate([x.reshape(B, -1), y.reshape(B, -1)], axis=1)
    h_f = jnp.maximum(jnp.dot(feat, w1_f, precision=hp) + b1_f, 0.0)
    ref_f = jnp.dot(h_f, w2_f, precision=hp) + b2_f
    assert jnp.allclose(out, ref_f, atol=5e-2, rtol=5e-2), (out, ref_f)

    print("KERNEL_OK")
</pallas_src>

<mosaic_0001>
module attributes {stable_mosaic.version = 11 : i64} {
  func.func @_mlp_kernel(%arg0: i32, %arg1: memref<2x8192xbf16, #tpu.memory_space<vmem>>, %arg2: memref<2x128xbf16, #tpu.memory_space<vmem>>, %arg3: memref<8192x256xi8, #tpu.memory_space<vmem>>, %arg4: memref<1x256xf32, #tpu.memory_space<vmem>>, %arg5: memref<128x256xbf16, #tpu.memory_space<vmem>>, %arg6: memref<1x256xf32, #tpu.memory_space<vmem>>, %arg7: memref<256x128xf32, #tpu.memory_space<vmem>>, %arg8: memref<1x128xf32, #tpu.memory_space<vmem>>, %arg9: memref<2x128xf32, #tpu.memory_space<vmem>>, %arg10: memref<2x256xf32, #tpu.memory_space<vmem>>) attributes {dimension_semantics = [#tpu.dimension_semantics<arbitrary>], iteration_bounds = array<i64: 2>, scalar_prefetch = 0 : i64, scratch_operands = 1 : i64, tpu.core_type = #tpu.core_type<tc>, window_params = [{transform_indices = @transform_0, window_bounds = array<i64: 2, 8192>}, {pipeline_mode = #tpu.pipeline_mode<synchronous>, transform_indices = @transform_1, window_bounds = array<i64: 2, 128>}, {transform_indices = @transform_2, window_bounds = array<i64: 8192, 256>}, {pipeline_mode = #tpu.pipeline_mode<synchronous>, transform_indices = @transform_3, window_bounds = array<i64: 1, 256>}, {pipeline_mode = #tpu.pipeline_mode<synchronous>, transform_indices = @transform_4, window_bounds = array<i64: 128, 256>}, {pipeline_mode = #tpu.pipeline_mode<synchronous>, transform_indices = @transform_5, window_bounds = array<i64: 1, 256>}, {pipeline_mode = #tpu.pipeline_mode<synchronous>, transform_indices = @transform_6, window_bounds = array<i64: 256, 128>}, {pipeline_mode = #tpu.pipeline_mode<synchronous>, transform_indices = @transform_7, window_bounds = array<i64: 1, 128>}, {pipeline_mode = #tpu.pipeline_mode<synchronous>, transform_indices = @transform_8, window_bounds = array<i64: 2, 128>}]} {
    %c0_i32 = arith.constant 0 : i32
    %0 = arith.cmpi eq, %arg0, %c0_i32 : i32
    %1 = arith.extui %0 : i1 to i32
    %c0_i32_0 = arith.constant 0 : i32
    %2 = arith.cmpi ne, %1, %c0_i32_0 : i32
    scf.if %2 {
      %c0_11 = arith.constant 0 : index
      %c0_12 = arith.constant 0 : index
      %16 = vector.load %arg2[%c0_11, %c0_12] : memref<2x128xbf16, #tpu.memory_space<vmem>>, vector<2x128xbf16>
      %c0_13 = arith.constant 0 : index
      %c0_14 = arith.constant 0 : index
      %17 = vector.load %arg5[%c0_13, %c0_14] : memref<128x256xbf16, #tpu.memory_space<vmem>>, vector<128x256xbf16>
      %cst_15 = arith.constant dense<0.000000e+00> : vector<2x256xf32>
      %18 = tpu.matmul %16, %17, %cst_15 {dimension_numbers = #tpu.dot_dimension_numbers<[1], [0], [0], [1], [0, 0, 1, 1], [], []>} : vector<2x128xbf16>, vector<128x256xbf16>, vector<2x256xf32> -> vector<2x256xf32>
      %c0_16 = arith.constant 0 : index
      %c0_17 = arith.constant 0 : index
      %19 = vector.load %arg10[%c0_16, %c0_17] : memref<2x256xf32, #tpu.memory_space<vmem>>, vector<2x256xf32>
      tpu.vector_store %arg10[%c0_16, %c0_17], %18 {strides = array<i32>} : memref<2x256xf32, #tpu.memory_space<vmem>>, vector<2x256xf32>,
    } else {
    }
    %c0 = arith.constant 0 : index
    %c0_1 = arith.constant 0 : index
    %3 = vector.load %arg3[%c0, %c0_1] : memref<8192x256xi8, #tpu.memory_space<vmem>>, vector<8192x256xi8>
    %4 = arith.sitofp %3 : vector<8192x256xi8> to vector<8192x256xbf16>
    %c0_2 = arith.constant 0 : index
    %c0_3 = arith.constant 0 : index
    %5 = vector.load %arg10[%c0_2, %c0_3] : memref<2x256xf32, #tpu.memory_space<vmem>>, vector<2x256xf32>
    %c0_4 = arith.constant 0 : index
    %c0_5 = arith.constant 0 : index
    %6 = vector.load %arg4[%c0_4, %c0_5] : memref<1x256xf32, #tpu.memory_space<vmem>>, vector<1x256xf32>
    %c0_6 = arith.constant 0 : index
    %c0_7 = arith.constant 0 : index
    %7 = vector.load %arg1[%c0_6, %c0_7] : memref<2x8192xbf16, #tpu.memory_space<vmem>>, vector<2x8192xbf16>
    %cst = arith.constant dense<0.000000e+00> : vector<2x256xf32>
    %8 = tpu.matmul %7, %4, %cst {dimension_numbers = #tpu.dot_dimension_numbers<[1], [0], [0], [1], [0, 0, 1, 1], [], []>} : vector<2x8192xbf16>, vector<8192x256xbf16>, vector<2x256xf32> -> vector<2x256xf32>
    %9 = vector.broadcast %6 : vector<1x256xf32> to vector<2x256xf32>
    %10 = arith.mulf %9, %8 : vector<2x256xf32>
    %11 = arith.addf %5, %10 : vector<2x256xf32>
    %c0_8 = arith.constant 0 : index
    %c0_9 = arith.constant 0 : index
    %12 = vector.load %arg10[%c0_8, %c0_9] : memref<2x256xf32, #tpu.memory_space<vmem>>, vector<2x256xf32>
    tpu.vector_store %arg10[%c0_8, %c0_9], %11 {strides = array<i32>} : memref<2x256xf32, #tpu.memory_space<vmem>>, vector<2x256xf32>,
    %c1_i32 = arith.constant 1 : i32
    %13 = arith.cmpi eq, %arg0, %c1_i32 : i32
    %14 = arith.extui %13 : i1 to i32
    %c0_i32_10 = arith.constant 0 : i32
    %15 = arith.cmpi ne, %14, %c0_i32_10 : i32
    scf.if %15 {
      %c0_11 = arith.constant 0 : index
      %c0_12 = arith.constant 0 : index
      %16 = vector.load %arg10[%c0_11, %c0_12] : memref<2x256xf32, #tpu.memory_space<vmem>>, vector<2x256xf32>
      %c0_13 = arith.constant 0 : index
      %c0_14 = arith.constant 0 : index
      %17 = vector.load %arg6[%c0_13, %c0_14] : memref<1x256xf32, #tpu.memory_space<vmem>>, vector<1x256xf32>
      %18 = vector.broadcast %17 : vector<1x256xf32> to vector<2x256xf32>
      %19 = arith.addf %16, %18 : vector<2x256xf32>
      %cst_15 = arith.constant 0.000000e+00 : f32
      %20 = vector.broadcast %cst_15 : f32 to vector<2x256xf32>
      %21 = arith.maximumf %19, %20 : vector<2x256xf32>
      %c0_16 = arith.constant 0 : index
      %c0_17 = arith.constant 0 : index
      %22 = vector.load %arg7[%c0_16, %c0_17] : memref<256x128xf32, #tpu.memory_space<vmem>>, vector<256x128xf32>
      %cst_18 = arith.constant dense<0.000000e+00> : vector<2x128xf32>
      %23 = tpu.matmul %21, %22, %cst_18 {dimension_numbers = #tpu.dot_dimension_numbers<[1], [0], [0], [1], [0, 0, 1, 1], [], []>} : vector<2x256xf32>, vector<256x128xf32>, vector<2x128xf32> -> vector<2x128xf32>
      %c0_19 = arith.constant 0 : index
      %c0_20 = arith.constant 0 : index
      %24 = vector.load %arg8[%c0_19, %c0_20] : memref<1x128xf32, #tpu.memory_space<vmem>>, vector<1x128xf32>
      %25 = vector.broadcast %24 : vector<1x128xf32> to vector<2x128xf32>
      %26 = arith.addf %23, %25 : vector<2x128xf32>
      %c0_21 = arith.constant 0 : index
      %c0_22 = arith.constant 0 : index
      %27 = vector.load %arg9[%c0_21, %c0_22] : memref<2x128xf32, #tpu.memory_space<vmem>>, vector<2x128xf32>
      tpu.vector_store %arg9[%c0_21, %c0_22], %26 {strides = array<i32>} : memref<2x128xf32, #tpu.memory_space<vmem>>, vector<2x128xf32>,
    } else {
    }
    return
  }
  func.func @transform_0(%arg0: i32) -> (i32, i32) {
    %c0_i32 = arith.constant 0 : i32
    %c0_i32_0 = arith.constant 0 : i32
    return %c0_i32, %arg0 : i32, i32
  }
  func.func @transform_1(%arg0: i32) -> (i32, i32) {
    %c0_i32 = arith.constant 0 : i32
    %c0_i32_0 = arith.constant 0 : i32
    %c0_i32_1 = arith.constant 0 : i32
    return %c0_i32, %c0_i32_0 : i32, i32
  }
  func.func @transform_2(%arg0: i32) -> (i32, i32) {
    %c0_i32 = arith.constant 0 : i32
    %c0_i32_0 = arith.constant 0 : i32
    return %arg0, %c0_i32 : i32, i32
  }
  func.func @transform_3(%arg0: i32) -> (i32, i32) {
    %c0_i32 = arith.constant 0 : i32
    %c0_i32_0 = arith.constant 0 : i32
    %c0_i32_1 = arith.constant 0 : i32
    return %c0_i32, %c0_i32_0 : i32, i32
  }
  func.func @transform_4(%arg0: i32) -> (i32, i32) {
    %c0_i32 = arith.constant 0 : i32
    %c0_i32_0 = arith.constant 0 : i32
    %c0_i32_1 = arith.constant 0 : i32
    return %c0_i32, %c0_i32_0 : i32, i32
  }
  func.func @transform_5(%arg0: i32) -> (i32, i32) {
    %c0_i32 = arith.constant 0 : i32
    %c0_i32_0 = arith.constant 0 : i32
    %c0_i32_1 = arith.constant 0 : i32
    return %c0_i32, %c0_i32_0 : i32, i32
  }
  func.func @transform_6(%arg0: i32) -> (i32, i32) {
    %c0_i32 = arith.constant 0 : i32
    %c0_i32_0 = arith.constant 0 : i32
    %c0_i32_1 = arith.constant 0 : i32
    return %c0_i32, %c0_i32_0 : i32, i32
  }
  func.func @transform_7(%arg0: i32) -> (i32, i32) {
    %c0_i32 = arith.constant 0 : i32
    %c0_i32_0 = arith.constant 0 : i32
    %c0_i32_1 = arith.constant 0 : i32
    return %c0_i32, %c0_i32_0 : i32, i32
  }
  func.func @transform_8(%arg0: i32) -> (i32, i32) {
    %c0_i32 = arith.constant 0 : i32
    %c0_i32_0 = arith.constant 0 : i32
    %c0_i32_1 = arith.constant 0 : i32
    return %c0_i32, %c0_i32_0 : i32, i32
  }
}

</mosaic_0001>

<llo_original>
// kernel: dqn_fully_forward.1
$region0: #{dqn_fully_forward.1}
  #allocation0 [shape = 'u32[]', space=smem, size = 0x4, offset = 0x4, fixed_abs, tag = 'smem constant byte address 0x4 - core index']
  #allocation1 [shape = 'u32[144,128]{1,0:T(1,128)}', space=vmem, size = 0x12000, scoped, tag = 'internal scratch']
  #allocation2 [shape = 'f32[2,256]{1,0:T(2,128)}', space=vmem, size = 0x800, scoped, tag = 'scratch operand']
  %s0 = inlined_call_operand.vmem [shape: bf16[2,16384], index: 0, kind: input, shape index: {}]
  %s1 = inlined_call_operand.vmem [shape: bf16[2,128], index: 1, kind: input, shape index: {}]
  %s2 = inlined_call_operand.hbm [shape: s8[16384,256], index: 2, kind: input, shape index: {}]
  %s3 = inlined_call_operand.hbm [shape: f32[1,256], index: 3, kind: input, shape index: {}]
  %s4 = inlined_call_operand.hbm [shape: bf16[128,256], index: 4, kind: input, shape index: {}]
  %s5 = inlined_call_operand.hbm [shape: f32[1,256], index: 5, kind: input, shape index: {}]
  %s6 = inlined_call_operand.hbm [shape: f32[256,128], index: 6, kind: input, shape index: {}]
  %s7 = inlined_call_operand.hbm [shape: f32[1,128], index: 7, kind: input, shape index: {}]
  %s8 = inlined_call_operand.hbm [shape: f32[2,128], index: 8, kind: output, shape index: {}]
  %s9 = sld [smem:[#allocation0]]
  $region97: #{dqn_fully_forward.1} parent=0
    _
  %s11 = ssub.s32 1, %s9
  %s12 = scalar_select 0, %s11, %s9
  $region1: #{dqn_fully_forward.1} parent=0
    #allocation3 [shape = 'u8[4194304]{0}', space=vmem, size = 0x400000, scoped, tag = 'input window, operand 2']
    #allocation4 [shape = 's32[2]{0}', space=sflag, size = 0x8, scoped, tag = 'scoped memory for dqn_fully_forward.1']
    #allocation5 [shape = 's32[2]{0}', space=sflag, size = 0x8, scoped, tag = 'scoped memory for dqn_fully_forward.1']
    #allocation6 [shape = 'u8[1024]{0}', space=vmem, size = 0x400, scoped, tag = 'input window, operand 3, single buffered']
    #allocation7 [shape = 's32[1]{0}', space=sflag, size = 0x4, scoped, tag = 'scoped memory for dqn_fully_forward.1']
    #allocation8 [shape = 'u8[65536]{0}', space=vmem, size = 0x10000, scoped, tag = 'input window, operand 4, single buffered']
    #allocation9 [shape = 'u8[1024]{0}', space=vmem, size = 0x400, scoped, tag = 'input window, operand 5, single buffered']
    #allocation10 [shape = 's32[1]{0}', space=sflag, size = 0x4, scoped, tag = 'scoped memory for dqn_fully_forward.1']
    #allocation11 [shape = 'u8[131072]{0}', space=vmem, size = 0x20000, scoped, tag = 'input window, operand 6, single buffered']
    #allocation12 [shape = 'u8[512]{0}', space=vmem, size = 0x400, scoped, tag = 'input window, operand 7, single buffered']
    #allocation13 [shape = 's32[1]{0}', space=sflag, size = 0x4, scoped, tag = 'scoped memory for dqn_fully_forward.1']
    #allocation14 [shape = 'u8[1024]{0}', space=vmem, size = 0x400, scoped, tag = 'output window, operand 0, single buffered']
    %13 = vsyncpa [#allocation4], 0
    %s14 = scalar_lea.sflag [#allocation4], 1
    %15 = vsyncpa %s14, 0
    %16 = vsyncpa [#allocation7], 0
    %17 = vsyncpa [#allocation10], 0
    %18 = vsyncpa [#allocation13], 0
    %19 = vsyncpa [#allocation5], 0
    loop: start=0, step=1, limit=4
    $region2: #{dqn_fully_forward.1} parent=1 // loop_pre_header
      _
    $region3: #{dqn_fully_forward.1} parent=1 // loop_header
      %s21 = sphi 0, %s25
      %p22 = scmp.ge.s32.totalorder %s21, 4
      %s31 = sphi 0, %s33
      %s34 = sphi 0, %s31
      %s35 = sphi 0, %s34
      %s51 = sphi 0, %s35
      %s55 = sphi 0, %s55
      %s57 = sphi 0, %s55
      %s58 = sphi 0, %s57
      %s72 = sphi 0, %s58
      %s78 = sphi 0, %s80
      %s81 = sphi 0, %s78
      %s82 = sphi 0, %s81
      %s98 = sphi 0, %s82
      %s102 = sphi 0, %s102
      %s104 = sphi 0, %s102
      %s105 = sphi 0, %s104
      %s119 = sphi 0, %s105
      %s123 = sphi 0, %s123
      %s125 = sphi 0, %s123
      %s126 = sphi 0, %s125
      %s140 = sphi 0, %s126
      %s144 = sphi 0, %s144
      %s146 = sphi 0, %s144
      %s147 = sphi 0, %s146
      %s161 = sphi 0, %s147
      %s165 = sphi 0, %s165
      %s167 = sphi 0, %s165
      %s168 = sphi 0, %s167
      %s182 = sphi 0, %s168
      %s186 = sphi 0, %s186
      %s188 = sphi 0, %s186
      %s189 = sphi 0, %s188
      %s203 = sphi 0, %s189
      %s207 = sphi 0, %s207
      %s209 = sphi 0, %s207
      %s210 = sphi 0, %s209
      %s224 = sphi 0, %s210
    $region4: #{dqn_fully_forward.1} parent=1 // loop_header_branch
      %24 = sbr.rel (%p22) target = $region8
    $region5: #{dqn_fully_forward.1} parent=1 // loop_body
      %s26 = ssub.s32 %s21, 1
      %s27 = ssub.s32 %s21, 2
      %s28 = sadd.s32 %s21, 1
      %s29 = ssub.s32 %s21, %s28
      %p30 = scmp.eq.s32.totalorder %s29, 0
      %s32 = sadd.s32 %s31, 1
      %s33 = scalar_select %p30, %s31, %s32
      %p36 = pneg %p30
      %p37 = scmp.eq.s32.totalorder %s21, 1
      %p38 = por %p36, %p37
      %p39 = scmp.ne.s32.totalorder %s31, %s34
      %p40 = scmp.eq.s32.totalorder %s21, 0
      %p41 = por %p39, %p40
      %p42 = scmp.ne.s32.totalorder %s31, %s34
      %p43 = scmp.eq.s32.totalorder %s26, 1
      %p44 = por %p42, %p43
      %p45 = scmp.ne.s32.totalorder %s34, %s35
      %p46 = scmp.eq.s32.totalorder %s26, 0
      %p47 = por %p45, %p46
      %p48 = scmp.ne.s32.totalorder %s34, %s35
      %p49 = scmp.eq.s32.totalorder %s27, 1
      %p50 = por %p48, %p49
      %p52 = scmp.ne.s32.totalorder %s35, %s51
      %p53 = scmp.eq.s32.totalorder %s27, 0
      %p54 = por %p52, %p53
      %s56 = sadd.s32 %s55, 1
      %p59 = scmp.eq.s32.totalorder %s21, 1
      %p60 = scmp.ne.s32.totalorder %s55, %s57
      %p61 = scmp.eq.s32.totalorder %s21, 0
      %p62 = por %p60, %p61
      %p63 = scmp.ne.s32.totalorder %s55, %s57
      %p64 = scmp.eq.s32.totalorder %s26, 1
      %p65 = por %p63, %p64
      %p66 = scmp.ne.s32.totalorder %s57, %s58
      %p67 = scmp.eq.s32.totalorder %s26, 0
      %p68 = por %p66, %p67
      %p69 = scmp.ne.s32.totalorder %s57, %s58
      %p70 = scmp.eq.s32.totalorder %s27, 1
      %p71 = por %p69, %p70
      %p73 = scmp.ne.s32.totalorder %s58, %s72
      %p74 = scmp.eq.s32.totalorder %s27, 0
      %p75 = por %p73, %p74
      %s76 = ssub.s32 %s21, %s28
      %p77 = scmp.eq.s32.totalorder %s76, 0
      %s79 = sadd.s32 %s78, 1
      %s80 = scalar_select %p77, %s78, %s79
      %p83 = pneg %p77
      %p84 = scmp.eq.s32.totalorder %s21, 1
      %p85 = por %p83, %p84
      %p86 = scmp.ne.s32.totalorder %s78, %s81
      %p87 = scmp.eq.s32.totalorder %s21, 0
      %p88 = por %p86, %p87
      %p89 = scmp.ne.s32.totalorder %s78, %s81
      %p90 = scmp.eq.s32.totalorder %s26, 1
      %p91 = por %p89, %p90
      %p92 = scmp.ne.s32.totalorder %s81, %s82
      %p93 = scmp.eq.s32.totalorder %s26, 0
      %p94 = por %p92, %p93
      %p95 = scmp.ne.s32.totalorder %s81, %s82
      %p96 = scmp.eq.s32.totalorder %s27, 1
      %p97 = por %p95, %p96
      %p99 = scmp.ne.s32.totalorder %s82, %s98
      %p100 = scmp.eq.s32.totalorder %s27, 0
      %p101 = por %p99, %p100
      %s103 = sadd.s32 %s102, 1
      %p106 = scmp.eq.s32.totalorder %s21, 1
      %p107 = scmp.ne.s32.totalorder %s102, %s104
      %p108 = scmp.eq.s32.totalorder %s21, 0
      %p109 = por %p107, %p108
      %p110 = scmp.ne.s32.totalorder %s102, %s104
      %p111 = scmp.eq.s32.totalorder %s26, 1
      %p112 = por %p110, %p111
      %p113 = scmp.ne.s32.totalorder %s104, %s105
      %p114 = scmp.eq.s32.totalorder %s26, 0
      %p115 = por %p113, %p114
      %p116 = scmp.ne.s32.totalorder %s104, %s105
      %p117 = scmp.eq.s32.totalorder %s27, 1
      %p118 = por %p116, %p117
      %p120 = scmp.ne.s32.totalorder %s105, %s119
      %p121 = scmp.eq.s32.totalorder %s27, 0
      %p122 = por %p120, %p121
      %s124 = sadd.s32 %s123, 1
      %p127 = scmp.eq.s32.totalorder %s21, 1
      %p128 = scmp.ne.s32.totalorder %s123, %s125
      %p129 = scmp.eq.s32.totalorder %s21, 0
      %p130 = por %p128, %p129
      %p131 = scmp.ne.s32.totalorder %s123, %s125
      %p132 = scmp.eq.s32.totalorder %s26, 1
      %p133 = por %p131, %p132
      %p134 = scmp.ne.s32.totalorder %s125, %s126
      %p135 = scmp.eq.s32.totalorder %s26, 0
      %p136 = por %p134, %p135
      %p137 = scmp.ne.s32.totalorder %s125, %s126
      %p138 = scmp.eq.s32.totalorder %s27, 1
      %p139 = por %p137, %p138
      %p141 = scmp.ne.s32.totalorder %s126, %s140
      %p142 = scmp.eq.s32.totalorder %s27, 0
      %p143 = por %p141, %p142
      %s145 = sadd.s32 %s144, 1
      %p148 = scmp.eq.s32.totalorder %s21, 1
      %p149 = scmp.ne.s32.totalorder %s144, %s146
      %p150 = scmp.eq.s32.totalorder %s21, 0
      %p151 = por %p149, %p150
      %p152 = scmp.ne.s32.totalorder %s144, %s146
      %p153 = scmp.eq.s32.totalorder %s26, 1
      %p154 = por %p152, %p153
      %p155 = scmp.ne.s32.totalorder %s146, %s147
      %p156 = scmp.eq.s32.totalorder %s26, 0
      %p157 = por %p155, %p156
      %p158 = scmp.ne.s32.totalorder %s146, %s147
      %p159 = scmp.eq.s32.totalorder %s27, 1
      %p160 = por %p158, %p159
      %p162 = scmp.ne.s32.totalorder %s147, %s161
      %p163 = scmp.eq.s32.totalorder %s27, 0
      %p164 = por %p162, %p163
      %s166 = sadd.s32 %s165, 1
      %p169 = scmp.eq.s32.totalorder %s21, 1
      %p170 = scmp.ne.s32.totalorder %s165, %s167
      %p171 = scmp.eq.s32.totalorder %s21, 0
      %p172 = por %p170, %p171
      %p173 = scmp.ne.s32.totalorder %s165, %s167
      %p174 = scmp.eq.s32.totalorder %s26, 1
      %p175 = por %p173, %p174
      %p176 = scmp.ne.s32.totalorder %s167, %s168
      %p177 = scmp.eq.s32.totalorder %s26, 0
      %p178 = por %p176, %p177
      %p179 = scmp.ne.s32.totalorder %s167, %s168
      %p180 = scmp.eq.s32.totalorder %s27, 1
      %p181 = por %p179, %p180
      %p183 = scmp.ne.s32.totalorder %s168, %s182
      %p184 = scmp.eq.s32.totalorder %s27, 0
      %p185 = por %p183, %p184
      %s187 = sadd.s32 %s186, 1
      %p190 = scmp.eq.s32.totalorder %s21, 1
      %p191 = scmp.ne.s32.totalorder %s186, %s188
      %p192 = scmp.eq.s32.totalorder %s21, 0
      %p193 = por %p191, %p192
      %p194 = scmp.ne.s32.totalorder %s186, %s188
      %p195 = scmp.eq.s32.totalorder %s26, 1
      %p196 = por %p194, %p195
      %p197 = scmp.ne.s32.totalorder %s188, %s189
      %p198 = scmp.eq.s32.totalorder %s26, 0
      %p199 = por %p197, %p198
      %p200 = scmp.ne.s32.totalorder %s188, %s189
      %p201 = scmp.eq.s32.totalorder %s27, 1
      %p202 = por %p200, %p201
      %p204 = scmp.ne.s32.totalorder %s189, %s203
      %p205 = scmp.eq.s32.totalorder %s27, 0
      %p206 = por %p204, %p205
      %s208 = sadd.s32 %s207, 1
      %p211 = scmp.eq.s32.totalorder %s21, 1
      %p212 = scmp.ne.s32.totalorder %s207, %s209
      %p213 = scmp.eq.s32.totalorder %s21, 0
      %p214 = por %p212, %p213
      %p215 = scmp.ne.s32.totalorder %s207, %s209
      %p216 = scmp.eq.s32.totalorder %s26, 1
      %p217 = por %p215, %p216
      %p218 = scmp.ne.s32.totalorder %s209, %s210
      %p219 = scmp.eq.s32.totalorder %s26, 0
      %p220 = por %p218, %p219
      %p221 = scmp.ne.s32.totalorder %s209, %s210
      %p222 = scmp.eq.s32.totalorder %s27, 1
      %p223 = por %p221, %p222
      %p225 = scmp.ne.s32.totalorder %s210, %s224
      %p226 = scmp.eq.s32.totalorder %s27, 0
      %p227 = por %p225, %p226
      %p228 = scmp.le.s32.totalorder 1, %s21
      %p229 = scmp.lt.s32.totalorder %s21, 3
      %p230 = pnand %p228, %p229
      %p231 = pneg %p230
      // Predicated region
      $region9: #{dqn_fully_forward.1} parent=5 // pred_check
        _
      $region10: #{dqn_fully_forward.1} parent=5 // pred_check_branch
        %233 = sbr.rel (%p230) target = $region12
      $region11: #{dqn_fully_forward.1} parent=5 // pred_region
        %s234 = ssub.s32 %s21, 1
        // Predicated region
        $region13: #{dqn_fully_forward.1} parent=11 // pred_check
          %p235 = pneg %p68
        $region14: #{dqn_fully_forward.1} parent=11 // pred_check_branch
          %237 = sbr.rel (%p235) target = $region16
        $region15: #{dqn_fully_forward.1} parent=11 // pred_region
          _
        $region16: #{dqn_fully_forward.1} parent=11 // pred_fallthru
          _
        // Predicated region
        $region17: #{dqn_fully_forward.1} parent=11 // pred_check
          %p238 = pneg %p115
        $region18: #{dqn_fully_forward.1} parent=11 // pred_check_branch
          %240 = sbr.rel (%p238) target = $region20
        $region19: #{dqn_fully_forward.1} parent=11 // pred_region
          %s242 = ssub.s32 32, 32
          %243 = vsyncadd [#allocation7], %s242
          %s245 = sshll.u32 [#allocation6], 4
          %s246 = int_to_ptr.vmem [resolvable:$true] %s245
          %248 = dma.hbm_to_vmem [thread:$0]  %s3, 32, %s246, [#allocation7]
        $region20: #{dqn_fully_forward.1} parent=11 // pred_fallthru
          _
        // Predicated region
        $region21: #{dqn_fully_forward.1} parent=11 // pred_check
          %p249 = pneg %p136
        $region22: #{dqn_fully_forward.1} parent=11 // pred_check_branch
          %251 = sbr.rel (%p249) target = $region24
        $region23: #{dqn_fully_forward.1} parent=11 // pred_region
          %s253 = ssub.s32 2048, 2048
          %254 = vsyncadd [#allocation7], %s253
          %s255 = sshll.u32 [#allocation8], 4
          %s256 = int_to_ptr.vmem [resolvable:$true] %s255
          %261 = dma.hbm_to_vmem [thread:$0]  %s4, 2048, %s256, [#allocation7], 128, 128, 8
        $region24: #{dqn_fully_forward.1} parent=11 // pred_fallthru
          _
        // Predicated region
        $region25: #{dqn_fully_forward.1} parent=11 // pred_check
          %p262 = pneg %p157
        $region26: #{dqn_fully_forward.1} parent=11 // pred_check_branch
          %264 = sbr.rel (%p262) target = $region28
        $region27: #{dqn_fully_forward.1} parent=11 // pred_region
          %s266 = ssub.s32 32, 32
          %267 = vsyncadd [#allocation10], %s266
          %s269 = sshll.u32 [#allocation9], 4
          %s270 = int_to_ptr.vmem [resolvable:$true] %s269
          %272 = dma.hbm_to_vmem [thread:$0]  %s5, 32, %s270, [#allocation10]
        $region28: #{dqn_fully_forward.1} parent=11 // pred_fallthru
          _
        // Predicated region
        $region29: #{dqn_fully_forward.1} parent=11 // pred_check
          %p273 = pneg %p178
        $region30: #{dqn_fully_forward.1} parent=11 // pred_check_branch
          %275 = sbr.rel (%p273) target = $region32
        $region31: #{dqn_fully_forward.1} parent=11 // pred_region
          %s277 = ssub.s32 4096, 4096
          %278 = vsyncadd [#allocation10], %s277
          %s279 = sshll.u32 [#allocation11], 4
          %s280 = int_to_ptr.vmem [resolvable:$true] %s279
          %285 = dma.hbm_to_vmem [thread:$0]  %s6, 4096, %s280, [#allocation10], 128, 128, 8
        $region32: #{dqn_fully_forward.1} parent=11 // pred_fallthru
          _
        // Predicated region
        $region33: #{dqn_fully_forward.1} parent=11 // pred_check
          %p286 = pneg %p199
        $region34: #{dqn_fully_forward.1} parent=11 // pred_check_branch
          %288 = sbr.rel (%p286) target = $region36
        $region35: #{dqn_fully_forward.1} parent=11 // pred_region
          %s290 = ssub.s32 16, 16
          %291 = vsyncadd [#allocation13], %s290
          %s293 = sshll.u32 [#allocation12], 4
          %s294 = int_to_ptr.vmem [resolvable:$true] %s293
          %296 = dma.hbm_to_vmem [thread:$0]  %s7, 16, %s294, [#allocation13]
        $region36: #{dqn_fully_forward.1} parent=11 // pred_fallthru
          _
      $region12: #{dqn_fully_forward.1} parent=5 // pred_fallthru
        _
      %p297 = scmp.lt.s32.totalorder %s21, 2
      // Predicated region
      $region37: #{dqn_fully_forward.1} parent=5 // pred_check
        %p298 = pneg %p297
      $region38: #{dqn_fully_forward.1} parent=5 // pred_check_branch
        %300 = sbr.rel (%p298) target = $region40
      $region39: #{dqn_fully_forward.1} parent=5 // pred_region
        // Predicated region
        $region41: #{dqn_fully_forward.1} parent=39 // pred_check
          %p301 = pneg %p41
        $region42: #{dqn_fully_forward.1} parent=39 // pred_check_branch
          %303 = sbr.rel (%p301) target = $region44
        $region43: #{dqn_fully_forward.1} parent=39 // pred_region
          %s304 = smul.u32 64, %s21
          %p305 = scmp.lt.s32.totalorder %s304, 127
          %s306 = scalar_select %p305, %s304, 127
          %s307 = scalar_lea.vmem %s0, %s306
          %s308 = smul.u32 64, %s21
        $region44: #{dqn_fully_forward.1} parent=39 // pred_fallthru
          _
        // Predicated region
        $region45: #{dqn_fully_forward.1} parent=39 // pred_check
          %p309 = pneg %p88
        $region46: #{dqn_fully_forward.1} parent=39 // pred_check_branch
          %311 = sbr.rel (%p309) target = $region48
        $region47: #{dqn_fully_forward.1} parent=39 // pred_region
          %s312 = sand.u32 %s78, 1
          %s313 = scalar_lea.sflag [#allocation4], %s312
          %s314 = sand.u32 %s78, 1
          %s315 = smul.addr %s314, 4096
          %s316 = scalar_lea.vmem [#allocation3], %s315
          %s317 = smul.u32 256, %s21
          %s319 = ssub.s32 65536, 65536
          %320 = vsyncadd %s313, %s319
          %s321 = smul.addr %s317, 2
          %s322 = smul.addr %s321, 128
          %s323 = scalar_lea.hbm %s2, %s322
          %s324 = sshll.u32 %s316, 4
          %s325 = int_to_ptr.vmem [resolvable:$true] %s324
          %330 = dma.hbm_to_vmem [thread:$0]  %s323, 65536, %s325, %s313, 256, 256, 16
        $region48: #{dqn_fully_forward.1} parent=39 // pred_fallthru
          _
      $region40: #{dqn_fully_forward.1} parent=5 // pred_fallthru
        _
      %p331 = scmp.le.s32.totalorder 1, %s21
      %p332 = scmp.lt.s32.totalorder %s21, 3
      %p333 = pnand %p331, %p332
      %p334 = pneg %p333
      // Predicated region
      $region49: #{dqn_fully_forward.1} parent=5 // pred_check
        _
      $region50: #{dqn_fully_forward.1} parent=5 // pred_check_branch
        %336 = sbr.rel (%p333) target = $region52
      $region51: #{dqn_fully_forward.1} parent=5 // pred_region
        %s337 = ssub.s32 %s21, 1
        %s338 = sand.u32 %s81, 1
        %s339 = scalar_lea.sflag [#allocation4], %s338
        %s340 = sand.u32 %s81, 1
        %s341 = smul.addr %s340, 4096
        %s342 = scalar_lea.vmem [#allocation3], %s341
        // Predicated region
        $region53: #{dqn_fully_forward.1} parent=51 // pred_check
          %p343 = pneg %p94
        $region54: #{dqn_fully_forward.1} parent=51 // pred_check_branch
          %345 = sbr.rel (%p343) target = $region56
        $region55: #{dqn_fully_forward.1} parent=51 // pred_region
          %346 = dma.done %s339, 65536
        $region56: #{dqn_fully_forward.1} parent=51 // pred_fallthru
          _
        // Predicated region
        $region57: #{dqn_fully_forward.1} parent=51 // pred_check
          %p347 = pneg %p115
        $region58: #{dqn_fully_forward.1} parent=51 // pred_check_branch
          %349 = sbr.rel (%p347) target = $region60
        $region59: #{dqn_fully_forward.1} parent=51 // pred_region
          %350 = dma.done [#allocation7], 32
        $region60: #{dqn_fully_forward.1} parent=51 // pred_fallthru
          _
        // Predicated region
        $region61: #{dqn_fully_forward.1} parent=51 // pred_check
          %p351 = pneg %p136
        $region62: #{dqn_fully_forward.1} parent=51 // pred_check_branch
          %353 = sbr.rel (%p351) target = $region64
        $region63: #{dqn_fully_forward.1} parent=51 // pred_region
          %354 = dma.done [#allocation7], 2048
        $region64: #{dqn_fully_forward.1} parent=51 // pred_fallthru
          _
        // Predicated region
        $region65: #{dqn_fully_forward.1} parent=51 // pred_check
          %p355 = pneg %p157
        $region66: #{dqn_fully_forward.1} parent=51 // pred_check_branch
          %357 = sbr.rel (%p355) target = $region68
        $region67: #{dqn_fully_forward.1} parent=51 // pred_region
          %358 = dma.done [#allocation10], 32
        $region68: #{dqn_fully_forward.1} parent=51 // pred_fallthru
          _
        // Predicated region
        $region69: #{dqn_fully_forward.1} parent=51 // pred_check
          %p359 = pneg %p178
        $region70: #{dqn_fully_forward.1} parent=51 // pred_check_branch
          %361 = sbr.rel (%p359) target = $region72
        $region71: #{dqn_fully_forward.1} parent=51 // pred_region
          %362 = dma.done [#allocation10], 4096
        $region72: #{dqn_fully_forward.1} parent=51 // pred_fallthru
          _
        // Predicated region
        $region73: #{dqn_fully_forward.1} parent=51 // pred_check
          %p363 = pneg %p199
        $region74: #{dqn_fully_forward.1} parent=51 // pred_check_branch
          %365 = sbr.rel (%p363) target = $region76
        $region75: #{dqn_fully_forward.1} parent=51 // pred_region
          %366 = dma.done [#allocation13], 16
        $region76: #{dqn_fully_forward.1} parent=51 // pred_fallthru
          _
        %s367 = smul.u32 64, %s26
        %p368 = scmp.lt.s32.totalorder %s367, 127
        %s369 = scalar_select %p368, %s367, 127
        %s370 = scalar_lea.vmem %s0, %s369
        %p371 = pneg %p47
        %p372 = pneg %p44
        %p373 = pneg %p68
        %p374 = pneg %p65
        %s375 = sand.u32 %s81, 1
        %s376 = scalar_lea.sflag [#allocation4], %s375
        %s377 = sand.u32 %s81, 1
        %s378 = smul.addr %s377, 4096
        %s379 = scalar_lea.vmem [#allocation3], %s378
        %p380 = pneg %p94
        %p381 = pneg %p91
        %p382 = pneg %p115
        %p383 = pneg %p112
        %p384 = pneg %p136
        %p385 = pneg %p133
        %p386 = pneg %p157
        %p387 = pneg %p154
        %p388 = pneg %p178
        %p389 = pneg %p175
        %p390 = pneg %p199
        %p391 = pneg %p196
        %p392 = pneg %p220
        %p393 = pneg %p217
        %s394 = smul.u32 64, %s26
        %p395 = scmp.lt.s32.totalorder %s394, 127
        %s396 = scalar_select %p395, %s394, 127
        %s397 = scalar_lea.vmem %s0, %s396
        %s398 = smul.u32 64, %s26
        %s399 = smul.u32 256, %s26
        %p401 = scmp.eq.s32.totalorder %s26, 0
        // Predicated region
        $region77: #{dqn_fully_forward.1} parent=51 // pred_check
          %p402 = pneg %p401
        $region78: #{dqn_fully_forward.1} parent=51 // pred_check_branch
          %404 = sbr.rel (%p402) target = $region80
        $region79: #{dqn_fully_forward.1} parent=51 // pred_region
          %v405 = vld [vmem:[%s1] sm:$0x1]
          %v406 = vld [vmem:[#allocation8] sm:$0xff]
          %v407 = vld [vmem:[#allocation8 + $0x8] sm:$0xff]
          %v408 = vld [vmem:[#allocation8 + $0x10] sm:$0xff]
          %v409 = vld [vmem:[#allocation8 + $0x18] sm:$0xff]
          %v410 = vld [vmem:[#allocation8 + $0x20] sm:$0xff]
          %v411 = vld [vmem:[#allocation8 + $0x28] sm:$0xff]
          %v412 = vld [vmem:[#allocation8 + $0x30] sm:$0xff]
          %v413 = vld [vmem:[#allocation8 + $0x38] sm:$0xff]
          %v414 = vld [vmem:[#allocation8 + $0x40] sm:$0xff]
          %v415 = vld [vmem:[#allocation8 + $0x48] sm:$0xff]
          %v416 = vld [vmem:[#allocation8 + $0x50] sm:$0xff]
          %v417 = vld [vmem:[#allocation8 + $0x58] sm:$0xff]
          %v418 = vld [vmem:[#allocation8 + $0x60] sm:$0xff]
          %v419 = vld [vmem:[#allocation8 + $0x68] sm:$0xff]
          %v420 = vld [vmem:[#allocation8 + $0x70] sm:$0xff]
          %v421 = vld [vmem:[#allocation8 + $0x78] sm:$0xff]
          %v438 = vunpack.c.l.b16 %v406
          %v439 = vunpack.c.h.b16 %v406
          %v440 = vunpack.c.l.b16 %v407
          %v441 = vunpack.c.h.b16 %v407
          %v442 = vunpack.c.l.b16 %v408
          %v443 = vunpack.c.h.b16 %v408
          %v444 = vunpack.c.l.b16 %v409
          %v445 = vunpack.c.h.b16 %v409
          %v446 = vunpack.c.l.b16 %v410
          %v447 = vunpack.c.h.b16 %v410
          %v448 = vunpack.c.l.b16 %v411
          %v449 = vunpack.c.h.b16 %v411
          %v450 = vunpack.c.l.b16 %v412
          %v451 = vunpack.c.h.b16 %v412
          %v452 = vunpack.c.l.b16 %v413
          %v453 = vunpack.c.h.b16 %v413
          %v454 = vunpack.c.l.b16 %v414
          %v455 = vunpack.c.h.b16 %v414
          %v456 = vunpack.c.l.b16 %v415
          %v457 = vunpack.c.h.b16 %v415
          %v458 = vunpack.c.l.b16 %v416
          %v459 = vunpack.c.h.b16 %v416
          %v460 = vunpack.c.l.b16 %v417
          %v461 = vunpack.c.h.b16 %v417
          %v462 = vunpack.c.l.b16 %v418
          %v463 = vunpack.c.h.b16 %v418
          %v464 = vunpack.c.l.b16 %v419
          %v465 = vunpack.c.h.b16 %v419
          %v466 = vunpack.c.l.b16 %v420
          %v467 = vunpack.c.h.b16 %v420
          %v468 = vunpack.c.l.b16 %v421
          %v469 = vunpack.c.h.b16 %v421
          %v470 = vpack.c.b16 %v440, %v438
          %v471 = vpack.c.b16 %v441, %v439
          %v472 = vpack.c.b16 %v444, %v442
          %v473 = vpack.c.b16 %v445, %v443
          %v474 = vpack.c.b16 %v448, %v446
          %v475 = vpack.c.b16 %v449, %v447
          %v476 = vpack.c.b16 %v452, %v450
          %v477 = vpack.c.b16 %v453, %v451
          %v478 = vpack.c.b16 %v456, %v454
          %v479 = vpack.c.b16 %v457, %v455
          %v480 = vpack.c.b16 %v460, %v458
          %v481 = vpack.c.b16 %v461, %v459
          %v482 = vpack.c.b16 %v464, %v462
          %v483 = vpack.c.b16 %v465, %v463
          %v484 = vpack.c.b16 %v468, %v466
          %v485 = vpack.c.b16 %v469, %v467
          %502 = vmatprep.subr.bf16.mxu0 %v471
          %503 = vmatpush1.bf16.msra.mxu0 %v470
          %504 = vmatprep.subr.bf16.mxu0 %v473
          %505 = vmatpush1.bf16.msra.mxu0 %v472
          %506 = vmatprep.subr.bf16.mxu0 %v475
          %507 = vmatpush1.bf16.msra.mxu0 %v474
          %508 = vmatprep.subr.bf16.mxu0 %v477
          %509 = vmatpush1.bf16.msra.mxu0 %v476
          %510 = vmatprep.subr.bf16.mxu0 %v479
          %511 = vmatpush1.bf16.msra.mxu0 %v478
          %512 = vmatprep.subr.bf16.mxu0 %v481
          %513 = vmatpush1.bf16.msra.mxu0 %v480
          %514 = vmatprep.subr.bf16.mxu0 %v483
          %515 = vmatpush1.bf16.msra.mxu0 %v482
          %516 = vmatprep.subr.bf16.mxu0 %v485
          %517 = vmatpush1.bf16.msra.mxu0 %v484
          %518 = vmatprep.subr.bf16.mxu0 0
          %519 = vmatpush1.bf16.msra.mxu0 0
          %520 = vmatprep.subr.bf16.mxu0 0
          %521 = vmatpush1.bf16.msra.mxu0 0
          %522 = vmatprep.subr.bf16.mxu0 0
          %523 = vmatpush1.bf16.msra.mxu0 0
          %524 = vmatprep.subr.bf16.mxu0 0
          %525 = vmatpush1.bf16.msra.mxu0 0
          %526 = vmatprep.subr.bf16.mxu0 0
          %527 = vmatpush1.bf16.msra.mxu0 0
          %528 = vmatprep.subr.bf16.mxu0 0
          %529 = vmatpush1.bf16.msra.mxu0 0
          %530 = vmatprep.subr.bf16.mxu0 0
          %531 = vmatpush1.bf16.msra.mxu0 0
          %532 = vmatprep.subr.bf16.mxu0 0
          %533 = vmatpush1.bf16.msra.mxu0 0
          %534 = vmatprep.mubr.bf16.mxu0 0
          %535 = vmatmul.mubr.bf16.gmra.mrb[0].mxu0 %v405
          %v536 = vpop.f32.mrb[0].mxu0
          %v537 = vadd.f32 0.0, %v536
          %v538 = vpop.f32.mrb[0].mxu0
          %v539 = vadd.f32 0.0, %v538
          %v540 = vpop.f32.mrb[0].mxu0
          %v541 = vpop.f32.mrb[0].mxu0
          %542 = vdwg.mxu0
          %v545 = vcombine.low %v537, %v539
          %v547 = vunpack.c.l.s4 1983009808
          %v548 = vunpack.c.0.s8 %v547
          %v549 = vlaneseq
          %v550 = vshrl.u32 %v549, 7
          %v551 = vsub.s32 %v548, %v550
          %v552 = vrot.slane %v545, %v551
          %554 = vst [vmem:[#allocation2] sm:$0xf] %v552
        $region80: #{dqn_fully_forward.1} parent=51 // pred_fallthru
          _
        %v555 = vld [vmem:[%s342] sm:$0xff]
        %v556 = vld [vmem:[%s342 + $0x8] sm:$0xff]
        %v557 = vld [vmem:[%s342 + $0x10] sm:$0xff]
        %v558 = vld [vmem:[%s342 + $0x18] sm:$0xff]
        %v559 = vld [vmem:[%s342 + $0x20] sm:$0xff]
        %v560 = vld [vmem:[%s342 + $0x28] sm:$0xff]
        %v561 = vld [vmem:[%s342 + $0x30] sm:$0xff]
        %v562 = vld [vmem:[%s342 + $0x38] sm:$0xff]
        %v563 = vld [vmem:[%s342 + $0x40] sm:$0xff]
        %v564 = vld [vmem:[%s342 + $0x48] sm:$0xff]
        %v565 = vld [vmem:[%s342 + $0x50] sm:$0xff]
        %v566 = vld [vmem:[%s342 + $0x58] sm:$0xff]
        %v567 = vld [vmem:[%s342 + $0x60] sm:$0xff]
        %v568 = vld [vmem:[%s342 + $0x68] sm:$0xff]
        %v569 = vld [vmem:[%s342 + $0x70] sm:$0xff]
        %v570 = vld [vmem:[%s342 + $0x78] sm:$0xff]
        %v571 = vld [vmem:[%s342 + $0x80] sm:$0xff]
        %v572 = vld [vmem:[%s342 + $0x88] sm:$0xff]
        %v573 = vld [vmem:[%s342 + $0x90] sm:$0xff]
        %v574 = vld [vmem:[%s342 + $0x98] sm:$0xff]
        %v575 = vld [vmem:[%s342 + $0xa0] sm:$0xff]
        %v576 = vld [vmem:[%s342 + $0xa8] sm:$0xff]
        %v577 = vld [vmem:[%s342 + $0xb0] sm:$0xff]
        %v578 = vld [vmem:[%s342 + $0xb8] sm:$0xff]
        %v579 = vld [vmem:[%s342 + $0xc0] sm:$0xff]
        %v580 = vld [vmem:[%s342 + $0xc8] sm:$0xff]
        %v581 = vld [vmem:[%s342 + $0xd0] sm:$0xff]
        %v582 = vld [vmem:[%s342 + $0xd8] sm:$0xff]
        %v583 = vld [vmem:[%s342 + $0xe0] sm:$0xff]
        %v584 = vld [vmem:[%s342 + $0xe8] sm:$0xff]
        %v585 = vld [vmem:[%s342 + $0xf0] sm:$0xff]
        %v586 = vld [vmem:[%s342 + $0xf8] sm:$0xff]
        %v587 = vld [vmem:[%s342 + $0x100] sm:$0xff]
        %v588 = vld [vmem:[%s342 + $0x108] sm:$0xff]
        %v589 = vld [vmem:[%s342 + $0x110] sm:$0xff]
        %v590 = vld [vmem:[%s342 + $0x118] sm:$0xff]
        %v591 = vld [vmem:[%s342 + $0x120] sm:$0xff]
        %v592 = vld [vmem:[%s342 + $0x128] sm:$0xff]
        %v593 = vld [vmem:[%s342 + $0x130] sm:$0xff]
        %v594 = vld [vmem:[%s342 + $0x138] sm:$0xff]
        %v595 = vld [vmem:[%s342 + $0x140] sm:$0xff]
        %v596 = vld [vmem:[%s342 + $0x148] sm:$0xff]
        %v597 = vld [vmem:[%s342 + $0x150] sm:$0xff]
        %v598 = vld [vmem:[%s342 + $0x158] sm:$0xff]
        %v599 = vld [vmem:[%s342 + $0x160] sm:$0xff]
        %v600 = vld [vmem:[%s342 + $0x168] sm:$0xff]
        %v601 = vld [vmem:[%s342 + $0x170] sm:$0xff]
        %v602 = vld [vmem:[%s342 + $0x178] sm:$0xff]
        %v603 = vld [vmem:[%s342 + $0x180] sm:$0xff]
        %v604 = vld [vmem:[%s342 + $0x188] sm:$0xff]
        %v605 = vld [vmem:[%s342 + $0x190] sm:$0xff]
        %v606 = vld [vmem:[%s342 + $0x198] sm:$0xff]
        %v607 = vld [vmem:[%s342 + $0x1a0] sm:$0xff]
        %v608 = vld [vmem:[%s342 + $0x1a8] sm:$0xff]
        %v609 = vld [vmem:[%s342 + $0x1b0] sm:$0xff]
        %v610 = vld [vmem:[%s342 + $0x1b8] sm:$0xff]
        %v611 = vld [vmem:[%s342 + $0x1c0] sm:$0xff]
        %v612 = vld [vmem:[%s342 + $0x1c8] sm:$0xff]
        %v613 = vld [vmem:[%s342 + $0x1d0] sm:$0xff]
        %v614 = vld [vmem:[%s342 + $0x1d8] sm:$0xff]
        %v615 = vld [vmem:[%s342 + $0x1e0] sm:$0xff]
        %v616 = vld [vmem:[%s342 + $0x1e8] sm:$0xff]
        %v617 = vld [vmem:[%s342 + $0x1f0] sm:$0xff]
        %v618 = vld [vmem:[%s342 + $0x1f8] sm:$0xff]
        %v619 = vld [vmem:[%s342 + $0x200] sm:$0xff]
        %v620 = vld [vmem:[%s342 + $0x208] sm:$0xff]
        %v621 = vld [vmem:[%s342 + $0x210] sm:$0xff]
        %v622 = vld [vmem:[%s342 + $0x218] sm:$0xff]
        %v623 = vld [vmem:[%s342 + $0x220] sm:$0xff]
        %v624 = vld [vmem:[%s342 + $0x228] sm:$0xff]
        %v625 = vld [vmem:[%s342 + $0x230] sm:$0xff]
        %v626 = vld [vmem:[%s342 + $0x238] sm:$0xff]
        %v627 = vld [vmem:[%s342 + $0x240] sm:$0xff]
        %v628 = vld [vmem:[%s342 + $0x248] sm:$0xff]
        %v629 = vld [vmem:[%s342 + $0x250] sm:$0xff]
        %v630 = vld [vmem:[%s342 + $0x258] sm:$0xff]
        %v631 = vld [vmem:[%s342 + $0x260] sm:$0xff]
        %v632 = vld [vmem:[%s342 + $0x268] sm:$0xff]
        %v633 = vld [vmem:[%s342 + $0x270] sm:$0xff]
        %v634 = vld [vmem:[%s342 + $0x278] sm:$0xff]
        %v635 = vld [vmem:[%s342 + $0x280] sm:$0xff]
        %v636 = vld [vmem:[%s342 + $0x288] sm:$0xff]
        %v637 = vld [vmem:[%s342 + $0x290] sm:$0xff]
        %v638 = vld [vmem:[%s342 + $0x298] sm:$0xff]
        %v639 = vld [vmem:[%s342 + $0x2a0] sm:$0xff]
        %v640 = vld [vmem:[%s342 + $0x2a8] sm:$0xff]
        %v641 = vld [vmem:[%s342 + $0x2b0] sm:$0xff]
        %v642 = vld [vmem:[%s342 + $0x2b8] sm:$0xff]
        %v643 = vld [vmem:[%s342 + $0x2c0] sm:$0xff]
        %v644 = vld [vmem:[%s342 + $0x2c8] sm:$0xff]
        %v645 = vld [vmem:[%s342 + $0x2d0] sm:$0xff]
        %v646 = vld [vmem:[%s342 + $0x2d8] sm:$0xff]
        %v647 = vld [vmem:[%s342 + $0x2e0] sm:$0xff]
        %v648 = vld [vmem:[%s342 + $0x2e8] sm:$0xff]
        %v649 = vld [vmem:[%s342 + $0x2f0] sm:$0xff]
        %v650 = vld [vmem:[%s342 + $0x2f8] sm:$0xff]
        %v651 = vld [vmem:[%s342 + $0x300] sm:$0xff]
        %v652 = vld [vmem:[%s342 + $0x308] sm:$0xff]
        %v653 = vld [vmem:[%s342 + $0x310] sm:$0xff]
        %v654 = vld [vmem:[%s342 + $0x318] sm:$0xff]
        %v655 = vld [vmem:[%s342 + $0x320] sm:$0xff]
        %v656 = vld [vmem:[%s342 + $0x328] sm:$0xff]
        %v657 = vld [vmem:[%s342 + $0x330] sm:$0xff]
        %v658 = vld [vmem:[%s342 + $0x338] sm:$0xff]
        %v659 = vld [vmem:[%s342 + $0x340] sm:$0xff]
        %v660 = vld [vmem:[%s342 + $0x348] sm:$0xff]
        %v661 = vld [vmem:[%s342 + $0x350] sm:$0xff]
        %v662 = vld [vmem:[%s342 + $0x358] sm:$0xff]
        %v663 = vld [vmem:[%s342 + $0x360] sm:$0xff]
        %v664 = vld [vmem:[%s342 + $0x368] sm:$0xff]
        %v665 = vld [vmem:[%s342 + $0x370] sm:$0xff]
        %v666 = vld [vmem:[%s342 + $0x378] sm:$0xff]
        %v667 = vld [vmem:[%s342 + $0x380] sm:$0xff]
        %v668 = vld [vmem:[%s342 + $0x388] sm:$0xff]
        %v669 = vld [vmem:[%s342 + $0x390] sm:$0xff]
        %v670 = vld [vmem:[%s342 + $0x398] sm:$0xff]
        %v671 = vld [vmem:[%s342 + $0x3a0] sm:$0xff]
        %v672 = vld [vmem:[%s342 + $0x3a8] sm:$0xff]
        %v673 = vld [vmem:[%s342 + $0x3b0] sm:$0xff]
        %v674 = vld [vmem:[%s342 + $0x3b8] sm:$0xff]
        %v675 = vld [vmem:[%s342 + $0x3c0] sm:$0xff]
        %v676 = vld [vmem:[%s342 + $0x3c8] sm:$0xff]
        %v677 = vld [vmem:[%s342 + $0x3d0] sm:$0xff]
        %v678 = vld [vmem:[%s342 + $0x3d8] sm:$0xff]
        %v679 = vld [vmem:[%s342 + $0x3e0] sm:$0xff]
        %v680 = vld [vmem:[%s342 + $0x3e8] sm:$0xff]
        %v681 = vld [vmem:[%s342 + $0x3f0] sm:$0xff]
        %v682 = vld [vmem:[%s342 + $0x3f8] sm:$0xff]
        %v683 = vld [vmem:[%s342 + $0x400] sm:$0xff]
        %v684 = vld [vmem:[%s342 + $0x408] sm:$0xff]
        %v685 = vld [vmem:[%s342 + $0x410] sm:$0xff]
        %v686 = vld [vmem:[%s342 + $0x418] sm:$0xff]
        %v687 = vld [vmem:[%s342 + $0x420] sm:$0xff]
        %v688 = vld [vmem:[%s342 + $0x428] sm:$0xff]
        %v689 = vld [vmem:[%s342 + $0x430] sm:$0xff]
        %v690 = vld [vmem:[%s342 + $0x438] sm:$0xff]
        %v691 = vld [vmem:[%s342 + $0x440] sm:$0xff]
        %v692 = vld [vmem:[%s342 + $0x448] sm:$0xff]
        %v693 = vld [vmem:[%s342 + $0x450] sm:$0xff]
        %v694 = vld [vmem:[%s342 + $0x458] sm:$0xff]
        %v695 = vld [vmem:[%s342 + $0x460] sm:$0xff]
        %v696 = vld [vmem:[%s342 + $0x468] sm:$0xff]
        %v697 = vld [vmem:[%s342 + $0x470] sm:$0xff]
        %v698 = vld [vmem:[%s342 + $0x478] sm:$0xff]
        %v699 = vld [vmem:[%s342 + $0x480] sm:$0xff]
        %v700 = vld [vmem:[%s342 + $0x488] sm:$0xff]
        %v701 = vld [vmem:[%s342 + $0x490] sm:$0xff]
        %v702 = vld [vmem:[%s342 + $0x498] sm:$0xff]
        %v703 = vld [vmem:[%s342 + $0x4a0] sm:$0xff]
        %v704 = vld [vmem:[%s342 + $0x4a8] sm:$0xff]
        %v705 = vld [vmem:[%s342 + $0x4b0] sm:$0xff]
        %v706 = vld [vmem:[%s342 + $0x4b8] sm:$0xff]
        %v707 = vld [vmem:[%s342 + $0x4c0] sm:$0xff]
        %v708 = vld [vmem:[%s342 + $0x4c8] sm:$0xff]
        %v709 = vld [vmem:[%s342 + $0x4d0] sm:$0xff]
        %v710 = vld [vmem:[%s342 + $0x4d8] sm:$0xff]
        %v711 = vld [vmem:[%s342 + $0x4e0] sm:$0xff]
        %v712 = vld [vmem:[%s342 + $0x4e8] sm:$0xff]
        %v713 = vld [vmem:[%s342 + $0x4f0] sm:$0xff]
        %v714 = vld [vmem:[%s342 + $0x4f8] sm:$0xff]
        %v715 = vld [vmem:[%s342 + $0x500] sm:$0xff]
        %v716 = vld [vmem:[%s342 + $0x508] sm:$0xff]
        %v717 = vld [vmem:[%s342 + $0x510] sm:$0xff]
        %v718 = vld [vmem:[%s342 + $0x518] sm:$0xff]
        %v719 = vld [vmem:[%s342 + $0x520] sm:$0xff]
        %v720 = vld [vmem:[%s342 + $0x528] sm:$0xff]
        %v721 = vld [vmem:[%s342 + $0x530] sm:$0xff]
        %v722 = vld [vmem:[%s342 + $0x538] sm:$0xff]
        %v723 = vld [vmem:[%s342 + $0x540] sm:$0xff]
        %v724 = vld [vmem:[%s342 + $0x548] sm:$0xff]
        %v725 = vld [vmem:[%s342 + $0x550] sm:$0xff]
        %v726 = vld [vmem:[%s342 + $0x558] sm:$0xff]
        %v727 = vld [vmem:[%s342 + $0x560] sm:$0xff]
        %v728 = vld [vmem:[%s342 + $0x568] sm:$0xff]
        %v729 = vld [vmem:[%s342 + $0x570] sm:$0xff]
        %v730 = vld [vmem:[%s342 + $0x578] sm:$0xff]
        %v731 = vld [vmem:[%s342 + $0x580] sm:$0xff]
        %v732 = vld [vmem:[%s342 + $0x588] sm:$0xff]
        %v733 = vld [vmem:[%s342 + $0x590] sm:$0xff]
        %v734 = vld [vmem:[%s342 + $0x598] sm:$0xff]
        %v735 = vld [vmem:[%s342 + $0x5a0] sm:$0xff]
        %v736 = vld [vmem:[%s342 + $0x5a8] sm:$0xff]
        %v737 = vld [vmem:[%s342 + $0x5b0] sm:$0xff]
        %v738 = vld [vmem:[%s342 + $0x5b8] sm:$0xff]
        %v739 = vld [vmem:[%s342 + $0x5c0] sm:$0xff]
        %v740 = vld [vmem:[%s342 + $0x5c8] sm:$0xff]
        %v741 = vld [vmem:[%s342 + $0x5d0] sm:$0xff]
        %v742 = vld [vmem:[%s342 + $0x5d8] sm:$0xff]
        %v743 = vld [vmem:[%s342 + $0x5e0] sm:$0xff]
        %v744 = vld [vmem:[%s342 + $0x5e8] sm:$0xff]
        %v745 = vld [vmem:[%s342 + $0x5f0] sm:$0xff]
        %v746 = vld [vmem:[%s342 + $0x5f8] sm:$0xff]
        %v747 = vld [vmem:[%s342 + $0x600] sm:$0xff]
        %v748 = vld [vmem:[%s342 + $0x608] sm:$0xff]
        %v749 = vld [vmem:[%s342 + $0x610] sm:$0xff]
        %v750 = vld [vmem:[%s342 + $0x618] sm:$0xff]
        %v751 = vld [vmem:[%s342 + $0x620] sm:$0xff]
        %v752 = vld [vmem:[%s342 + $0x628] sm:$0xff]
        %v753 = vld [vmem:[%s342 + $0x630] sm:$0xff]
        %v754 = vld [vmem:[%s342 + $0x638] sm:$0xff]
        %v755 = vld [vmem:[%s342 + $0x640] sm:$0xff]
        %v756 = vld [vmem:[%s342 + $0x648] sm:$0xff]
        %v757 = vld [vmem:[%s342 + $0x650] sm:$0xff]
        %v758 = vld [vmem:[%s342 + $0x658] sm:$0xff]
        %v759 = vld [vmem:[%s342 + $0x660] sm:$0xff]
        %v760 = vld [vmem:[%s342 + $0x668] sm:$0xff]
        %v761 = vld [vmem:[%s342 + $0x670] sm:$0xff]
        %v762 = vld [vmem:[%s342 + $0x678] sm:$0xff]
        %v763 = vld [vmem:[%s342 + $0x680] sm:$0xff]
        %v764 = vld [vmem:[%s342 + $0x688] sm:$0xff]
        %v765 = vld [vmem:[%s342 + $0x690] sm:$0xff]
        %v766 = vld [vmem:[%s342 + $0x698] sm:$0xff]
        %v767 = vld [vmem:[%s342 + $0x6a0] sm:$0xff]
        %v768 = vld [vmem:[%s342 + $0x6a8] sm:$0xff]
        %v769 = vld [vmem:[%s342 + $0x6b0] sm:$0xff]
        %v770 = vld [vmem:[%s342 + $0x6b8] sm:$0xff]
        %v771 = vld [vmem:[%s342 + $0x6c0] sm:$0xff]
        %v772 = vld [vmem:[%s342 + $0x6c8] sm:$0xff]
        %v773 = vld [vmem:[%s342 + $0x6d0] sm:$0xff]
        %v774 = vld [vmem:[%s342 + $0x6d8] sm:$0xff]
        %v775 = vld [vmem:[%s342 + $0x6e0] sm:$0xff]
        %v776 = vld [vmem:[%s342 + $0x6e8] sm:$0xff]
        %v777 = vld [vmem:[%s342 + $0x6f0] sm:$0xff]
        %v778 = vld [vmem:[%s342 + $0x6f8] sm:$0xff]
        %v779 = vld [vmem:[%s342 + $0x700] sm:$0xff]
        %v780 = vld [vmem:[%s342 + $0x708] sm:$0xff]
        %v781 = vld [vmem:[%s342 + $0x710] sm:$0xff]
        %v782 = vld [vmem:[%s342 + $0x718] sm:$0xff]
        %v783 = vld [vmem:[%s342 + $0x720] sm:$0xff]
        %v784 = vld [vmem:[%s342 + $0x728] sm:$0xff]
        %v785 = vld [vmem:[%s342 + $0x730] sm:$0xff]
        %v786 = vld [vmem:[%s342 + $0x738] sm:$0xff]
        %v787 = vld [vmem:[%s342 + $0x740] sm:$0xff]
        %v788 = vld [vmem:[%s342 + $0x748] sm:$0xff]
        %v789 = vld [vmem:[%s342 + $0x750] sm:$0xff]
        %v790 = vld [vmem:[%s342 + $0x758] sm:$0xff]
        %v791 = vld [vmem:[%s342 + $0x760] sm:$0xff]
        %v792 = vld [vmem:[%s342 + $0x768] sm:$0xff]
        %v793 = vld [vmem:[%s342 + $0x770] sm:$0xff]
        %v794 = vld [vmem:[%s342 + $0x778] sm:$0xff]
        %v795 = vld [vmem:[%s342 + $0x780] sm:$0xff]
        %v796 = vld [vmem:[%s342 + $0x788] sm:$0xff]
        %v797 = vld [vmem:[%s342 + $0x790] sm:$0xff]
        %v798 = vld [vmem:[%s342 + $0x798] sm:$0xff]
        %v799 = vld [vmem:[%s342 + $0x7a0] sm:$0xff]
        %v800 = vld [vmem:[%s342 + $0x7a8] sm:$0xff]
        %v801 = vld [vmem:[%s342 + $0x7b0] sm:$0xff]
        %v802 = vld [vmem:[%s342 + $0x7b8] sm:$0xff]
        %v803 = vld [vmem:[%s342 + $0x7c0] sm:$0xff]
        %v804 = vld [vmem:[%s342 + $0x7c8] sm:$0xff]
        %v805 = vld [vmem:[%s342 + $0x7d0] sm:$0xff]
        %v806 = vld [vmem:[%s342 + $0x7d8] sm:$0xff]
        %v807 = vld [vmem:[%s342 + $0x7e0] sm:$0xff]
        %v808 = vld [vmem:[%s342 + $0x7e8] sm:$0xff]
        %v809 = vld [vmem:[%s342 + $0x7f0] sm:$0xff]
        %v810 = vld [vmem:[%s342 + $0x7f8] sm:$0xff]
        %v811 = vld [vmem:[%s342 + $0x800] sm:$0xff]
        %v812 = vld [vmem:[%s342 + $0x808] sm:$0xff]
        %v813 = vld [vmem:[%s342 + $0x810] sm:$0xff]
        %v814 = vld [vmem:[%s342 + $0x818] sm:$0xff]
        %v815 = vld [vmem:[%s342 + $0x820] sm:$0xff]
        %v816 = vld [vmem:[%s342 + $0x828] sm:$0xff]
        %v817 = vld [vmem:[%s342 + $0x830] sm:$0xff]
        %v818 = vld [vmem:[%s342 + $0x838] sm:$0xff]
        %v819 = vld [vmem:[%s342 + $0x840] sm:$0xff]
        %v820 = vld [vmem:[%s342 + $0x848] sm:$0xff]
        %v821 = vld [vmem:[%s342 + $0x850] sm:$0xff]
        %v822 = vld [vmem:[%s342 + $0x858] sm:$0xff]
        %v823 = vld [vmem:[%s342 + $0x860] sm:$0xff]
        %v824 = vld [vmem:[%s342 + $0x868] sm:$0xff]
        %v825 = vld [vmem:[%s342 + $0x870] sm:$0xff]
        %v826 = vld [vmem:[%s342 + $0x878] sm:$0xff]
        %v827 = vld [vmem:[%s342 + $0x880] sm:$0xff]
        %v828 = vld [vmem:[%s342 + $0x888] sm:$0xff]
        %v829 = vld [vmem:[%s342 + $0x890] sm:$0xff]
        %v830 = vld [vmem:[%s342 + $0x898] sm:$0xff]
        %v831 = vld [vmem:[%s342 + $0x8a0] sm:$0xff]
        %v832 = vld [vmem:[%s342 + $0x8a8] sm:$0xff]
        %v833 = vld [vmem:[%s342 + $0x8b0] sm:$0xff]
        %v834 = vld [vmem:[%s342 + $0x8b8] sm:$0xff]
        %v835 = vld [vmem:[%s342 + $0x8c0] sm:$0xff]
        %v836 = vld [vmem:[%s342 + $0x8c8] sm:$0xff]
        %v837 = vld [vmem:[%s342 + $0x8d0] sm:$0xff]
        %v838 = vld [vmem:[%s342 + $0x8d8] sm:$0xff]
        %v839 = vld [vmem:[%s342 + $0x8e0] sm:$0xff]
        %v840 = vld [vmem:[%s342 + $0x8e8] sm:$0xff]
        %v841 = vld [vmem:[%s342 + $0x8f0] sm:$0xff]
        %v842 = vld [vmem:[%s342 + $0x8f8] sm:$0xff]
        %v843 = vld [vmem:[%s342 + $0x900] sm:$0xff]
        %v844 = vld [vmem:[%s342 + $0x908] sm:$0xff]
        %v845 = vld [vmem:[%s342 + $0x910] sm:$0xff]
        %v846 = vld [vmem:[%s342 + $0x918] sm:$0xff]
        %v847 = vld [vmem:[%s342 + $0x920] sm:$0xff]
        %v848 = vld [vmem:[%s342 + $0x928] sm:$0xff]
        %v849 = vld [vmem:[%s342 + $0x930] sm:$0xff]
        %v850 = vld [vmem:[%s342 + $0x938] sm:$0xff]
        %v851 = vld [vmem:[%s342 + $0x940] sm:$0xff]
        %v852 = vld [vmem:[%s342 + $0x948] sm:$0xff]
        %v853 = vld [vmem:[%s342 + $0x950] sm:$0xff]
        %v854 = vld [vmem:[%s342 + $0x958] sm:$0xff]
        %v855 = vld [vmem:[%s342 + $0x960] sm:$0xff]
        %v856 = vld [vmem:[%s342 + $0x968] sm:$0xff]
        %v857 = vld [vmem:[%s342 + $0x970] sm:$0xff]
        %v858 = vld [vmem:[%s342 + $0x978] sm:$0xff]
        %v859 = vld [vmem:[%s342 + $0x980] sm:$0xff]
        %v860 = vld [vmem:[%s342 + $0x988] sm:$0xff]
        %v861 = vld [vmem:[%s342 + $0x990] sm:$0xff]
        %v862 = vld [vmem:[%s342 + $0x998] sm:$0xff]
        %v863 = vld [vmem:[%s342 + $0x9a0] sm:$0xff]
        %v864 = vld [vmem:[%s342 + $0x9a8] sm:$0xff]
        %v865 = vld [vmem:[%s342 + $0x9b0] sm:$0xff]
        %v866 = vld [vmem:[%s342 + $0x9b8] sm:$0xff]
        %v867 = vld [vmem:[%s342 + $0x9c0] sm:$0xff]
        %v868 = vld [vmem:[%s342 + $0x9c8] sm:$0xff]
        %v869 = vld [vmem:[%s342 + $0x9d0] sm:$0xff]
        %v870 = vld [vmem:[%s342 + $0x9d8] sm:$0xff]
        %v871 = vld [vmem:[%s342 + $0x9e0] sm:$0xff]
        %v872 = vld [vmem:[%s342 + $0x9e8] sm:$0xff]
        %v873 = vld [vmem:[%s342 + $0x9f0] sm:$0xff]
        %v874 = vld [vmem:[%s342 + $0x9f8] sm:$0xff]
        %v875 = vld [vmem:[%s342 + $0xa00] sm:$0xff]
        %v876 = vld [vmem:[%s342 + $0xa08] sm:$0xff]
        %v877 = vld [vmem:[%s342 + $0xa10] sm:$0xff]
        %v878 = vld [vmem:[%s342 + $0xa18] sm:$0xff]
        %v879 = vld [vmem:[%s342 + $0xa20] sm:$0xff]
        %v880 = vld [vmem:[%s342 + $0xa28] sm:$0xff]
        %v881 = vld [vmem:[%s342 + $0xa30] sm:$0xff]
        %v882 = vld [vmem:[%s342 + $0xa38] sm:$0xff]
        %v883 = vld [vmem:[%s342 + $0xa40] sm:$0xff]
        %v884 = vld [vmem:[%s342 + $0xa48] sm:$0xff]
        %v885 = vld [vmem:[%s342 + $0xa50] sm:$0xff]
        %v886 = vld [vmem:[%s342 + $0xa58] sm:$0xff]
        %v887 = vld [vmem:[%s342 + $0xa60] sm:$0xff]
        %v888 = vld [vmem:[%s342 + $0xa68] sm:$0xff]
        %v889 = vld [vmem:[%s342 + $0xa70] sm:$0xff]
        %v890 = vld [vmem:[%s342 + $0xa78] sm:$0xff]
        %v891 = vld [vmem:[%s342 + $0xa80] sm:$0xff]
        %v892 = vld [vmem:[%s342 + $0xa88] sm:$0xff]
        %v893 = vld [vmem:[%s342 + $0xa90] sm:$0xff]
        %v894 = vld [vmem:[%s342 + $0xa98] sm:$0xff]
        %v895 = vld [vmem:[%s342 + $0xaa0] sm:$0xff]
        %v896 = vld [vmem:[%s342 + $0xaa8] sm:$0xff]
        %v897 = vld [vmem:[%s342 + $0xab0] sm:$0xff]
        %v898 = vld [vmem:[%s342 + $0xab8] sm:$0xff]
        %v899 = vld [vmem:[%s342 + $0xac0] sm:$0xff]
        %v900 = vld [vmem:[%s342 + $0xac8] sm:$0xff]
        %v901 = vld [vmem:[%s342 + $0xad0] sm:$0xff]
        %v902 = vld [vmem:[%s342 + $0xad8] sm:$0xff]
        %v903 = vld [vmem:[%s342 + $0xae0] sm:$0xff]
        %v904 = vld [vmem:[%s342 + $0xae8] sm:$0xff]
        %v905 = vld [vmem:[%s342 + $0xaf0] sm:$0xff]
        %v906 = vld [vmem:[%s342 + $0xaf8] sm:$0xff]
        %v907 = vld [vmem:[%s342 + $0xb00] sm:$0xff]
        %v908 = vld [vmem:[%s342 + $0xb08] sm:$0xff]
        %v909 = vld [vmem:[%s342 + $0xb10] sm:$0xff]
        %v910 = vld [vmem:[%s342 + $0xb18] sm:$0xff]
        %v911 = vld [vmem:[%s342 + $0xb20] sm:$0xff]
        %v912 = vld [vmem:[%s342 + $0xb28] sm:$0xff]
        %v913 = vld [vmem:[%s342 + $0xb30] sm:$0xff]
        %v914 = vld [vmem:[%s342 + $0xb38] sm:$0xff]
        %v915 = vld [vmem:[%s342 + $0xb40] sm:$0xff]
        %v916 = vld [vmem:[%s342 + $0xb48] sm:$0xff]
        %v917 = vld [vmem:[%s342 + $0xb50] sm:$0xff]
        %v918 = vld [vmem:[%s342 + $0xb58] sm:$0xff]
        %v919 = vld [vmem:[%s342 + $0xb60] sm:$0xff]
        %v920 = vld [vmem:[%s342 + $0xb68] sm:$0xff]
        %v921 = vld [vmem:[%s342 + $0xb70] sm:$0xff]
        %v922 = vld [vmem:[%s342 + $0xb78] sm:$0xff]
        %v923 = vld [vmem:[%s342 + $0xb80] sm:$0xff]
        %v924 = vld [vmem:[%s342 + $0xb88] sm:$0xff]
        %v925 = vld [vmem:[%s342 + $0xb90] sm:$0xff]
        %v926 = vld [vmem:[%s342 + $0xb98] sm:$0xff]
        %v927 = vld [vmem:[%s342 + $0xba0] sm:$0xff]
        %v928 = vld [vmem:[%s342 + $0xba8] sm:$0xff]
        %v929 = vld [vmem:[%s342 + $0xbb0] sm:$0xff]
        %v930 = vld [vmem:[%s342 + $0xbb8] sm:$0xff]
        %v931 = vld [vmem:[%s342 + $0xbc0] sm:$0xff]
        %v932 = vld [vmem:[%s342 + $0xbc8] sm:$0xff]
        %v933 = vld [vmem:[%s342 + $0xbd0] sm:$0xff]
        %v934 = vld [vmem:[%s342 + $0xbd8] sm:$0xff]
        %v935 = vld [vmem:[%s342 + $0xbe0] sm:$0xff]
        %v936 = vld [vmem:[%s342 + $0xbe8] sm:$0xff]
        %v937 = vld [vmem:[%s342 + $0xbf0] sm:$0xff]
        %v938 = vld [vmem:[%s342 + $0xbf8] sm:$0xff]
        %v939 = vld [vmem:[%s342 + $0xc00] sm:$0xff]
        %v940 = vld [vmem:[%s342 + $0xc08] sm:$0xff]
        %v941 = vld [vmem:[%s342 + $0xc10] sm:$0xff]
        %v942 = vld [vmem:[%s342 + $0xc18] sm:$0xff]
        %v943 = vld [vmem:[%s342 + $0xc20] sm:$0xff]
        %v944 = vld [vmem:[%s342 + $0xc28] sm:$0xff]
        %v945 = vld [vmem:[%s342 + $0xc30] sm:$0xff]
        %v946 = vld [vmem:[%s342 + $0xc38] sm:$0xff]
        %v947 = vld [vmem:[%s342 + $0xc40] sm:$0xff]
        %v948 = vld [vmem:[%s342 + $0xc48] sm:$0xff]
        %v949 = vld [vmem:[%s342 + $0xc50] sm:$0xff]
        %v950 = vld [vmem:[%s342 + $0xc58] sm:$0xff]
        %v951 = vld [vmem:[%s342 + $0xc60] sm:$0xff]
        %v952 = vld [vmem:[%s342 + $0xc68] sm:$0xff]
        %v953 = vld [vmem:[%s342 + $0xc70] sm:$0xff]
        %v954 = vld [vmem:[%s342 + $0xc78] sm:$0xff]
        %v955 = vld [vmem:[%s342 + $0xc80] sm:$0xff]
        %v956 = vld [vmem:[%s342 + $0xc88] sm:$0xff]
        %v957 = vld [vmem:[%s342 + $0xc90] sm:$0xff]
        %v958 = vld [vmem:[%s342 + $0xc98] sm:$0xff]
        %v959 = vld [vmem:[%s342 + $0xca0] sm:$0xff]
        %v960 = vld [vmem:[%s342 + $0xca8] sm:$0xff]
        %v961 = vld [vmem:[%s342 + $0xcb0] sm:$0xff]
        %v962 = vld [vmem:[%s342 + $0xcb8] sm:$0xff]
        %v963 = vld [vmem:[%s342 + $0xcc0] sm:$0xff]
        %v964 = vld [vmem:[%s342 + $0xcc8] sm:$0xff]
        %v965 = vld [vmem:[%s342 + $0xcd0] sm:$0xff]
        %v966 = vld [vmem:[%s342 + $0xcd8] sm:$0xff]
        %v967 = vld [vmem:[%s342 + $0xce0] sm:$0xff]
        %v968 = vld [vmem:[%s342 + $0xce8] sm:$0xff]
        %v969 = vld [vmem:[%s342 + $0xcf0] sm:$0xff]
        %v970 = vld [vmem:[%s342 + $0xcf8] sm:$0xff]
        %v971 = vld [vmem:[%s342 + $0xd00] sm:$0xff]
        %v972 = vld [vmem:[%s342 + $0xd08] sm:$0xff]
        %v973 = vld [vmem:[%s342 + $0xd10] sm:$0xff]
        %v974 = vld [vmem:[%s342 + $0xd18] sm:$0xff]
        %v975 = vld [vmem:[%s342 + $0xd20] sm:$0xff]
        %v976 = vld [vmem:[%s342 + $0xd28] sm:$0xff]
        %v977 = vld [vmem:[%s342 + $0xd30] sm:$0xff]
        %v978 = vld [vmem:[%s342 + $0xd38] sm:$0xff]
        %v979 = vld [vmem:[%s342 + $0xd40] sm:$0xff]
        %v980 = vld [vmem:[%s342 + $0xd48] sm:$0xff]
        %v981 = vld [vmem:[%s342 + $0xd50] sm:$0xff]
        %v982 = vld [vmem:[%s342 + $0xd58] sm:$0xff]
        %v983 = vld [vmem:[%s342 + $0xd60] sm:$0xff]
        %v984 = vld [vmem:[%s342 + $0xd68] sm:$0xff]
        %v985 = vld [vmem:[%s342 + $0xd70] sm:$0xff]
        %v986 = vld [vmem:[%s342 + $0xd78] sm:$0xff]
        %v987 = vld [vmem:[%s342 + $0xd80] sm:$0xff]
        %v988 = vld [vmem:[%s342 + $0xd88] sm:$0xff]
        %v989 = vld [vmem:[%s342 + $0xd90] sm:$0xff]
        %v990 = vld [vmem:[%s342 + $0xd98] sm:$0xff]
        %v991 = vld [vmem:[%s342 + $0xda0] sm:$0xff]
        %v992 = vld [vmem:[%s342 + $0xda8] sm:$0xff]
        %v993 = vld [vmem:[%s342 + $0xdb0] sm:$0xff]
        %v994 = vld [vmem:[%s342 + $0xdb8] sm:$0xff]
        %v995 = vld [vmem:[%s342 + $0xdc0] sm:$0xff]
        %v996 = vld [vmem:[%s342 + $0xdc8] sm:$0xff]
        %v997 = vld [vmem:[%s342 + $0xdd0] sm:$0xff]
        %v998 = vld [vmem:[%s342 + $0xdd8] sm:$0xff]
        %v999 = vld [vmem:[%s342 + $0xde0] sm:$0xff]
        %v1000 = vld [vmem:[%s342 + $0xde8] sm:$0xff]
        %v1001 = vld [vmem:[%s342 + $0xdf0] sm:$0xff]
        %v1002 = vld [vmem:[%s342 + $0xdf8] sm:$0xff]
        %v1003 = vld [vmem:[%s342 + $0xe00] sm:$0xff]
        %v1004 = vld [vmem:[%s342 + $0xe08] sm:$0xff]
        %v1005 = vld [vmem:[%s342 + $0xe10] sm:$0xff]
        %v1006 = vld [vmem:[%s342 + $0xe18] sm:$0xff]
        %v1007 = vld [vmem:[%s342 + $0xe20] sm:$0xff]
        %v1008 = vld [vmem:[%s342 + $0xe28] sm:$0xff]
        %v1009 = vld [vmem:[%s342 + $0xe30] sm:$0xff]
        %v1010 = vld [vmem:[%s342 + $0xe38] sm:$0xff]
        %v1011 = vld [vmem:[%s342 + $0xe40] sm:$0xff]
        %v1012 = vld [vmem:[%s342 + $0xe48] sm:$0xff]
        %v1013 = vld [vmem:[%s342 + $0xe50] sm:$0xff]
        %v1014 = vld [vmem:[%s342 + $0xe58] sm:$0xff]
        %v1015 = vld [vmem:[%s342 + $0xe60] sm:$0xff]
        %v1016 = vld [vmem:[%s342 + $0xe68] sm:$0xff]
        %v1017 = vld [vmem:[%s342 + $0xe70] sm:$0xff]
        %v1018 = vld [vmem:[%s342 + $0xe78] sm:$0xff]
        %v1019 = vld [vmem:[%s342 + $0xe80] sm:$0xff]
        %v1020 = vld [vmem:[%s342 + $0xe88] sm:$0xff]
        %v1021 = vld [vmem:[%s342 + $0xe90] sm:$0xff]
        %v1022 = vld [vmem:[%s342 + $0xe98] sm:$0xff]
        %v1023 = vld [vmem:[%s342 + $0xea0] sm:$0xff]
        %v1024 = vld [vmem:[%s342 + $0xea8] sm:$0xff]
        %v1025 = vld [vmem:[%s342 + $0xeb0] sm:$0xff]
        %v1026 = vld [vmem:[%s342 + $0xeb8] sm:$0xff]
        %v1027 = vld [vmem:[%s342 + $0xec0] sm:$0xff]
        %v1028 = vld [vmem:[%s342 + $0xec8] sm:$0xff]
        %v1029 = vld [vmem:[%s342 + $0xed0] sm:$0xff]
        %v1030 = vld [vmem:[%s342 + $0xed8] sm:$0xff]
        %v1031 = vld [vmem:[%s342 + $0xee0] sm:$0xff]
        %v1032 = vld [vmem:[%s342 + $0xee8] sm:$0xff]
        %v1033 = vld [vmem:[%s342 + $0xef0] sm:$0xff]
        %v1034 = vld [vmem:[%s342 + $0xef8] sm:$0xff]
        %v1035 = vld [vmem:[%s342 + $0xf00] sm:$0xff]
        %v1036 = vld [vmem:[%s342 + $0xf08] sm:$0xff]
        %v1037 = vld [vmem:[%s342 + $0xf10] sm:$0xff]
        %v1038 = vld [vmem:[%s342 + $0xf18] sm:$0xff]
        %v1039 = vld [vmem:[%s342 + $0xf20] sm:$0xff]
        %v1040 = vld [vmem:[%s342 + $0xf28] sm:$0xff]
        %v1041 = vld [vmem:[%s342 + $0xf30] sm:$0xff]
        %v1042 = vld [vmem:[%s342 + $0xf38] sm:$0xff]
        %v1043 = vld [vmem:[%s342 + $0xf40] sm:$0xff]
        %v1044 = vld [vmem:[%s342 + $0xf48] sm:$0xff]
        %v1045 = vld [vmem:[%s342 + $0xf50] sm:$0xff]
        %v1046 = vld [vmem:[%s342 + $0xf58] sm:$0xff]
        %v1047 = vld [vmem:[%s342 + $0xf60] sm:$0xff]
        %v1048 = vld [vmem:[%s342 + $0xf68] sm:$0xff]
        %v1049 = vld [vmem:[%s342 + $0xf70] sm:$0xff]
        %v1050 = vld [vmem:[%s342 + $0xf78] sm:$0xff]
        %v1051 = vld [vmem:[%s342 + $0xf80] sm:$0xff]
        %v1052 = vld [vmem:[%s342 + $0xf88] sm:$0xff]
        %v1053 = vld [vmem:[%s342 + $0xf90] sm:$0xff]
        %v1054 = vld [vmem:[%s342 + $0xf98] sm:$0xff]
        %v1055 = vld [vmem:[%s342 + $0xfa0] sm:$0xff]
        %v1056 = vld [vmem:[%s342 + $0xfa8] sm:$0xff]
        %v1057 = vld [vmem:[%s342 + $0xfb0] sm:$0xff]
        %v1058 = vld [vmem:[%s342 + $0xfb8] sm:$0xff]
        %v1059 = vld [vmem:[%s342 + $0xfc0] sm:$0xff]
        %v1060 = vld [vmem:[%s342 + $0xfc8] sm:$0xff]
        %v1061 = vld [vmem:[%s342 + $0xfd0] sm:$0xff]
        %v1062 = vld [vmem:[%s342 + $0xfd8] sm:$0xff]
        %v1063 = vld [vmem:[%s342 + $0xfe0] sm:$0xff]
        %v1064 = vld [vmem:[%s342 + $0xfe8] sm:$0xff]
        %v1065 = vld [vmem:[%s342 + $0xff0] sm:$0xff]
        %v1066 = vld [vmem:[%s342 + $0xff8] sm:$0xff]
        %v1067 = vunpack.c.l.s8.bf16 %v555
        %v1068 = vunpack.c.l.s8.bf16 %v556
        %v1069 = vunpack.c.h.s8.bf16 %v555
        %v1070 = vunpack.c.h.s8.bf16 %v556
        %v1071 = vunpack.c.l.s8.bf16 %v557
        %v1072 = vunpack.c.l.s8.bf16 %v558
        %v1073 = vunpack.c.h.s8.bf16 %v557
        %v1074 = vunpack.c.h.s8.bf16 %v558
        %v1075 = vunpack.c.l.s8.bf16 %v559
        %v1076 = vunpack.c.l.s8.bf16 %v560
        %v1077 = vunpack.c.h.s8.bf16 %v559
        %v1078 = vunpack.c.h.s8.bf16 %v560
        %v1079 = vunpack.c.l.s8.bf16 %v561
        %v1080 = vunpack.c.l.s8.bf16 %v562
        %v1081 = vunpack.c.h.s8.bf16 %v561
        %v1082 = vunpack.c.h.s8.bf16 %v562
        %v1083 = vunpack.c.l.s8.bf16 %v563
        %v1084 = vunpack.c.l.s8.bf16 %v564
        %v1085 = vunpack.c.h.s8.bf16 %v563
        %v1086 = vunpack.c.h.s8.bf16 %v564
        %v1087 = vunpack.c.l.s8.bf16 %v565
        %v1088 = vunpack.c.l.s8.bf16 %v566
        %v1089 = vunpack.c.h.s8.bf16 %v565
        %v1090 = vunpack.c.h.s8.bf16 %v566
        %v1091 = vunpack.c.l.s8.bf16 %v567
        %v1092 = vunpack.c.l.s8.bf16 %v568
        %v1093 = vunpack.c.h.s8.bf16 %v567
        %v1094 = vunpack.c.h.s8.bf16 %v568
        %v1095 = vunpack.c.l.s8.bf16 %v569
        %v1096 = vunpack.c.l.s8.bf16 %v570
        %v1097 = vunpack.c.h.s8.bf16 %v569
        %v1098 = vunpack.c.h.s8.bf16 %v570
        %v1099 = vunpack.c.l.s8.bf16 %v571
        %v1100 = vunpack.c.l.s8.bf16 %v572
        %v1101 = vunpack.c.h.s8.bf16 %v571
        %v1102 = vunpack.c.h.s8.bf16 %v572
        %v1103 = vunpack.c.l.s8.bf16 %v573
        %v1104 = vunpack.c.l.s8.bf16 %v574
        %v1105 = vunpack.c.h.s8.bf16 %v573
        %v1106 = vunpack.c.h.s8.bf16 %v574
        %v1107 = vunpack.c.l.s8.bf16 %v575
        %v1108 = vunpack.c.l.s8.bf16 %v576
        %v1109 = vunpack.c.h.s8.bf16 %v575
        %v1110 = vunpack.c.h.s8.bf16 %v576
        %v1111 = vunpack.c.l.s8.bf16 %v577
        %v1112 = vunpack.c.l.s8.bf16 %v578
        %v1113 = vunpack.c.h.s8.bf16 %v577
        %v1114 = vunpack.c.h.s8.bf16 %v578
        %v1115 = vunpack.c.l.s8.bf16 %v579
        %v1116 = vunpack.c.l.s8.bf16 %v580
        %v1117 = vunpack.c.h.s8.bf16 %v579
        %v1118 = vunpack.c.h.s8.bf16 %v580
        %v1119 = vunpack.c.l.s8.bf16 %v581
        %v1120 = vunpack.c.l.s8.bf16 %v582
        %v1121 = vunpack.c.h.s8.bf16 %v581
        %v1122 = vunpack.c.h.s8.bf16 %v582
        %v1123 = vunpack.c.l.s8.bf16 %v583
        %v1124 = vunpack.c.l.s8.bf16 %v584
        %v1125 = vunpack.c.h.s8.bf16 %v583
        %v1126 = vunpack.c.h.s8.bf16 %v584
        %v1127 = vunpack.c.l.s8.bf16 %v585
        %v1128 = vunpack.c.l.s8.bf16 %v586
        %v1129 = vunpack.c.h.s8.bf16 %v585
        %v1130 = vunpack.c.h.s8.bf16 %v586
        %v1131 = vunpack.c.l.s8.bf16 %v587
        %v1132 = vunpack.c.l.s8.bf16 %v588
        %v1133 = vunpack.c.h.s8.bf16 %v587
        %v1134 = vunpack.c.h.s8.bf16 %v588
        %v1135 = vunpack.c.l.s8.bf16 %v589
        %v1136 = vunpack.c.l.s8.bf16 %v590
        %v1137 = vunpack.c.h.s8.bf16 %v589
        %v1138 = vunpack.c.h.s8.bf16 %v590
        %v1139 = vunpack.c.l.s8.bf16 %v591
        %v1140 = vunpack.c.l.s8.bf16 %v592
        %v1141 = vunpack.c.h.s8.bf16 %v591
        %v1142 = vunpack.c.h.s8.bf16 %v592
        %v1143 = vunpack.c.l.s8.bf16 %v593
        %v1144 = vunpack.c.l.s8.bf16 %v594
        %v1145 = vunpack.c.h.s8.bf16 %v593
        %v1146 = vunpack.c.h.s8.bf16 %v594
        %v1147 = vunpack.c.l.s8.bf16 %v595
        %v1148 = vunpack.c.l.s8.bf16 %v596
        %v1149 = vunpack.c.h.s8.bf16 %v595
        %v1150 = vunpack.c.h.s8.bf16 %v596
        %v1151 = vunpack.c.l.s8.bf16 %v597
        %v1152 = vunpack.c.l.s8.bf16 %v598
        %v1153 = vunpack.c.h.s8.bf16 %v597
        %v1154 = vunpack.c.h.s8.bf16 %v598
        %v1155 = vunpack.c.l.s8.bf16 %v599
        %v1156 = vunpack.c.l.s8.bf16 %v600
        %v1157 = vunpack.c.h.s8.bf16 %v599
        %v1158 = vunpack.c.h.s8.bf16 %v600
        %v1159 = vunpack.c.l.s8.bf16 %v601
        %v1160 = vunpack.c.l.s8.bf16 %v602
        %v1161 = vunpack.c.h.s8.bf16 %v601
        %v1162 = vunpack.c.h.s8.bf16 %v602
        %v1163 = vunpack.c.l.s8.bf16 %v603
        %v1164 = vunpack.c.l.s8.bf16 %v604
        %v1165 = vunpack.c.h.s8.bf16 %v603
        %v1166 = vunpack.c.h.s8.bf16 %v604
        %v1167 = vunpack.c.l.s8.bf16 %v605
        %v1168 = vunpack.c.l.s8.bf16 %v606
        %v1169 = vunpack.c.h.s8.bf16 %v605
        %v1170 = vunpack.c.h.s8.bf16 %v606
        %v1171 = vunpack.c.l.s8.bf16 %v607
        %v1172 = vunpack.c.l.s8.bf16 %v608
        %v1173 = vunpack.c.h.s8.bf16 %v607
        %v1174 = vunpack.c.h.s8.bf16 %v608
        %v1175 = vunpack.c.l.s8.bf16 %v609
        %v1176 = vunpack.c.l.s8.bf16 %v610
        %v1177 = vunpack.c.h.s8.bf16 %v609
        %v1178 = vunpack.c.h.s8.bf16 %v610
        %v1179 = vunpack.c.l.s8.bf16 %v611
        %v1180 = vunpack.c.l.s8.bf16 %v612
        %v1181 = vunpack.c.h.s8.bf16 %v611
        %v1182 = vunpack.c.h.s8.bf16 %v612
        %v1183 = vunpack.c.l.s8.bf16 %v613
        %v1184 = vunpack.c.l.s8.bf16 %v614
        %v1185 = vunpack.c.h.s8.bf16 %v613
        %v1186 = vunpack.c.h.s8.bf16 %v614
        %v1187 = vunpack.c.l.s8.bf16 %v615
        %v1188 = vunpack.c.l.s8.bf16 %v616
        %v1189 = vunpack.c.h.s8.bf16 %v615
        %v1190 = vunpack.c.h.s8.bf16 %v616
        %v1191 = vunpack.c.l.s8.bf16 %v617
        %v1192 = vunpack.c.l.s8.bf16 %v618
        %v1193 = vunpack.c.h.s8.bf16 %v617
        %v1194 = vunpack.c.h.s8.bf16 %v618
        %v1195 = vunpack.c.l.s8.bf16 %v619
        %v1196 = vunpack.c.l.s8.bf16 %v620
        %v1197 = vunpack.c.h.s8.bf16 %v619
        %v1198 = vunpack.c.h.s8.bf16 %v620
        %v1199 = vunpack.c.l.s8.bf16 %v621
        %v1200 = vunpack.c.l.s8.bf16 %v622
        %v1201 = vunpack.c.h.s8.bf16 %v621
        %v1202 = vunpack.c.h.s8.bf16 %v622
        %v1203 = vunpack.c.l.s8.bf16 %v623
        %v1204 = vunpack.c.l.s8.bf16 %v624
        %v1205 = vunpack.c.h.s8.bf16 %v623
        %v1206 = vunpack.c.h.s8.bf16 %v624
        %v1207 = vunpack.c.l.s8.bf16 %v625
        %v1208 = vunpack.c.l.s8.bf16 %v626
        %v1209 = vunpack.c.h.s8.bf16 %v625
        %v1210 = vunpack.c.h.s8.bf16 %v626
        %v1211 = vunpack.c.l.s8.bf16 %v627
        %v1212 = vunpack.c.l.s8.bf16 %v628
        %v1213 = vunpack.c.h.s8.bf16 %v627
        %v1214 = vunpack.c.h.s8.bf16 %v628
        %v1215 = vunpack.c.l.s8.bf16 %v629
        %v1216 = vunpack.c.l.s8.bf16 %v630
        %v1217 = vunpack.c.h.s8.bf16 %v629
        %v1218 = vunpack.c.h.s8.bf16 %v630
        %v1219 = vunpack.c.l.s8.bf16 %v631
        %v1220 = vunpack.c.l.s8.bf16 %v632
        %v1221 = vunpack.c.h.s8.bf16 %v631
        %v1222 = vunpack.c.h.s8.bf16 %v632
        %v1223 = vunpack.c.l.s8.bf16 %v633
        %v1224 = vunpack.c.l.s8.bf16 %v634
        %v1225 = vunpack.c.h.s8.bf16 %v633
        %v1226 = vunpack.c.h.s8.bf16 %v634
        %v1227 = vunpack.c.l.s8.bf16 %v635
        %v1228 = vunpack.c.l.s8.bf16 %v636
        %v1229 = vunpack.c.h.s8.bf16 %v635
        %v1230 = vunpack.c.h.s8.bf16 %v636
        %v1231 = vunpack.c.l.s8.bf16 %v637
        %v1232 = vunpack.c.l.s8.bf16 %v638
        %v1233 = vunpack.c.h.s8.bf16 %v637
        %v1234 = vunpack.c.h.s8.bf16 %v638
        %v1235 = vunpack.c.l.s8.bf16 %v639
        %v1236 = vunpack.c.l.s8.bf16 %v640
        %v1237 = vunpack.c.h.s8.bf16 %v639
        %v1238 = vunpack.c.h.s8.bf16 %v640
        %v1239 = vunpack.c.l.s8.bf16 %v641
        %v1240 = vunpack.c.l.s8.bf16 %v642
        %v1241 = vunpack.c.h.s8.bf16 %v641
        %v1242 = vunpack.c.h.s8.bf16 %v642
        %v1243 = vunpack.c.l.s8.bf16 %v643
        %v1244 = vunpack.c.l.s8.bf16 %v644
        %v1245 = vunpack.c.h.s8.bf16 %v643
        %v1246 = vunpack.c.h.s8.bf16 %v644
        %v1247 = vunpack.c.l.s8.bf16 %v645
        %v1248 = vunpack.c.l.s8.bf16 %v646
        %v1249 = vunpack.c.h.s8.bf16 %v645
        %v1250 = vunpack.c.h.s8.bf16 %v646
        %v1251 = vunpack.c.l.s8.bf16 %v647
        %v1252 = vunpack.c.l.s8.bf16 %v648
        %v1253 = vunpack.c.h.s8.bf16 %v647
        %v1254 = vunpack.c.h.s8.bf16 %v648
        %v1255 = vunpack.c.l.s8.bf16 %v649
        %v1256 = vunpack.c.l.s8.bf16 %v650
        %v1257 = vunpack.c.h.s8.bf16 %v649
        %v1258 = vunpack.c.h.s8.bf16 %v650
        %v1259 = vunpack.c.l.s8.bf16 %v651
        %v1260 = vunpack.c.l.s8.bf16 %v652
        %v1261 = vunpack.c.h.s8.bf16 %v651
        %v1262 = vunpack.c.h.s8.bf16 %v652
        %v1263 = vunpack.c.l.s8.bf16 %v653
        %v1264 = vunpack.c.l.s8.bf16 %v654
        %v1265 = vunpack.c.h.s8.bf16 %v653
        %v1266 = vunpack.c.h.s8.bf16 %v654
        %v1267 = vunpack.c.l.s8.bf16 %v655
        %v1268 = vunpack.c.l.s8.bf16 %v656
        %v1269 = vunpack.c.h.s8.bf16 %v655
        %v1270 = vunpack.c.h.s8.bf16 %v656
        %v1271 = vunpack.c.l.s8.bf16 %v657
        %v1272 = vunpack.c.l.s8.bf16 %v658
        %v1273 = vunpack.c.h.s8.bf16 %v657
        %v1274 = vunpack.c.h.s8.bf16 %v658
        %v1275 = vunpack.c.l.s8.bf16 %v659
        %v1276 = vunpack.c.l.s8.bf16 %v660
        %v1277 = vunpack.c.h.s8.bf16 %v659
        %v1278 = vunpack.c.h.s8.bf16 %v660
        %v1279 = vunpack.c.l.s8.bf16 %v661
        %v1280 = vunpack.c.l.s8.bf16 %v662
        %v1281 = vunpack.c.h.s8.bf16 %v661
        %v1282 = vunpack.c.h.s8.bf16 %v662
        %v1283 = vunpack.c.l.s8.bf16 %v663
        %v1284 = vunpack.c.l.s8.bf16 %v664
        %v1285 = vunpack.c.h.s8.bf16 %v663
        %v1286 = vunpack.c.h.s8.bf16 %v664
        %v1287 = vunpack.c.l.s8.bf16 %v665
        %v1288 = vunpack.c.l.s8.bf16 %v666
        %v1289 = vunpack.c.h.s8.bf16 %v665
        %v1290 = vunpack.c.h.s8.bf16 %v666
        %v1291 = vunpack.c.l.s8.bf16 %v667
        %v1292 = vunpack.c.l.s8.bf16 %v668
        %v1293 = vunpack.c.h.s8.bf16 %v667
        %v1294 = vunpack.c.h.s8.bf16 %v668
        %v1295 = vunpack.c.l.s8.bf16 %v669
        %v1296 = vunpack.c.l.s8.bf16 %v670
        %v1297 = vunpack.c.h.s8.bf16 %v669
        %v1298 = vunpack.c.h.s8.bf16 %v670
        %v1299 = vunpack.c.l.s8.bf16 %v671
        %v1300 = vunpack.c.l.s8.bf16 %v672
        %v1301 = vunpack.c.h.s8.bf16 %v671
        %v1302 = vunpack.c.h.s8.bf16 %v672
        %v1303 = vunpack.c.l.s8.bf16 %v673
        %v1304 = vunpack.c.l.s8.bf16 %v674
        %v1305 = vunpack.c.h.s8.bf16 %v673
        %v1306 = vunpack.c.h.s8.bf16 %v674
        %v1307 = vunpack.c.l.s8.bf16 %v675
        %v1308 = vunpack.c.l.s8.bf16 %v676
        %v1309 = vunpack.c.h.s8.bf16 %v675
        %v1310 = vunpack.c.h.s8.bf16 %v676
        %v1311 = vunpack.c.l.s8.bf16 %v677
        %v1312 = vunpack.c.l.s8.bf16 %v678
        %v1313 = vunpack.c.h.s8.bf16 %v677
        %v1314 = vunpack.c.h.s8.bf16 %v678
        %v1315 = vunpack.c.l.s8.bf16 %v679
        %v1316 = vunpack.c.l.s8.bf16 %v680
        %v1317 = vunpack.c.h.s8.bf16 %v679
        %v1318 = vunpack.c.h.s8.bf16 %v680
        %v1319 = vunpack.c.l.s8.bf16 %v681
        %v1320 = vunpack.c.l.s8.bf16 %v682
        %v1321 = vunpack.c.h.s8.bf16 %v681
        %v1322 = vunpack.c.h.s8.bf16 %v682
        %v1323 = vunpack.c.l.s8.bf16 %v683
        %v1324 = vunpack.c.l.s8.bf16 %v684
        %v1325 = vunpack.c.h.s8.bf16 %v683
        %v1326 = vunpack.c.h.s8.bf16 %v684
        %v1327 = vunpack.c.l.s8.bf16 %v685
        %v1328 = vunpack.c.l.s8.bf16 %v686
        %v1329 = vunpack.c.h.s8.bf16 %v685
        %v1330 = vunpack.c.h.s8.bf16 %v686
        %v1331 = vunpack.c.l.s8.bf16 %v687
        %v1332 = vunpack.c.l.s8.bf16 %v688
        %v1333 = vunpack.c.h.s8.bf16 %v687
        %v1334 = vunpack.c.h.s8.bf16 %v688
        %v1335 = vunpack.c.l.s8.bf16 %v689
        %v1336 = vunpack.c.l.s8.bf16 %v690
        %v1337 = vunpack.c.h.s8.bf16 %v689
        %v1338 = vunpack.c.h.s8.bf16 %v690
        %v1339 = vunpack.c.l.s8.bf16 %v691
        %v1340 = vunpack.c.l.s8.bf16 %v692
        %v1341 = vunpack.c.h.s8.bf16 %v691
        %v1342 = vunpack.c.h.s8.bf16 %v692
        %v1343 = vunpack.c.l.s8.bf16 %v693
        %v1344 = vunpack.c.l.s8.bf16 %v694
        %v1345 = vunpack.c.h.s8.bf16 %v693
        %v1346 = vunpack.c.h.s8.bf16 %v694
        %v1347 = vunpack.c.l.s8.bf16 %v695
        %v1348 = vunpack.c.l.s8.bf16 %v696
        %v1349 = vunpack.c.h.s8.bf16 %v695
        %v1350 = vunpack.c.h.s8.bf16 %v696
        %v1351 = vunpack.c.l.s8.bf16 %v697
        %v1352 = vunpack.c.l.s8.bf16 %v698
        %v1353 = vunpack.c.h.s8.bf16 %v697
        %v1354 = vunpack.c.h.s8.bf16 %v698
        %v1355 = vunpack.c.l.s8.bf16 %v699
        %v1356 = vunpack.c.l.s8.bf16 %v700
        %v1357 = vunpack.c.h.s8.bf16 %v699
        %v1358 = vunpack.c.h.s8.bf16 %v700
        %v1359 = vunpack.c.l.s8.bf16 %v701
        %v1360 = vunpack.c.l.s8.bf16 %v702
        %v1361 = vunpack.c.h.s8.bf16 %v701
        %v1362 = vunpack.c.h.s8.bf16 %v702
        %v1363 = vunpack.c.l.s8.bf16 %v703
        %v1364 = vunpack.c.l.s8.bf16 %v704
        %v1365 = vunpack.c.h.s8.bf16 %v703
        %v1366 = vunpack.c.h.s8.bf16 %v704
        %v1367 = vunpack.c.l.s8.bf16 %v705
        %v1368 = vunpack.c.l.s8.bf16 %v706
        %v1369 = vunpack.c.h.s8.bf16 %v705
        %v1370 = vunpack.c.h.s8.bf16 %v706
        %v1371 = vunpack.c.l.s8.bf16 %v707
        %v1372 = vunpack.c.l.s8.bf16 %v708
        %v1373 = vunpack.c.h.s8.bf16 %v707
        %v1374 = vunpack.c.h.s8.bf16 %v708
        %v1375 = vunpack.c.l.s8.bf16 %v709
        %v1376 = vunpack.c.l.s8.bf16 %v710
        %v1377 = vunpack.c.h.s8.bf16 %v709
        %v1378 = vunpack.c.h.s8.bf16 %v710
        %v1379 = vunpack.c.l.s8.bf16 %v711
        %v1380 = vunpack.c.l.s8.bf16 %v712
        %v1381 = vunpack.c.h.s8.bf16 %v711
        %v1382 = vunpack.c.h.s8.bf16 %v712
        %v1383 = vunpack.c.l.s8.bf16 %v713
        %v1384 = vunpack.c.l.s8.bf16 %v714
        %v1385 = vunpack.c.h.s8.bf16 %v713
        %v1386 = vunpack.c.h.s8.bf16 %v714
        %v1387 = vunpack.c.l.s8.bf16 %v715
        %v1388 = vunpack.c.l.s8.bf16 %v716
        %v1389 = vunpack.c.h.s8.bf16 %v715
        %v1390 = vunpack.c.h.s8.bf16 %v716
        %v1391 = vunpack.c.l.s8.bf16 %v717
        %v1392 = vunpack.c.l.s8.bf16 %v718
        %v1393 = vunpack.c.h.s8.bf16 %v717
        %v1394 = vunpack.c.h.s8.bf16 %v718
        %v1395 = vunpack.c.l.s8.bf16 %v719
        %v1396 = vunpack.c.l.s8.bf16 %v720
        %v1397 = vunpack.c.h.s8.bf16 %v719
        %v1398 = vunpack.c.h.s8.bf16 %v720
        %v1399 = vunpack.c.l.s8.bf16 %v721
        %v1400 = vunpack.c.l.s8.bf16 %v722
        %v1401 = vunpack.c.h.s8.bf16 %v721
        %v1402 = vunpack.c.h.s8.bf16 %v722
        %v1403 = vunpack.c.l.s8.bf16 %v723
        %v1404 = vunpack.c.l.s8.bf16 %v724
        %v1405 = vunpack.c.h.s8.bf16 %v723
        %v1406 = vunpack.c.h.s8.bf16 %v724
        %v1407 = vunpack.c.l.s8.bf16 %v725
        %v1408 = vunpack.c.l.s8.bf16 %v726
        %v1409 = vunpack.c.h.s8.bf16 %v725
        %v1410 = vunpack.c.h.s8.bf16 %v726
        %v1411 = vunpack.c.l.s8.bf16 %v727
        %v1412 = vunpack.c.l.s8.bf16 %v728
        %v1413 = vunpack.c.h.s8.bf16 %v727
        %v1414 = vunpack.c.h.s8.bf16 %v728
        %v1415 = vunpack.c.l.s8.bf16 %v729
        %v1416 = vunpack.c.l.s8.bf16 %v730
        %v1417 = vunpack.c.h.s8.bf16 %v729
        %v1418 = vunpack.c.h.s8.bf16 %v730
        %v1419 = vunpack.c.l.s8.bf16 %v731
        %v1420 = vunpack.c.l.s8.bf16 %v732
        %v1421 = vunpack.c.h.s8.bf16 %v731
        %v1422 = vunpack.c.h.s8.bf16 %v732
        %v1423 = vunpack.c.l.s8.bf16 %v733
        %v1424 = vunpack.c.l.s8.bf16 %v734
        %v1425 = vunpack.c.h.s8.bf16 %v733
        %v1426 = vunpack.c.h.s8.bf16 %v734
        %v1427 = vunpack.c.l.s8.bf16 %v735
        %v1428 = vunpack.c.l.s8.bf16 %v736
        %v1429 = vunpack.c.h.s8.bf16 %v735
        %v1430 = vunpack.c.h.s8.bf16 %v736
        %v1431 = vunpack.c.l.s8.bf16 %v737
        %v1432 = vunpack.c.l.s8.bf16 %v738
        %v1433 = vunpack.c.h.s8.bf16 %v737
        %v1434 = vunpack.c.h.s8.bf16 %v738
        %v1435 = vunpack.c.l.s8.bf16 %v739
        %v1436 = vunpack.c.l.s8.bf16 %v740
        %v1437 = vunpack.c.h.s8.bf16 %v739
        %v1438 = vunpack.c.h.s8.bf16 %v740
        %v1439 = vunpack.c.l.s8.bf16 %v741
        %v1440 = vunpack.c.l.s8.bf16 %v742
        %v1441 = vunpack.c.h.s8.bf16 %v741
        %v1442 = vunpack.c.h.s8.bf16 %v742
        %v1443 = vunpack.c.l.s8.bf16 %v743
        %v1444 = vunpack.c.l.s8.bf16 %v744
        %v1445 = vunpack.c.h.s8.bf16 %v743
        %v1446 = vunpack.c.h.s8.bf16 %v744
        %v1447 = vunpack.c.l.s8.bf16 %v745
        %v1448 = vunpack.c.l.s8.bf16 %v746
        %v1449 = vunpack.c.h.s8.bf16 %v745
        %v1450 = vunpack.c.h.s8.bf16 %v746
        %v1451 = vunpack.c.l.s8.bf16 %v747
        %v1452 = vunpack.c.l.s8.bf16 %v748
        %v1453 = vunpack.c.h.s8.bf16 %v747
        %v1454 = vunpack.c.h.s8.bf16 %v748
        %v1455 = vunpack.c.l.s8.bf16 %v749
        %v1456 = vunpack.c.l.s8.bf16 %v750
        %v1457 = vunpack.c.h.s8.bf16 %v749
        %v1458 = vunpack.c.h.s8.bf16 %v750
        %v1459 = vunpack.c.l.s8.bf16 %v751
        %v1460 = vunpack.c.l.s8.bf16 %v752
        %v1461 = vunpack.c.h.s8.bf16 %v751
        %v1462 = vunpack.c.h.s8.bf16 %v752
        %v1463 = vunpack.c.l.s8.bf16 %v753
        %v1464 = vunpack.c.l.s8.bf16 %v754
        %v1465 = vunpack.c.h.s8.bf16 %v753
        %v1466 = vunpack.c.h.s8.bf16 %v754
        %v1467 = vunpack.c.l.s8.bf16 %v755
        %v1468 = vunpack.c.l.s8.bf16 %v756
        %v1469 = vunpack.c.h.s8.bf16 %v755
        %v1470 = vunpack.c.h.s8.bf16 %v756
        %v1471 = vunpack.c.l.s8.bf16 %v757
        %v1472 = vunpack.c.l.s8.bf16 %v758
        %v1473 = vunpack.c.h.s8.bf16 %v757
        %v1474 = vunpack.c.h.s8.bf16 %v758
        %v1475 = vunpack.c.l.s8.bf16 %v759
        %v1476 = vunpack.c.l.s8.bf16 %v760
        %v1477 = vunpack.c.h.s8.bf16 %v759
        %v1478 = vunpack.c.h.s8.bf16 %v760
        %v1479 = vunpack.c.l.s8.bf16 %v761
        %v1480 = vunpack.c.l.s8.bf16 %v762
        %v1481 = vunpack.c.h.s8.bf16 %v761
        %v1482 = vunpack.c.h.s8.bf16 %v762
        %v1483 = vunpack.c.l.s8.bf16 %v763
        %v1484 = vunpack.c.l.s8.bf16 %v764
        %v1485 = vunpack.c.h.s8.bf16 %v763
        %v1486 = vunpack.c.h.s8.bf16 %v764
        %v1487 = vunpack.c.l.s8.bf16 %v765
        %v1488 = vunpack.c.l.s8.bf16 %v766
        %v1489 = vunpack.c.h.s8.bf16 %v765
        %v1490 = vunpack.c.h.s8.bf16 %v766
        %v1491 = vunpack.c.l.s8.bf16 %v767
        %v1492 = vunpack.c.l.s8.bf16 %v768
        %v1493 = vunpack.c.h.s8.bf16 %v767
        %v1494 = vunpack.c.h.s8.bf16 %v768
        %v1495 = vunpack.c.l.s8.bf16 %v769
        %v1496 = vunpack.c.l.s8.bf16 %v770
        %v1497 = vunpack.c.h.s8.bf16 %v769
        %v1498 = vunpack.c.h.s8.bf16 %v770
        %v1499 = vunpack.c.l.s8.bf16 %v771
        %v1500 = vunpack.c.l.s8.bf16 %v772
        %v1501 = vunpack.c.h.s8.bf16 %v771
        %v1502 = vunpack.c.h.s8.bf16 %v772
        %v1503 = vunpack.c.l.s8.bf16 %v773
        %v1504 = vunpack.c.l.s8.bf16 %v774
        %v1505 = vunpack.c.h.s8.bf16 %v773
        %v1506 = vunpack.c.h.s8.bf16 %v774
        %v1507 = vunpack.c.l.s8.bf16 %v775
        %v1508 = vunpack.c.l.s8.bf16 %v776
        %v1509 = vunpack.c.h.s8.bf16 %v775
        %v1510 = vunpack.c.h.s8.bf16 %v776
        %v1511 = vunpack.c.l.s8.bf16 %v777
        %v1512 = vunpack.c.l.s8.bf16 %v778
        %v1513 = vunpack.c.h.s8.bf16 %v777
        %v1514 = vunpack.c.h.s8.bf16 %v778
        %v1515 = vunpack.c.l.s8.bf16 %v779
        %v1516 = vunpack.c.l.s8.bf16 %v780
        %v1517 = vunpack.c.h.s8.bf16 %v779
        %v1518 = vunpack.c.h.s8.bf16 %v780
        %v1519 = vunpack.c.l.s8.bf16 %v781
        %v1520 = vunpack.c.l.s8.bf16 %v782
        %v1521 = vunpack.c.h.s8.bf16 %v781
        %v1522 = vunpack.c.h.s8.bf16 %v782
        %v1523 = vunpack.c.l.s8.bf16 %v783
        %v1524 = vunpack.c.l.s8.bf16 %v784
        %v1525 = vunpack.c.h.s8.bf16 %v783
        %v1526 = vunpack.c.h.s8.bf16 %v784
        %v1527 = vunpack.c.l.s8.bf16 %v785
        %v1528 = vunpack.c.l.s8.bf16 %v786
        %v1529 = vunpack.c.h.s8.bf16 %v785
        %v1530 = vunpack.c.h.s8.bf16 %v786
        %v1531 = vunpack.c.l.s8.bf16 %v787
        %v1532 = vunpack.c.l.s8.bf16 %v788
        %v1533 = vunpack.c.h.s8.bf16 %v787
        %v1534 = vunpack.c.h.s8.bf16 %v788
        %v1535 = vunpack.c.l.s8.bf16 %v789
        %v1536 = vunpack.c.l.s8.bf16 %v790
        %v1537 = vunpack.c.h.s8.bf16 %v789
        %v1538 = vunpack.c.h.s8.bf16 %v790
        %v1539 = vunpack.c.l.s8.bf16 %v791
        %v1540 = vunpack.c.l.s8.bf16 %v792
        %v1541 = vunpack.c.h.s8.bf16 %v791
        %v1542 = vunpack.c.h.s8.bf16 %v792
        %v1543 = vunpack.c.l.s8.bf16 %v793
        %v1544 = vunpack.c.l.s8.bf16 %v794
        %v1545 = vunpack.c.h.s8.bf16 %v793
        %v1546 = vunpack.c.h.s8.bf16 %v794
        %v1547 = vunpack.c.l.s8.bf16 %v795
        %v1548 = vunpack.c.l.s8.bf16 %v796
        %v1549 = vunpack.c.h.s8.bf16 %v795
        %v1550 = vunpack.c.h.s8.bf16 %v796
        %v1551 = vunpack.c.l.s8.bf16 %v797
        %v1552 = vunpack.c.l.s8.bf16 %v798
        %v1553 = vunpack.c.h.s8.bf16 %v797
        %v1554 = vunpack.c.h.s8.bf16 %v798
        %v1555 = vunpack.c.l.s8.bf16 %v799
        %v1556 = vunpack.c.l.s8.bf16 %v800
        %v1557 = vunpack.c.h.s8.bf16 %v799
        %v1558 = vunpack.c.h.s8.bf16 %v800
        %v1559 = vunpack.c.l.s8.bf16 %v801
        %v1560 = vunpack.c.l.s8.bf16 %v802
        %v1561 = vunpack.c.h.s8.bf16 %v801
        %v1562 = vunpack.c.h.s8.bf16 %v802
        %v1563 = vunpack.c.l.s8.bf16 %v803
        %v1564 = vunpack.c.l.s8.bf16 %v804
        %v1565 = vunpack.c.h.s8.bf16 %v803
        %v1566 = vunpack.c.h.s8.bf16 %v804
        %v1567 = vunpack.c.l.s8.bf16 %v805
        %v1568 = vunpack.c.l.s8.bf16 %v806
        %v1569 = vunpack.c.h.s8.bf16 %v805
        %v1570 = vunpack.c.h.s8.bf16 %v806
        %v1571 = vunpack.c.l.s8.bf16 %v807
        %v1572 = vunpack.c.l.s8.bf16 %v808
        %v1573 = vunpack.c.h.s8.bf16 %v807
        %v1574 = vunpack.c.h.s8.bf16 %v808
        %v1575 = vunpack.c.l.s8.bf16 %v809
        %v1576 = vunpack.c.l.s8.bf16 %v810
        %v1577 = vunpack.c.h.s8.bf16 %v809
        %v1578 = vunpack.c.h.s8.bf16 %v810
        %v1579 = vunpack.c.l.s8.bf16 %v811
        %v1580 = vunpack.c.l.s8.bf16 %v812
        %v1581 = vunpack.c.h.s8.bf16 %v811
        %v1582 = vunpack.c.h.s8.bf16 %v812
        %v1583 = vunpack.c.l.s8.bf16 %v813
        %v1584 = vunpack.c.l.s8.bf16 %v814
        %v1585 = vunpack.c.h.s8.bf16 %v813
        %v1586 = vunpack.c.h.s8.bf16 %v814
        %v1587 = vunpack.c.l.s8.bf16 %v815
        %v1588 = vunpack.c.l.s8.bf16 %v816
        %v1589 = vunpack.c.h.s8.bf16 %v815
        %v1590 = vunpack.c.h.s8.bf16 %v816
        %v1591 = vunpack.c.l.s8.bf16 %v817
        %v1592 = vunpack.c.l.s8.bf16 %v818
        %v1593 = vunpack.c.h.s8.bf16 %v817
        %v1594 = vunpack.c.h.s8.bf16 %v818
        %v1595 = vunpack.c.l.s8.bf16 %v819
        %v1596 = vunpack.c.l.s8.bf16 %v820
        %v1597 = vunpack.c.h.s8.bf16 %v819
        %v1598 = vunpack.c.h.s8.bf16 %v820
        %v1599 = vunpack.c.l.s8.bf16 %v821
        %v1600 = vunpack.c.l.s8.bf16 %v822
        %v1601 = vunpack.c.h.s8.bf16 %v821
        %v1602 = vunpack.c.h.s8.bf16 %v822
        %v1603 = vunpack.c.l.s8.bf16 %v823
        %v1604 = vunpack.c.l.s8.bf16 %v824
        %v1605 = vunpack.c.h.s8.bf16 %v823
        %v1606 = vunpack.c.h.s8.bf16 %v824
        %v1607 = vunpack.c.l.s8.bf16 %v825
        %v1608 = vunpack.c.l.s8.bf16 %v826
        %v1609 = vunpack.c.h.s8.bf16 %v825
        %v1610 = vunpack.c.h.s8.bf16 %v826
        %v1611 = vunpack.c.l.s8.bf16 %v827
        %v1612 = vunpack.c.l.s8.bf16 %v828
        %v1613 = vunpack.c.h.s8.bf16 %v827
        %v1614 = vunpack.c.h.s8.bf16 %v828
        %v1615 = vunpack.c.l.s8.bf16 %v829
        %v1616 = vunpack.c.l.s8.bf16 %v830
        %v1617 = vunpack.c.h.s8.bf16 %v829
        %v1618 = vunpack.c.h.s8.bf16 %v830
        %v1619 = vunpack.c.l.s8.bf16 %v831
        %v1620 = vunpack.c.l.s8.bf16 %v832
        %v1621 = vunpack.c.h.s8.bf16 %v831
        %v1622 = vunpack.c.h.s8.bf16 %v832
        %v1623 = vunpack.c.l.s8.bf16 %v833
        %v1624 = vunpack.c.l.s8.bf16 %v834
        %v1625 = vunpack.c.h.s8.bf16 %v833
        %v1626 = vunpack.c.h.s8.bf16 %v834
        %v1627 = vunpack.c.l.s8.bf16 %v835
        %v1628 = vunpack.c.l.s8.bf16 %v836
        %v1629 = vunpack.c.h.s8.bf16 %v835
        %v1630 = vunpack.c.h.s8.bf16 %v836
        %v1631 = vunpack.c.l.s8.bf16 %v837
        %v1632 = vunpack.c.l.s8.bf16 %v838
        %v1633 = vunpack.c.h.s8.bf16 %v837
        %v1634 = vunpack.c.h.s8.bf16 %v838
        %v1635 = vunpack.c.l.s8.bf16 %v839
        %v1636 = vunpack.c.l.s8.bf16 %v840
        %v1637 = vunpack.c.h.s8.bf16 %v839
        %v1638 = vunpack.c.h.s8.bf16 %v840
        %v1639 = vunpack.c.l.s8.bf16 %v841
        %v1640 = vunpack.c.l.s8.bf16 %v842
        %v1641 = vunpack.c.h.s8.bf16 %v841
        %v1642 = vunpack.c.h.s8.bf16 %v842
        %v1643 = vunpack.c.l.s8.bf16 %v843
        %v1644 = vunpack.c.l.s8.bf16 %v844
        %v1645 = vunpack.c.h.s8.bf16 %v843
        %v1646 = vunpack.c.h.s8.bf16 %v844
        %v1647 = vunpack.c.l.s8.bf16 %v845
        %v1648 = vunpack.c.l.s8.bf16 %v846
        %v1649 = vunpack.c.h.s8.bf16 %v845
        %v1650 = vunpack.c.h.s8.bf16 %v846
        %v1651 = vunpack.c.l.s8.bf16 %v847
        %v1652 = vunpack.c.l.s8.bf16 %v848
        %v1653 = vunpack.c.h.s8.bf16 %v847
        %v1654 = vunpack.c.h.s8.bf16 %v848
        %v1655 = vunpack.c.l.s8.bf16 %v849
        %v1656 = vunpack.c.l.s8.bf16 %v850
        %v1657 = vunpack.c.h.s8.bf16 %v849
        %v1658 = vunpack.c.h.s8.bf16 %v850
        %v1659 = vunpack.c.l.s8.bf16 %v851
        %v1660 = vunpack.c.l.s8.bf16 %v852
        %v1661 = vunpack.c.h.s8.bf16 %v851
        %v1662 = vunpack.c.h.s8.bf16 %v852
        %v1663 = vunpack.c.l.s8.bf16 %v853
        %v1664 = vunpack.c.l.s8.bf16 %v854
        %v1665 = vunpack.c.h.s8.bf16 %v853
        %v1666 = vunpack.c.h.s8.bf16 %v854
        %v1667 = vunpack.c.l.s8.bf16 %v855
        %v1668 = vunpack.c.l.s8.bf16 %v856
        %v1669 = vunpack.c.h.s8.bf16 %v855
        %v1670 = vunpack.c.h.s8.bf16 %v856
        %v1671 = vunpack.c.l.s8.bf16 %v857
        %v1672 = vunpack.c.l.s8.bf16 %v858
        %v1673 = vunpack.c.h.s8.bf16 %v857
        %v1674 = vunpack.c.h.s8.bf16 %v858
        %v1675 = vunpack.c.l.s8.bf16 %v859
        %v1676 = vunpack.c.l.s8.bf16 %v860
        %v1677 = vunpack.c.h.s8.bf16 %v859
        %v1678 = vunpack.c.h.s8.bf16 %v860
        %v1679 = vunpack.c.l.s8.bf16 %v861
        %v1680 = vunpack.c.l.s8.bf16 %v862
        %v1681 = vunpack.c.h.s8.bf16 %v861
        %v1682 = vunpack.c.h.s8.bf16 %v862
        %v1683 = vunpack.c.l.s8.bf16 %v863
        %v1684 = vunpack.c.l.s8.bf16 %v864
        %v1685 = vunpack.c.h.s8.bf16 %v863
        %v1686 = vunpack.c.h.s8.bf16 %v864
        %v1687 = vunpack.c.l.s8.bf16 %v865
        %v1688 = vunpack.c.l.s8.bf16 %v866
        %v1689 = vunpack.c.h.s8.bf16 %v865
        %v1690 = vunpack.c.h.s8.bf16 %v866
        %v1691 = vunpack.c.l.s8.bf16 %v867
        %v1692 = vunpack.c.l.s8.bf16 %v868
        %v1693 = vunpack.c.h.s8.bf16 %v867
        %v1694 = vunpack.c.h.s8.bf16 %v868
        %v1695 = vunpack.c.l.s8.bf16 %v869
        %v1696 = vunpack.c.l.s8.bf16 %v870
        %v1697 = vunpack.c.h.s8.bf16 %v869
        %v1698 = vunpack.c.h.s8.bf16 %v870
        %v1699 = vunpack.c.l.s8.bf16 %v871
        %v1700 = vunpack.c.l.s8.bf16 %v872
        %v1701 = vunpack.c.h.s8.bf16 %v871
        %v1702 = vunpack.c.h.s8.bf16 %v872
        %v1703 = vunpack.c.l.s8.bf16 %v873
        %v1704 = vunpack.c.l.s8.bf16 %v874
        %v1705 = vunpack.c.h.s8.bf16 %v873
        %v1706 = vunpack.c.h.s8.bf16 %v874
        %v1707 = vunpack.c.l.s8.bf16 %v875
        %v1708 = vunpack.c.l.s8.bf16 %v876
        %v1709 = vunpack.c.h.s8.bf16 %v875
        %v1710 = vunpack.c.h.s8.bf16 %v876
        %v1711 = vunpack.c.l.s8.bf16 %v877
        %v1712 = vunpack.c.l.s8.bf16 %v878
        %v1713 = vunpack.c.h.s8.bf16 %v877
        %v1714 = vunpack.c.h.s8.bf16 %v878
        %v1715 = vunpack.c.l.s8.bf16 %v879
        %v1716 = vunpack.c.l.s8.bf16 %v880
        %v1717 = vunpack.c.h.s8.bf16 %v879
        %v1718 = vunpack.c.h.s8.bf16 %v880
        %v1719 = vunpack.c.l.s8.bf16 %v881
        %v1720 = vunpack.c.l.s8.bf16 %v882
        %v1721 = vunpack.c.h.s8.bf16 %v881
        %v1722 = vunpack.c.h.s8.bf16 %v882
        %v1723 = vunpack.c.l.s8.bf16 %v883
        %v1724 = vunpack.c.l.s8.bf16 %v884
        %v1725 = vunpack.c.h.s8.bf16 %v883
        %v1726 = vunpack.c.h.s8.bf16 %v884
        %v1727 = vunpack.c.l.s8.bf16 %v885
        %v1728 = vunpack.c.l.s8.bf16 %v886
        %v1729 = vunpack.c.h.s8.bf16 %v885
        %v1730 = vunpack.c.h.s8.bf16 %v886
        %v1731 = vunpack.c.l.s8.bf16 %v887
        %v1732 = vunpack.c.l.s8.bf16 %v888
        %v1733 = vunpack.c.h.s8.bf16 %v887
        %v1734 = vunpack.c.h.s8.bf16 %v888
        %v1735 = vunpack.c.l.s8.bf16 %v889
        %v1736 = vunpack.c.l.s8.bf16 %v890
        %v1737 = vunpack.c.h.s8.bf16 %v889
        %v1738 = vunpack.c.h.s8.bf16 %v890
        %v1739 = vunpack.c.l.s8.bf16 %v891
        %v1740 = vunpack.c.l.s8.bf16 %v892
        %v1741 = vunpack.c.h.s8.bf16 %v891
        %v1742 = vunpack.c.h.s8.bf16 %v892
        %v1743 = vunpack.c.l.s8.bf16 %v893
        %v1744 = vunpack.c.l.s8.bf16 %v894
        %v1745 = vunpack.c.h.s8.bf16 %v893
        %v1746 = vunpack.c.h.s8.bf16 %v894
        %v1747 = vunpack.c.l.s8.bf16 %v895
        %v1748 = vunpack.c.l.s8.bf16 %v896
        %v1749 = vunpack.c.h.s8.bf16 %v895
        %v1750 = vunpack.c.h.s8.bf16 %v896
        %v1751 = vunpack.c.l.s8.bf16 %v897
        %v1752 = vunpack.c.l.s8.bf16 %v898
        %v1753 = vunpack.c.h.s8.bf16 %v897
        %v1754 = vunpack.c.h.s8.bf16 %v898
        %v1755 = vunpack.c.l.s8.bf16 %v899
        %v1756 = vunpack.c.l.s8.bf16 %v900
        %v1757 = vunpack.c.h.s8.bf16 %v899
        %v1758 = vunpack.c.h.s8.bf16 %v900
        %v1759 = vunpack.c.l.s8.bf16 %v901
        %v1760 = vunpack.c.l.s8.bf16 %v902
        %v1761 = vunpack.c.h.s8.bf16 %v901
        %v1762 = vunpack.c.h.s8.bf16 %v902
        %v1763 = vunpack.c.l.s8.bf16 %v903
        %v1764 = vunpack.c.l.s8.bf16 %v904
        %v1765 = vunpack.c.h.s8.bf16 %v903
        %v1766 = vunpack.c.h.s8.bf16 %v904
        %v1767 = vunpack.c.l.s8.bf16 %v905
        %v1768 = vunpack.c.l.s8.bf16 %v906
        %v1769 = vunpack.c.h.s8.bf16 %v905
        %v1770 = vunpack.c.h.s8.bf16 %v906
        %v1771 = vunpack.c.l.s8.bf16 %v907
        %v1772 = vunpack.c.l.s8.bf16 %v908
        %v1773 = vunpack.c.h.s8.bf16 %v907
        %v1774 = vunpack.c.h.s8.bf16 %v908
        %v1775 = vunpack.c.l.s8.bf16 %v909
        %v1776 = vunpack.c.l.s8.bf16 %v910
        %v1777 = vunpack.c.h.s8.bf16 %v909
        %v1778 = vunpack.c.h.s8.bf16 %v910
        %v1779 = vunpack.c.l.s8.bf16 %v911
        %v1780 = vunpack.c.l.s8.bf16 %v912
        %v1781 = vunpack.c.h.s8.bf16 %v911
        %v1782 = vunpack.c.h.s8.bf16 %v912
        %v1783 = vunpack.c.l.s8.bf16 %v913
        %v1784 = vunpack.c.l.s8.bf16 %v914
        %v1785 = vunpack.c.h.s8.bf16 %v913
        %v1786 = vunpack.c.h.s8.bf16 %v914
        %v1787 = vunpack.c.l.s8.bf16 %v915
        %v1788 = vunpack.c.l.s8.bf16 %v916
        %v1789 = vunpack.c.h.s8.bf16 %v915
        %v1790 = vunpack.c.h.s8.bf16 %v916
        %v1791 = vunpack.c.l.s8.bf16 %v917
        %v1792 = vunpack.c.l.s8.bf16 %v918
        %v1793 = vunpack.c.h.s8.bf16 %v917
        %v1794 = vunpack.c.h.s8.bf16 %v918
        %v1795 = vunpack.c.l.s8.bf16 %v919
        %v1796 = vunpack.c.l.s8.bf16 %v920
        %v1797 = vunpack.c.h.s8.bf16 %v919
        %v1798 = vunpack.c.h.s8.bf16 %v920
        %v1799 = vunpack.c.l.s8.bf16 %v921
        %v1800 = vunpack.c.l.s8.bf16 %v922
        %v1801 = vunpack.c.h.s8.bf16 %v921
        %v1802 = vunpack.c.h.s8.bf16 %v922
        %v1803 = vunpack.c.l.s8.bf16 %v923
        %v1804 = vunpack.c.l.s8.bf16 %v924
        %v1805 = vunpack.c.h.s8.bf16 %v923
        %v1806 = vunpack.c.h.s8.bf16 %v924
        %v1807 = vunpack.c.l.s8.bf16 %v925
        %v1808 = vunpack.c.l.s8.bf16 %v926
        %v1809 = vunpack.c.h.s8.bf16 %v925
        %v1810 = vunpack.c.h.s8.bf16 %v926
        %v1811 = vunpack.c.l.s8.bf16 %v927
        %v1812 = vunpack.c.l.s8.bf16 %v928
        %v1813 = vunpack.c.h.s8.bf16 %v927
        %v1814 = vunpack.c.h.s8.bf16 %v928
        %v1815 = vunpack.c.l.s8.bf16 %v929
        %v1816 = vunpack.c.l.s8.bf16 %v930
        %v1817 = vunpack.c.h.s8.bf16 %v929
        %v1818 = vunpack.c.h.s8.bf16 %v930
        %v1819 = vunpack.c.l.s8.bf16 %v931
        %v1820 = vunpack.c.l.s8.bf16 %v932
        %v1821 = vunpack.c.h.s8.bf16 %v931
        %v1822 = vunpack.c.h.s8.bf16 %v932
        %v1823 = vunpack.c.l.s8.bf16 %v933
        %v1824 = vunpack.c.l.s8.bf16 %v934
        %v1825 = vunpack.c.h.s8.bf16 %v933
        %v1826 = vunpack.c.h.s8.bf16 %v934
        %v1827 = vunpack.c.l.s8.bf16 %v935
        %v1828 = vunpack.c.l.s8.bf16 %v936
        %v1829 = vunpack.c.h.s8.bf16 %v935
        %v1830 = vunpack.c.h.s8.bf16 %v936
        %v1831 = vunpack.c.l.s8.bf16 %v937
        %v1832 = vunpack.c.l.s8.bf16 %v938
        %v1833 = vunpack.c.h.s8.bf16 %v937
        %v1834 = vunpack.c.h.s8.bf16 %v938
        %v1835 = vunpack.c.l.s8.bf16 %v939
        %v1836 = vunpack.c.l.s8.bf16 %v940
        %v1837 = vunpack.c.h.s8.bf16 %v939
        %v1838 = vunpack.c.h.s8.bf16 %v940
        %v1839 = vunpack.c.l.s8.bf16 %v941
        %v1840 = vunpack.c.l.s8.bf16 %v942
        %v1841 = vunpack.c.h.s8.bf16 %v941
        %v1842 = vunpack.c.h.s8.bf16 %v942
        %v1843 = vunpack.c.l.s8.bf16 %v943
        %v1844 = vunpack.c.l.s8.bf16 %v944
        %v1845 = vunpack.c.h.s8.bf16 %v943
        %v1846 = vunpack.c.h.s8.bf16 %v944
        %v1847 = vunpack.c.l.s8.bf16 %v945
        %v1848 = vunpack.c.l.s8.bf16 %v946
        %v1849 = vunpack.c.h.s8.bf16 %v945
        %v1850 = vunpack.c.h.s8.bf16 %v946
        %v1851 = vunpack.c.l.s8.bf16 %v947
        %v1852 = vunpack.c.l.s8.bf16 %v948
        %v1853 = vunpack.c.h.s8.bf16 %v947
        %v1854 = vunpack.c.h.s8.bf16 %v948
        %v1855 = vunpack.c.l.s8.bf16 %v949
        %v1856 = vunpack.c.l.s8.bf16 %v950
        %v1857 = vunpack.c.h.s8.bf16 %v949
        %v1858 = vunpack.c.h.s8.bf16 %v950
        %v1859 = vunpack.c.l.s8.bf16 %v951
        %v1860 = vunpack.c.l.s8.bf16 %v952
        %v1861 = vunpack.c.h.s8.bf16 %v951
        %v1862 = vunpack.c.h.s8.bf16 %v952
        %v1863 = vunpack.c.l.s8.bf16 %v953
        %v1864 = vunpack.c.l.s8.bf16 %v954
        %v1865 = vunpack.c.h.s8.bf16 %v953
        %v1866 = vunpack.c.h.s8.bf16 %v954
        %v1867 = vunpack.c.l.s8.bf16 %v955
        %v1868 = vunpack.c.l.s8.bf16 %v956
        %v1869 = vunpack.c.h.s8.bf16 %v955
        %v1870 = vunpack.c.h.s8.bf16 %v956
        %v1871 = vunpack.c.l.s8.bf16 %v957
        %v1872 = vunpack.c.l.s8.bf16 %v958
        %v1873 = vunpack.c.h.s8.bf16 %v957
        %v1874 = vunpack.c.h.s8.bf16 %v958
        %v1875 = vunpack.c.l.s8.bf16 %v959
        %v1876 = vunpack.c.l.s8.bf16 %v960
        %v1877 = vunpack.c.h.s8.bf16 %v959
        %v1878 = vunpack.c.h.s8.bf16 %v960
        %v1879 = vunpack.c.l.s8.bf16 %v961
        %v1880 = vunpack.c.l.s8.bf16 %v962
        %v1881 = vunpack.c.h.s8.bf16 %v961
        %v1882 = vunpack.c.h.s8.bf16 %v962
        %v1883 = vunpack.c.l.s8.bf16 %v963
        %v1884 = vunpack.c.l.s8.bf16 %v964
        %v1885 = vunpack.c.h.s8.bf16 %v963
        %v1886 = vunpack.c.h.s8.bf16 %v964
        %v1887 = vunpack.c.l.s8.bf16 %v965
        %v1888 = vunpack.c.l.s8.bf16 %v966
        %v1889 = vunpack.c.h.s8.bf16 %v965
        %v1890 = vunpack.c.h.s8.bf16 %v966
        %v1891 = vunpack.c.l.s8.bf16 %v967
        %v1892 = vunpack.c.l.s8.bf16 %v968
        %v1893 = vunpack.c.h.s8.bf16 %v967
        %v1894 = vunpack.c.h.s8.bf16 %v968
        %v1895 = vunpack.c.l.s8.bf16 %v969
        %v1896 = vunpack.c.l.s8.bf16 %v970
        %v1897 = vunpack.c.h.s8.bf16 %v969
        %v1898 = vunpack.c.h.s8.bf16 %v970
        %v1899 = vunpack.c.l.s8.bf16 %v971
        %v1900 = vunpack.c.l.s8.bf16 %v972
        %v1901 = vunpack.c.h.s8.bf16 %v971
        %v1902 = vunpack.c.h.s8.bf16 %v972
        %v1903 = vunpack.c.l.s8.bf16 %v973
        %v1904 = vunpack.c.l.s8.bf16 %v974
        %v1905 = vunpack.c.h.s8.bf16 %v973
        %v1906 = vunpack.c.h.s8.bf16 %v974
        %v1907 = vunpack.c.l.s8.bf16 %v975
        %v1908 = vunpack.c.l.s8.bf16 %v976
        %v1909 = vunpack.c.h.s8.bf16 %v975
        %v1910 = vunpack.c.h.s8.bf16 %v976
        %v1911 = vunpack.c.l.s8.bf16 %v977
        %v1912 = vunpack.c.l.s8.bf16 %v978
        %v1913 = vunpack.c.h.s8.bf16 %v977
        %v1914 = vunpack.c.h.s8.bf16 %v978
        %v1915 = vunpack.c.l.s8.bf16 %v979
        %v1916 = vunpack.c.l.s8.bf16 %v980
        %v1917 = vunpack.c.h.s8.bf16 %v979
        %v1918 = vunpack.c.h.s8.bf16 %v980
        %v1919 = vunpack.c.l.s8.bf16 %v981
        %v1920 = vunpack.c.l.s8.bf16 %v982
        %v1921 = vunpack.c.h.s8.bf16 %v981
        %v1922 = vunpack.c.h.s8.bf16 %v982
        %v1923 = vunpack.c.l.s8.bf16 %v983
        %v1924 = vunpack.c.l.s8.bf16 %v984
        %v1925 = vunpack.c.h.s8.bf16 %v983
        %v1926 = vunpack.c.h.s8.bf16 %v984
        %v1927 = vunpack.c.l.s8.bf16 %v985
        %v1928 = vunpack.c.l.s8.bf16 %v986
        %v1929 = vunpack.c.h.s8.bf16 %v985
        %v1930 = vunpack.c.h.s8.bf16 %v986
        %v1931 = vunpack.c.l.s8.bf16 %v987
        %v1932 = vunpack.c.l.s8.bf16 %v988
        %v1933 = vunpack.c.h.s8.bf16 %v987
        %v1934 = vunpack.c.h.s8.bf16 %v988
        %v1935 = vunpack.c.l.s8.bf16 %v989
        %v1936 = vunpack.c.l.s8.bf16 %v990
        %v1937 = vunpack.c.h.s8.bf16 %v989
        %v1938 = vunpack.c.h.s8.bf16 %v990
        %v1939 = vunpack.c.l.s8.bf16 %v991
        %v1940 = vunpack.c.l.s8.bf16 %v992
        %v1941 = vunpack.c.h.s8.bf16 %v991
        %v1942 = vunpack.c.h.s8.bf16 %v992
        %v1943 = vunpack.c.l.s8.bf16 %v993
        %v1944 = vunpack.c.l.s8.bf16 %v994
        %v1945 = vunpack.c.h.s8.bf16 %v993
        %v1946 = vunpack.c.h.s8.bf16 %v994
        %v1947 = vunpack.c.l.s8.bf16 %v995
        %v1948 = vunpack.c.l.s8.bf16 %v996
        %v1949 = vunpack.c.h.s8.bf16 %v995
        %v1950 = vunpack.c.h.s8.bf16 %v996
        %v1951 = vunpack.c.l.s8.bf16 %v997
        %v1952 = vunpack.c.l.s8.bf16 %v998
        %v1953 = vunpack.c.h.s8.bf16 %v997
        %v1954 = vunpack.c.h.s8.bf16 %v998
        %v1955 = vunpack.c.l.s8.bf16 %v999
        %v1956 = vunpack.c.l.s8.bf16 %v1000
        %v1957 = vunpack.c.h.s8.bf16 %v999
        %v1958 = vunpack.c.h.s8.bf16 %v1000
        %v1959 = vunpack.c.l.s8.bf16 %v1001
        %v1960 = vunpack.c.l.s8.bf16 %v1002
        %v1961 = vunpack.c.h.s8.bf16 %v1001
        %v1962 = vunpack.c.h.s8.bf16 %v1002
        %v1963 = vunpack.c.l.s8.bf16 %v1003
        %v1964 = vunpack.c.l.s8.bf16 %v1004
        %v1965 = vunpack.c.h.s8.bf16 %v1003
        %v1966 = vunpack.c.h.s8.bf16 %v1004
        %v1967 = vunpack.c.l.s8.bf16 %v1005
        %v1968 = vunpack.c.l.s8.bf16 %v1006
        %v1969 = vunpack.c.h.s8.bf16 %v1005
        %v1970 = vunpack.c.h.s8.bf16 %v1006
        %v1971 = vunpack.c.l.s8.bf16 %v1007
        %v1972 = vunpack.c.l.s8.bf16 %v1008
        %v1973 = vunpack.c.h.s8.bf16 %v1007
        %v1974 = vunpack.c.h.s8.bf16 %v1008
        %v1975 = vunpack.c.l.s8.bf16 %v1009
        %v1976 = vunpack.c.l.s8.bf16 %v1010
        %v1977 = vunpack.c.h.s8.bf16 %v1009
        %v1978 = vunpack.c.h.s8.bf16 %v1010
        %v1979 = vunpack.c.l.s8.bf16 %v1011
        %v1980 = vunpack.c.l.s8.bf16 %v1012
        %v1981 = vunpack.c.h.s8.bf16 %v1011
        %v1982 = vunpack.c.h.s8.bf16 %v1012
        %v1983 = vunpack.c.l.s8.bf16 %v1013
        %v1984 = vunpack.c.l.s8.bf16 %v1014
        %v1985 = vunpack.c.h.s8.bf16 %v1013
        %v1986 = vunpack.c.h.s8.bf16 %v1014
        %v1987 = vunpack.c.l.s8.bf16 %v1015
        %v1988 = vunpack.c.l.s8.bf16 %v1016
        %v1989 = vunpack.c.h.s8.bf16 %v1015
        %v1990 = vunpack.c.h.s8.bf16 %v1016
        %v1991 = vunpack.c.l.s8.bf16 %v1017
        %v1992 = vunpack.c.l.s8.bf16 %v1018
        %v1993 = vunpack.c.h.s8.bf16 %v1017
        %v1994 = vunpack.c.h.s8.bf16 %v1018
        %v1995 = vunpack.c.l.s8.bf16 %v1019
        %v1996 = vunpack.c.l.s8.bf16 %v1020
        %v1997 = vunpack.c.h.s8.bf16 %v1019
        %v1998 = vunpack.c.h.s8.bf16 %v1020
        %v1999 = vunpack.c.l.s8.bf16 %v1021
        %v2000 = vunpack.c.l.s8.bf16 %v1022
        %v2001 = vunpack.c.h.s8.bf16 %v1021
        %v2002 = vunpack.c.h.s8.bf16 %v1022
        %v2003 = vunpack.c.l.s8.bf16 %v1023
        %v2004 = vunpack.c.l.s8.bf16 %v1024
        %v2005 = vunpack.c.h.s8.bf16 %v1023
        %v2006 = vunpack.c.h.s8.bf16 %v1024
        %v2007 = vunpack.c.l.s8.bf16 %v1025
        %v2008 = vunpack.c.l.s8.bf16 %v1026
        %v2009 = vunpack.c.h.s8.bf16 %v1025
        %v2010 = vunpack.c.h.s8.bf16 %v1026
        %v2011 = vunpack.c.l.s8.bf16 %v1027
        %v2012 = vunpack.c.l.s8.bf16 %v1028
        %v2013 = vunpack.c.h.s8.bf16 %v1027
        %v2014 = vunpack.c.h.s8.bf16 %v1028
        %v2015 = vunpack.c.l.s8.bf16 %v1029
        %v2016 = vunpack.c.l.s8.bf16 %v1030
        %v2017 = vunpack.c.h.s8.bf16 %v1029
        %v2018 = vunpack.c.h.s8.bf16 %v1030
        %v2019 = vunpack.c.l.s8.bf16 %v1031
        %v2020 = vunpack.c.l.s8.bf16 %v1032
        %v2021 = vunpack.c.h.s8.bf16 %v1031
        %v2022 = vunpack.c.h.s8.bf16 %v1032
        %v2023 = vunpack.c.l.s8.bf16 %v1033
        %v2024 = vunpack.c.l.s8.bf16 %v1034
        %v2025 = vunpack.c.h.s8.bf16 %v1033
        %v2026 = vunpack.c.h.s8.bf16 %v1034
        %v2027 = vunpack.c.l.s8.bf16 %v1035
        %v2028 = vunpack.c.l.s8.bf16 %v1036
        %v2029 = vunpack.c.h.s8.bf16 %v1035
        %v2030 = vunpack.c.h.s8.bf16 %v1036
        %v2031 = vunpack.c.l.s8.bf16 %v1037
        %v2032 = vunpack.c.l.s8.bf16 %v1038
        %v2033 = vunpack.c.h.s8.bf16 %v1037
        %v2034 = vunpack.c.h.s8.bf16 %v1038
        %v2035 = vunpack.c.l.s8.bf16 %v1039
        %v2036 = vunpack.c.l.s8.bf16 %v1040
        %v2037 = vunpack.c.h.s8.bf16 %v1039
        %v2038 = vunpack.c.h.s8.bf16 %v1040
        %v2039 = vunpack.c.l.s8.bf16 %v1041
        %v2040 = vunpack.c.l.s8.bf16 %v1042
        %v2041 = vunpack.c.h.s8.bf16 %v1041
        %v2042 = vunpack.c.h.s8.bf16 %v1042
        %v2043 = vunpack.c.l.s8.bf16 %v1043
        %v2044 = vunpack.c.l.s8.bf16 %v1044
        %v2045 = vunpack.c.h.s8.bf16 %v1043
        %v2046 = vunpack.c.h.s8.bf16 %v1044
        %v2047 = vunpack.c.l.s8.bf16 %v1045
        %v2048 = vunpack.c.l.s8.bf16 %v1046
        %v2049 = vunpack.c.h.s8.bf16 %v1045
        %v2050 = vunpack.c.h.s8.bf16 %v1046
        %v2051 = vunpack.c.l.s8.bf16 %v1047
        %v2052 = vunpack.c.l.s8.bf16 %v1048
        %v2053 = vunpack.c.h.s8.bf16 %v1047
        %v2054 = vunpack.c.h.s8.bf16 %v1048
        %v2055 = vunpack.c.l.s8.bf16 %v1049
        %v2056 = vunpack.c.l.s8.bf16 %v1050
        %v2057 = vunpack.c.h.s8.bf16 %v1049
        %v2058 = vunpack.c.h.s8.bf16 %v1050
        %v2059 = vunpack.c.l.s8.bf16 %v1051
        %v2060 = vunpack.c.l.s8.bf16 %v1052
        %v2061 = vunpack.c.h.s8.bf16 %v1051
        %v2062 = vunpack.c.h.s8.bf16 %v1052
        %v2063 = vunpack.c.l.s8.bf16 %v1053
        %v2064 = vunpack.c.l.s8.bf16 %v1054
        %v2065 = vunpack.c.h.s8.bf16 %v1053
        %v2066 = vunpack.c.h.s8.bf16 %v1054
        %v2067 = vunpack.c.l.s8.bf16 %v1055
        %v2068 = vunpack.c.l.s8.bf16 %v1056
        %v2069 = vunpack.c.h.s8.bf16 %v1055
        %v2070 = vunpack.c.h.s8.bf16 %v1056
        %v2071 = vunpack.c.l.s8.bf16 %v1057
        %v2072 = vunpack.c.l.s8.bf16 %v1058
        %v2073 = vunpack.c.h.s8.bf16 %v1057
        %v2074 = vunpack.c.h.s8.bf16 %v1058
        %v2075 = vunpack.c.l.s8.bf16 %v1059
        %v2076 = vunpack.c.l.s8.bf16 %v1060
        %v2077 = vunpack.c.h.s8.bf16 %v1059
        %v2078 = vunpack.c.h.s8.bf16 %v1060
        %v2079 = vunpack.c.l.s8.bf16 %v1061
        %v2080 = vunpack.c.l.s8.bf16 %v1062
        %v2081 = vunpack.c.h.s8.bf16 %v1061
        %v2082 = vunpack.c.h.s8.bf16 %v1062
        %v2083 = vunpack.c.l.s8.bf16 %v1063
        %v2084 = vunpack.c.l.s8.bf16 %v1064
        %v2085 = vunpack.c.h.s8.bf16 %v1063
        %v2086 = vunpack.c.h.s8.bf16 %v1064
        %v2087 = vunpack.c.l.s8.bf16 %v1065
        %v2088 = vunpack.c.l.s8.bf16 %v1066
        %v2089 = vunpack.c.h.s8.bf16 %v1065
        %v2090 = vunpack.c.h.s8.bf16 %v1066
        %v2091 = vld [vmem:[#allocation2] sm:$0xf]
        %v2092 = vld [vmem:[#allocation6] sm:$0x3]
        %v2093 = vld [vmem:[%s397] sm:$0xff]
        %v2094 = vld [vmem:[%s397 + $0x8] sm:$0xff]
        %v2095 = vld [vmem:[%s397 + $0x10] sm:$0xff]
        %v2096 = vld [vmem:[%s397 + $0x18] sm:$0xff]
        %v2097 = vld [vmem:[%s397 + $0x20] sm:$0xff]
        %v2098 = vld [vmem:[%s397 + $0x28] sm:$0xff]
        %v2099 = vld [vmem:[%s397 + $0x30] sm:$0xff]
        %v2100 = vld [vmem:[%s397 + $0x38] sm:$0xff]
        %v2109 = vcombine.high %v2093, %v2093
        %v2111 = vunpack.c.l.s4 1966171168
        %v2112 = vunpack.c.0.s8 %v2111
        %v2113 = vlaneseq
        %v2114 = vshrl.u32 %v2113, 7
        %v2115 = vsub.s32 %v2112, %v2114
        %v2116 = vrot.slane %v2093, %v2115
        %v2118 = vunpack.c.l.s4 1966171168
        %v2119 = vunpack.c.0.s8 %v2118
        %v2120 = vlaneseq
        %v2121 = vshrl.u32 %v2120, 7
        %v2122 = vsub.s32 %v2119, %v2121
        %v2123 = vrot.slane %v2109, %v2122
        %v2124 = vcombine.high %v2116, %v2116
        %v2125 = vcombine.high %v2123, %v2123
        %v2127 = vunpack.c.l.s4 1966171168
        %v2128 = vunpack.c.0.s8 %v2127
        %v2129 = vlaneseq
        %v2130 = vshrl.u32 %v2129, 7
        %v2131 = vsub.s32 %v2128, %v2130
        %v2132 = vrot.slane %v2116, %v2131
        %v2134 = vunpack.c.l.s4 1966171168
        %v2135 = vunpack.c.0.s8 %v2134
        %v2136 = vlaneseq
        %v2137 = vshrl.u32 %v2136, 7
        %v2138 = vsub.s32 %v2135, %v2137
        %v2139 = vrot.slane %v2123, %v2138
        %v2141 = vunpack.c.l.s4 1966171168
        %v2142 = vunpack.c.0.s8 %v2141
        %v2143 = vlaneseq
        %v2144 = vshrl.u32 %v2143, 7
        %v2145 = vsub.s32 %v2142, %v2144
        %v2146 = vrot.slane %v2124, %v2145
        %v2148 = vunpack.c.l.s4 1966171168
        %v2149 = vunpack.c.0.s8 %v2148
        %v2150 = vlaneseq
        %v2151 = vshrl.u32 %v2150, 7
        %v2152 = vsub.s32 %v2149, %v2151
        %v2153 = vrot.slane %v2125, %v2152
        %v2154 = vcombine.high %v2132, %v2132
        %v2155 = vcombine.high %v2139, %v2139
        %v2156 = vcombine.high %v2146, %v2146
        %v2157 = vcombine.high %v2153, %v2153
        %v2158 = vcombine.high %v2094, %v2094
        %v2160 = vunpack.c.l.s4 1966171168
        %v2161 = vunpack.c.0.s8 %v2160
        %v2162 = vlaneseq
        %v2163 = vshrl.u32 %v2162, 7
        %v2164 = vsub.s32 %v2161, %v2163
        %v2165 = vrot.slane %v2094, %v2164
        %v2167 = vunpack.c.l.s4 1966171168
        %v2168 = vunpack.c.0.s8 %v2167
        %v2169 = vlaneseq
        %v2170 = vshrl.u32 %v2169, 7
        %v2171 = vsub.s32 %v2168, %v2170
        %v2172 = vrot.slane %v2158, %v2171
        %v2173 = vcombine.high %v2165, %v2165
        %v2174 = vcombine.high %v2172, %v2172
        %v2176 = vunpack.c.l.s4 1966171168
        %v2177 = vunpack.c.0.s8 %v2176
        %v2178 = vlaneseq
        %v2179 = vshrl.u32 %v2178, 7
        %v2180 = vsub.s32 %v2177, %v2179
        %v2181 = vrot.slane %v2165, %v2180
        %v2183 = vunpack.c.l.s4 1966171168
        %v2184 = vunpack.c.0.s8 %v2183
        %v2185 = vlaneseq
        %v2186 = vshrl.u32 %v2185, 7
        %v2187 = vsub.s32 %v2184, %v2186
        %v2188 = vrot.slane %v2172, %v2187
        %v2190 = vunpack.c.l.s4 1966171168
        %v2191 = vunpack.c.0.s8 %v2190
        %v2192 = vlaneseq
        %v2193 = vshrl.u32 %v2192, 7
        %v2194 = vsub.s32 %v2191, %v2193
        %v2195 = vrot.slane %v2173, %v2194
        %v2197 = vunpack.c.l.s4 1966171168
        %v2198 = vunpack.c.0.s8 %v2197
        %v2199 = vlaneseq
        %v2200 = vshrl.u32 %v2199, 7
        %v2201 = vsub.s32 %v2198, %v2200
        %v2202 = vrot.slane %v2174, %v2201
        %v2203 = vcombine.high %v2181, %v2181
        %v2204 = vcombine.high %v2188, %v2188
        %v2205 = vcombine.high %v2195, %v2195
        %v2206 = vcombine.high %v2202, %v2202
        %v2207 = vcombine.high %v2095, %v2095
        %v2209 = vunpack.c.l.s4 1966171168
        %v2210 = vunpack.c.0.s8 %v2209
        %v2211 = vlaneseq
        %v2212 = vshrl.u32 %v2211, 7
        %v2213 = vsub.s32 %v2210, %v2212
        %v2214 = vrot.slane %v2095, %v2213
        %v2216 = vunpack.c.l.s4 1966171168
        %v2217 = vunpack.c.0.s8 %v2216
        %v2218 = vlaneseq
        %v2219 = vshrl.u32 %v2218, 7
        %v2220 = vsub.s32 %v2217, %v2219
        %v2221 = vrot.slane %v2207, %v2220
        %v2222 = vcombine.high %v2214, %v2214
        %v2223 = vcombine.high %v2221, %v2221
        %v2225 = vunpack.c.l.s4 1966171168
        %v2226 = vunpack.c.0.s8 %v2225
        %v2227 = vlaneseq
        %v2228 = vshrl.u32 %v2227, 7
        %v2229 = vsub.s32 %v2226, %v2228
        %v2230 = vrot.slane %v2214, %v2229
        %v2232 = vunpack.c.l.s4 1966171168
        %v2233 = vunpack.c.0.s8 %v2232
        %v2234 = vlaneseq
        %v2235 = vshrl.u32 %v2234, 7
        %v2236 = vsub.s32 %v2233, %v2235
        %v2237 = vrot.slane %v2221, %v2236
        %v2239 = vunpack.c.l.s4 1966171168
        %v2240 = vunpack.c.0.s8 %v2239
        %v2241 = vlaneseq
        %v2242 = vshrl.u32 %v2241, 7
        %v2243 = vsub.s32 %v2240, %v2242
        %v2244 = vrot.slane %v2222, %v2243
        %v2246 = vunpack.c.l.s4 1966171168
        %v2247 = vunpack.c.0.s8 %v2246
        %v2248 = vlaneseq
        %v2249 = vshrl.u32 %v2248, 7
        %v2250 = vsub.s32 %v2247, %v2249
        %v2251 = vrot.slane %v2223, %v2250
        %v2252 = vcombine.high %v2230, %v2230
        %v2253 = vcombine.high %v2237, %v2237
        %v2254 = vcombine.high %v2244, %v2244
        %v2255 = vcombine.high %v2251, %v2251
        %v2256 = vcombine.high %v2096, %v2096
        %v2258 = vunpack.c.l.s4 1966171168
        %v2259 = vunpack.c.0.s8 %v2258
        %v2260 = vlaneseq
        %v2261 = vshrl.u32 %v2260, 7
        %v2262 = vsub.s32 %v2259, %v2261
        %v2263 = vrot.slane %v2096, %v2262
        %v2265 = vunpack.c.l.s4 1966171168
        %v2266 = vunpack.c.0.s8 %v2265
        %v2267 = vlaneseq
        %v2268 = vshrl.u32 %v2267, 7
        %v2269 = vsub.s32 %v2266, %v2268
        %v2270 = vrot.slane %v2256, %v2269
        %v2271 = vcombine.high %v2263, %v2263
        %v2272 = vcombine.high %v2270, %v2270
        %v2274 = vunpack.c.l.s4 1966171168
        %v2275 = vunpack.c.0.s8 %v2274
        %v2276 = vlaneseq
        %v2277 = vshrl.u32 %v2276, 7
        %v2278 = vsub.s32 %v2275, %v2277
        %v2279 = vrot.slane %v2263, %v2278
        %v2281 = vunpack.c.l.s4 1966171168
        %v2282 = vunpack.c.0.s8 %v2281
        %v2283 = vlaneseq
        %v2284 = vshrl.u32 %v2283, 7
        %v2285 = vsub.s32 %v2282, %v2284
        %v2286 = vrot.slane %v2270, %v2285
        %v2288 = vunpack.c.l.s4 1966171168
        %v2289 = vunpack.c.0.s8 %v2288
        %v2290 = vlaneseq
        %v2291 = vshrl.u32 %v2290, 7
        %v2292 = vsub.s32 %v2289, %v2291
        %v2293 = vrot.slane %v2271, %v2292
        %v2295 = vunpack.c.l.s4 1966171168
        %v2296 = vunpack.c.0.s8 %v2295
        %v2297 = vlaneseq
        %v2298 = vshrl.u32 %v2297, 7
        %v2299 = vsub.s32 %v2296, %v2298
        %v2300 = vrot.slane %v2272, %v2299
        %v2301 = vcombine.high %v2279, %v2279
        %v2302 = vcombine.high %v2286, %v2286
        %v2303 = vcombine.high %v2293, %v2293
        %v2304 = vcombine.high %v2300, %v2300
        %v2305 = vcombine.high %v2097, %v2097
        %v2307 = vunpack.c.l.s4 1966171168
        %v2308 = vunpack.c.0.s8 %v2307
        %v2309 = vlaneseq
        %v2310 = vshrl.u32 %v2309, 7
        %v2311 = vsub.s32 %v2308, %v2310
        %v2312 = vrot.slane %v2097, %v2311
        %v2314 = vunpack.c.l.s4 1966171168
        %v2315 = vunpack.c.0.s8 %v2314
        %v2316 = vlaneseq
        %v2317 = vshrl.u32 %v2316, 7
        %v2318 = vsub.s32 %v2315, %v2317
        %v2319 = vrot.slane %v2305, %v2318
        %v2320 = vcombine.high %v2312, %v2312
        %v2321 = vcombine.high %v2319, %v2319
        %v2323 = vunpack.c.l.s4 1966171168
        %v2324 = vunpack.c.0.s8 %v2323
        %v2325 = vlaneseq
        %v2326 = vshrl.u32 %v2325, 7
        %v2327 = vsub.s32 %v2324, %v2326
        %v2328 = vrot.slane %v2312, %v2327
        %v2330 = vunpack.c.l.s4 1966171168
        %v2331 = vunpack.c.0.s8 %v2330
        %v2332 = vlaneseq
        %v2333 = vshrl.u32 %v2332, 7
        %v2334 = vsub.s32 %v2331, %v2333
        %v2335 = vrot.slane %v2319, %v2334
        %v2337 = vunpack.c.l.s4 1966171168
        %v2338 = vunpack.c.0.s8 %v2337
        %v2339 = vlaneseq
        %v2340 = vshrl.u32 %v2339, 7
        %v2341 = vsub.s32 %v2338, %v2340
        %v2342 = vrot.slane %v2320, %v2341
        %v2344 = vunpack.c.l.s4 1966171168
        %v2345 = vunpack.c.0.s8 %v2344
        %v2346 = vlaneseq
        %v2347 = vshrl.u32 %v2346, 7
        %v2348 = vsub.s32 %v2345, %v2347
        %v2349 = vrot.slane %v2321, %v2348
        %v2350 = vcombine.high %v2328, %v2328
        %v2351 = vcombine.high %v2335, %v2335
        %v2352 = vcombine.high %v2342, %v2342
        %v2353 = vcombine.high %v2349, %v2349
        %v2354 = vcombine.high %v2098, %v2098
        %v2356 = vunpack.c.l.s4 1966171168
        %v2357 = vunpack.c.0.s8 %v2356
        %v2358 = vlaneseq
        %v2359 = vshrl.u32 %v2358, 7
        %v2360 = vsub.s32 %v2357, %v2359
        %v2361 = vrot.slane %v2098, %v2360
        %v2363 = vunpack.c.l.s4 1966171168
        %v2364 = vunpack.c.0.s8 %v2363
        %v2365 = vlaneseq
        %v2366 = vshrl.u32 %v2365, 7
        %v2367 = vsub.s32 %v2364, %v2366
        %v2368 = vrot.slane %v2354, %v2367
        %v2369 = vcombine.high %v2361, %v2361
        %v2370 = vcombine.high %v2368, %v2368
        %v2372 = vunpack.c.l.s4 1966171168
        %v2373 = vunpack.c.0.s8 %v2372
        %v2374 = vlaneseq
        %v2375 = vshrl.u32 %v2374, 7
        %v2376 = vsub.s32 %v2373, %v2375
        %v2377 = vrot.slane %v2361, %v2376
        %v2379 = vunpack.c.l.s4 1966171168
        %v2380 = vunpack.c.0.s8 %v2379
        %v2381 = vlaneseq
        %v2382 = vshrl.u32 %v2381, 7
        %v2383 = vsub.s32 %v2380, %v2382
        %v2384 = vrot.slane %v2368, %v2383
        %v2386 = vunpack.c.l.s4 1966171168
        %v2387 = vunpack.c.0.s8 %v2386
        %v2388 = vlaneseq
        %v2389 = vshrl.u32 %v2388, 7
        %v2390 = vsub.s32 %v2387, %v2389
        %v2391 = vrot.slane %v2369, %v2390
        %v2393 = vunpack.c.l.s4 1966171168
        %v2394 = vunpack.c.0.s8 %v2393
        %v2395 = vlaneseq
        %v2396 = vshrl.u32 %v2395, 7
        %v2397 = vsub.s32 %v2394, %v2396
        %v2398 = vrot.slane %v2370, %v2397
        %v2399 = vcombine.high %v2377, %v2377
        %v2400 = vcombine.high %v2384, %v2384
        %v2401 = vcombine.high %v2391, %v2391
        %v2402 = vcombine.high %v2398, %v2398
        %v2403 = vcombine.high %v2099, %v2099
        %v2405 = vunpack.c.l.s4 1966171168
        %v2406 = vunpack.c.0.s8 %v2405
        %v2407 = vlaneseq
        %v2408 = vshrl.u32 %v2407, 7
        %v2409 = vsub.s32 %v2406, %v2408
        %v2410 = vrot.slane %v2099, %v2409
        %v2412 = vunpack.c.l.s4 1966171168
        %v2413 = vunpack.c.0.s8 %v2412
        %v2414 = vlaneseq
        %v2415 = vshrl.u32 %v2414, 7
        %v2416 = vsub.s32 %v2413, %v2415
        %v2417 = vrot.slane %v2403, %v2416
        %v2418 = vcombine.high %v2410, %v2410
        %v2419 = vcombine.high %v2417, %v2417
        %v2421 = vunpack.c.l.s4 1966171168
        %v2422 = vunpack.c.0.s8 %v2421
        %v2423 = vlaneseq
        %v2424 = vshrl.u32 %v2423, 7
        %v2425 = vsub.s32 %v2422, %v2424
        %v2426 = vrot.slane %v2410, %v2425
        %v2428 = vunpack.c.l.s4 1966171168
        %v2429 = vunpack.c.0.s8 %v2428
        %v2430 = vlaneseq
        %v2431 = vshrl.u32 %v2430, 7
        %v2432 = vsub.s32 %v2429, %v2431
        %v2433 = vrot.slane %v2417, %v2432
        %v2435 = vunpack.c.l.s4 1966171168
        %v2436 = vunpack.c.0.s8 %v2435
        %v2437 = vlaneseq
        %v2438 = vshrl.u32 %v2437, 7
        %v2439 = vsub.s32 %v2436, %v2438
        %v2440 = vrot.slane %v2418, %v2439
        %v2442 = vunpack.c.l.s4 1966171168
        %v2443 = vunpack.c.0.s8 %v2442
        %v2444 = vlaneseq
        %v2445 = vshrl.u32 %v2444, 7
        %v2446 = vsub.s32 %v2443, %v2445
        %v2447 = vrot.slane %v2419, %v2446
        %v2448 = vcombine.high %v2426, %v2426
        %v2449 = vcombine.high %v2433, %v2433
        %v2450 = vcombine.high %v2440, %v2440
        %v2451 = vcombine.high %v2447, %v2447
        %v2452 = vcombine.high %v2100, %v2100
        %v2454 = vunpack.c.l.s4 1966171168
        %v2455 = vunpack.c.0.s8 %v2454
        %v2456 = vlaneseq
        %v2457 = vshrl.u32 %v2456, 7
        %v2458 = vsub.s32 %v2455, %v2457
        %v2459 = vrot.slane %v2100, %v2458
        %v2461 = vunpack.c.l.s4 1966171168
        %v2462 = vunpack.c.0.s8 %v2461
        %v2463 = vlaneseq
        %v2464 = vshrl.u32 %v2463, 7
        %v2465 = vsub.s32 %v2462, %v2464
        %v2466 = vrot.slane %v2452, %v2465
        %v2467 = vcombine.high %v2459, %v2459
        %v2468 = vcombine.high %v2466, %v2466
        %v2470 = vunpack.c.l.s4 1966171168
        %v2471 = vunpack.c.0.s8 %v2470
        %v2472 = vlaneseq
        %v2473 = vshrl.u32 %v2472, 7
        %v2474 = vsub.s32 %v2471, %v2473
        %v2475 = vrot.slane %v2459, %v2474
        %v2477 = vunpack.c.l.s4 1966171168
        %v2478 = vunpack.c.0.s8 %v2477
        %v2479 = vlaneseq
        %v2480 = vshrl.u32 %v2479, 7
        %v2481 = vsub.s32 %v2478, %v2480
        %v2482 = vrot.slane %v2466, %v2481
        %v2484 = vunpack.c.l.s4 1966171168
        %v2485 = vunpack.c.0.s8 %v2484
        %v2486 = vlaneseq
        %v2487 = vshrl.u32 %v2486, 7
        %v2488 = vsub.s32 %v2485, %v2487
        %v2489 = vrot.slane %v2467, %v2488
        %v2491 = vunpack.c.l.s4 1966171168
        %v2492 = vunpack.c.0.s8 %v2491
        %v2493 = vlaneseq
        %v2494 = vshrl.u32 %v2493, 7
        %v2495 = vsub.s32 %v2492, %v2494
        %v2496 = vrot.slane %v2468, %v2495
        %v2497 = vcombine.high %v2475, %v2475
        %v2498 = vcombine.high %v2482, %v2482
        %v2499 = vcombine.high %v2489, %v2489
        %v2500 = vcombine.high %v2496, %v2496
        %2565 = vmatprep.subr.bf16.mxu0 %v1068
        %2566 = vmatpush1.bf16.msra.mxu0 %v1067
        %2567 = vmatprep.subr.bf16.mxu0 %v1070
        %2568 = vmatpush1.bf16.msra.mxu0 %v1069
        %2569 = vmatprep.subr.bf16.mxu0 %v1072
        %2570 = vmatpush1.bf16.msra.mxu0 %v1071
        %2571 = vmatprep.subr.bf16.mxu0 %v1074
        %2572 = vmatpush1.bf16.msra.mxu0 %v1073
        %2573 = vmatprep.subr.bf16.mxu0 %v1076
        %2574 = vmatpush1.bf16.msra.mxu0 %v1075
        %2575 = vmatprep.subr.bf16.mxu0 %v1078
        %2576 = vmatpush1.bf16.msra.mxu0 %v1077
        %2577 = vmatprep.subr.bf16.mxu0 %v1080
        %2578 = vmatpush1.bf16.msra.mxu0 %v1079
        %2579 = vmatprep.subr.bf16.mxu0 %v1082
        %2580 = vmatpush1.bf16.msra.mxu0 %v1081
        %2581 = vmatprep.subr.bf16.mxu0 %v1084
        %2582 = vmatpush1.bf16.msra.mxu0 %v1083
        %2583 = vmatprep.subr.bf16.mxu0 %v1086
        %2584 = vmatpush1.bf16.msra.mxu0 %v1085
        %2585 = vmatprep.subr.bf16.mxu0 %v1088
        %2586 = vmatpush1.bf16.msra.mxu0 %v1087
        %2587 = vmatprep.subr.bf16.mxu0 %v1090
        %2588 = vmatpush1.bf16.msra.mxu0 %v1089
        %2589 = vmatprep.subr.bf16.mxu0 %v1092
        %2590 = vmatpush1.bf16.msra.mxu0 %v1091
        %2591 = vmatprep.subr.bf16.mxu0 %v1094
        %2592 = vmatpush1.bf16.msra.mxu0 %v1093
        %2593 = vmatprep.subr.bf16.mxu0 %v1096
        %2594 = vmatpush1.bf16.msra.mxu0 %v1095
        %2595 = vmatprep.subr.bf16.mxu0 %v1098
        %2596 = vmatpush1.bf16.msra.mxu0 %v1097
        %2597 = vmatprep.mubr.bf16.mxu0 %v2146
        %2598 = vmatmul.mubr.bf16.gmra.mrb[0].mxu0 %v2132
        %v2599 = vpop.f32.mrb[0].mxu0
        %v2600 = vadd.f32 0.0, %v2599
        %v2601 = vpop.f32.mrb[0].mxu0
        %v2602 = vadd.f32 0.0, %v2601
        %v2603 = vpop.f32.mrb[0].mxu0
        %v2604 = vpop.f32.mrb[0].mxu0
        %2605 = vdwg.mxu0
        %2606 = vmatprep.subr.bf16.mxu0 %v1100
        %2607 = vmatpush1.bf16.msra.mxu0 %v1099
        %2608 = vmatprep.subr.bf16.mxu0 %v1102
        %2609 = vmatpush1.bf16.msra.mxu0 %v1101
        %2610 = vmatprep.subr.bf16.mxu0 %v1104
        %2611 = vmatpush1.bf16.msra.mxu0 %v1103
        %2612 = vmatprep.subr.bf16.mxu0 %v1106
        %2613 = vmatpush1.bf16.msra.mxu0 %v1105
        %2614 = vmatprep.subr.bf16.mxu0 %v1108
        %2615 = vmatpush1.bf16.msra.mxu0 %v1107
        %2616 = vmatprep.subr.bf16.mxu0 %v1110
        %2617 = vmatpush1.bf16.msra.mxu0 %v1109
        %2618 = vmatprep.subr.bf16.mxu0 %v1112
        %2619 = vmatpush1.bf16.msra.mxu0 %v1111
        %2620 = vmatprep.subr.bf16.mxu0 %v1114
        %2621 = vmatpush1.bf16.msra.mxu0 %v1113
        %2622 = vmatprep.subr.bf16.mxu0 %v1116
        %2623 = vmatpush1.bf16.msra.mxu0 %v1115
        %2624 = vmatprep.subr.bf16.mxu0 %v1118
        %2625 = vmatpush1.bf16.msra.mxu0 %v1117
        %2626 = vmatprep.subr.bf16.mxu0 %v1120
        %2627 = vmatpush1.bf16.msra.mxu0 %v1119
        %2628 = vmatprep.subr.bf16.mxu0 %v1122
        %2629 = vmatpush1.bf16.msra.mxu0 %v1121
        %2630 = vmatprep.subr.bf16.mxu0 %v1124
        %2631 = vmatpush1.bf16.msra.mxu0 %v1123
        %2632 = vmatprep.subr.bf16.mxu0 %v1126
        %2633 = vmatpush1.bf16.msra.mxu0 %v1125
        %2634 = vmatprep.subr.bf16.mxu0 %v1128
        %2635 = vmatpush1.bf16.msra.mxu0 %v1127
        %2636 = vmatprep.subr.bf16.mxu0 %v1130
        %2637 = vmatpush1.bf16.msra.mxu0 %v1129
        %2638 = vmatprep.mubr.bf16.mxu0 %v2156
        %2639 = vmatmul.mubr.bf16.gmra.mrb[0].mxu0 %v2154
        %v2640 = vpop.f32.mrb[0].mxu0
        %v2641 = vadd.f32 %v2600, %v2640
        %v2642 = vpop.f32.mrb[0].mxu0
        %v2643 = vadd.f32 %v2602, %v2642
        %v2644 = vpop.f32.mrb[0].mxu0
        %v2645 = vpop.f32.mrb[0].mxu0
        %2646 = vdwg.mxu0
        %2647 = vmatprep.subr.bf16.mxu0 %v1132
        %2648 = vmatpush1.bf16.msra.mxu0 %v1131
        %2649 = vmatprep.subr.bf16.mxu0 %v1134
        %2650 = vmatpush1.bf16.msra.mxu0 %v1133
        %2651 = vmatprep.subr.bf16.mxu0 %v1136
        %2652 = vmatpush1.bf16.msra.mxu0 %v1135
        %2653 = vmatprep.subr.bf16.mxu0 %v1138
        %2654 = vmatpush1.bf16.msra.mxu0 %v1137
        %2655 = vmatprep.subr.bf16.mxu0 %v1140
        %2656 = vmatpush1.bf16.msra.mxu0 %v1139
        %2657 = vmatprep.subr.bf16.mxu0 %v1142
        %2658 = vmatpush1.bf16.msra.mxu0 %v1141
        %2659 = vmatprep.subr.bf16.mxu0 %v1144
        %2660 = vmatpush1.bf16.msra.mxu0 %v1143
        %2661 = vmatprep.subr.bf16.mxu0 %v1146
        %2662 = vmatpush1.bf16.msra.mxu0 %v1145
        %2663 = vmatprep.subr.bf16.mxu0 %v1148
        %2664 = vmatpush1.bf16.msra.mxu0 %v1147
        %2665 = vmatprep.subr.bf16.mxu0 %v1150
        %2666 = vmatpush1.bf16.msra.mxu0 %v1149
        %2667 = vmatprep.subr.bf16.mxu0 %v1152
        %2668 = vmatpush1.bf16.msra.mxu0 %v1151
        %2669 = vmatprep.subr.bf16.mxu0 %v1154
        %2670 = vmatpush1.bf16.msra.mxu0 %v1153
        %2671 = vmatprep.subr.bf16.mxu0 %v1156
        %2672 = vmatpush1.bf16.msra.mxu0 %v1155
        %2673 = vmatprep.subr.bf16.mxu0 %v1158
        %2674 = vmatpush1.bf16.msra.mxu0 %v1157
        %2675 = vmatprep.subr.bf16.mxu0 %v1160
        %2676 = vmatpush1.bf16.msra.mxu0 %v1159
        %2677 = vmatprep.subr.bf16.mxu0 %v1162
        %2678 = vmatpush1.bf16.msra.mxu0 %v1161
        %2679 = vmatprep.mubr.bf16.mxu0 %v2153
        %2680 = vmatmul.mubr.bf16.gmra.mrb[0].mxu0 %v2139
        %v2681 = vpop.f32.mrb[0].mxu0
        %v2682 = vadd.f32 %v2641, %v2681
        %v2683 = vpop.f32.mrb[0].mxu0
        %v2684 = vadd.f32 %v2643, %v2683
        %v2685 = vpop.f32.mrb[0].mxu0
        %v2686 = vpop.f32.mrb[0].mxu0
        %2687 = vdwg.mxu0
        %2688 = vmatprep.subr.bf16.mxu0 %v1164
        %2689 = vmatpush1.bf16.msra.mxu0 %v1163
        %2690 = vmatprep.subr.bf16.mxu0 %v1166
        %2691 = vmatpush1.bf16.msra.mxu0 %v1165
        %2692 = vmatprep.subr.bf16.mxu0 %v1168
        %2693 = vmatpush1.bf16.msra.mxu0 %v1167
        %2694 = vmatprep.subr.bf16.mxu0 %v1170
        %2695 = vmatpush1.bf16.msra.mxu0 %v1169
        %2696 = vmatprep.subr.bf16.mxu0 %v1172
        %2697 = vmatpush1.bf16.msra.mxu0 %v1171
        %2698 = vmatprep.subr.bf16.mxu0 %v1174
        %2699 = vmatpush1.bf16.msra.mxu0 %v1173
        %2700 = vmatprep.subr.bf16.mxu0 %v1176
        %2701 = vmatpush1.bf16.msra.mxu0 %v1175
        %2702 = vmatprep.subr.bf16.mxu0 %v1178
        %2703 = vmatpush1.bf16.msra.mxu0 %v1177
        %2704 = vmatprep.subr.bf16.mxu0 %v1180
        %2705 = vmatpush1.bf16.msra.mxu0 %v1179
        %2706 = vmatprep.subr.bf16.mxu0 %v1182
        %2707 = vmatpush1.bf16.msra.mxu0 %v1181
        %2708 = vmatprep.subr.bf16.mxu0 %v1184
        %2709 = vmatpush1.bf16.msra.mxu0 %v1183
        %2710 = vmatprep.subr.bf16.mxu0 %v1186
        %2711 = vmatpush1.bf16.msra.mxu0 %v1185
        %2712 = vmatprep.subr.bf16.mxu0 %v1188
        %2713 = vmatpush1.bf16.msra.mxu0 %v1187
        %2714 = vmatprep.subr.bf16.mxu0 %v1190
        %2715 = vmatpush1.bf16.msra.mxu0 %v1189
        %2716 = vmatprep.subr.bf16.mxu0 %v1192
        %2717 = vmatpush1.bf16.msra.mxu0 %v1191
        %2718 = vmatprep.subr.bf16.mxu0 %v1194
        %2719 = vmatpush1.bf16.msra.mxu0 %v1193
        %2720 = vmatprep.mubr.bf16.mxu0 %v2157
        %2721 = vmatmul.mubr.bf16.gmra.mrb[0].mxu0 %v2155
        %v2722 = vpop.f32.mrb[0].mxu0
        %v2723 = vadd.f32 %v2682, %v2722
        %v2724 = vpop.f32.mrb[0].mxu0
        %v2725 = vadd.f32 %v2684, %v2724
        %v2726 = vpop.f32.mrb[0].mxu0
        %v2727 = vpop.f32.mrb[0].mxu0
        %2728 = vdwg.mxu0
        %2729 = vmatprep.subr.bf16.mxu0 %v1196
        %2730 = vmatpush1.bf16.msra.mxu0 %v1195
        %2731 = vmatprep.subr.bf16.mxu0 %v1198
        %2732 = vmatpush1.bf16.msra.mxu0 %v1197
        %2733 = vmatprep.subr.bf16.mxu0 %v1200
        %2734 = vmatpush1.bf16.msra.mxu0 %v1199
        %2735 = vmatprep.subr.bf16.mxu0 %v1202
        %2736 = vmatpush1.bf16.msra.mxu0 %v1201
        %2737 = vmatprep.subr.bf16.mxu0 %v1204
        %2738 = vmatpush1.bf16.msra.mxu0 %v1203
        %2739 = vmatprep.subr.bf16.mxu0 %v1206
        %2740 = vmatpush1.bf16.msra.mxu0 %v1205
        %2741 = vmatprep.subr.bf16.mxu0 %v1208
        %2742 = vmatpush1.bf16.msra.mxu0 %v1207
        %2743 = vmatprep.subr.bf16.mxu0 %v1210
        %2744 = vmatpush1.bf16.msra.mxu0 %v1209
        %2745 = vmatprep.subr.bf16.mxu0 %v1212
        %2746 = vmatpush1.bf16.msra.mxu0 %v1211
        %2747 = vmatprep.subr.bf16.mxu0 %v1214
        %2748 = vmatpush1.bf16.msra.mxu0 %v1213
        %2749 = vmatprep.subr.bf16.mxu0 %v1216
        %2750 = vmatpush1.bf16.msra.mxu0 %v1215
        %2751 = vmatprep.subr.bf16.mxu0 %v1218
        %2752 = vmatpush1.bf16.msra.mxu0 %v1217
        %2753 = vmatprep.subr.bf16.mxu0 %v1220
        %2754 = vmatpush1.bf16.msra.mxu0 %v1219
        %2755 = vmatprep.subr.bf16.mxu0 %v1222
        %2756 = vmatpush1.bf16.msra.mxu0 %v1221
        %2757 = vmatprep.subr.bf16.mxu0 %v1224
        %2758 = vmatpush1.bf16.msra.mxu0 %v1223
        %2759 = vmatprep.subr.bf16.mxu0 %v1226
        %2760 = vmatpush1.bf16.msra.mxu0 %v1225
        %2761 = vmatprep.mubr.bf16.mxu0 %v2195
        %2762 = vmatmul.mubr.bf16.gmra.mrb[0].mxu0 %v2181
        %v2763 = vpop.f32.mrb[0].mxu0
        %v2764 = vadd.f32 %v2723, %v2763
        %v2765 = vpop.f32.mrb[0].mxu0
        %v2766 = vadd.f32 %v2725, %v2765
        %v2767 = vpop.f32.mrb[0].mxu0
        %v2768 = vpop.f32.mrb[0].mxu0
        %2769 = vdwg.mxu0
        %2770 = vmatprep.subr.bf16.mxu0 %v1228
        %2771 = vmatpush1.bf16.msra.mxu0 %v1227
        %2772 = vmatprep.subr.bf16.mxu0 %v1230
        %2773 = vmatpush1.bf16.msra.mxu0 %v1229
        %2774 = vmatprep.subr.bf16.mxu0 %v1232
        %2775 = vmatpush1.bf16.msra.mxu0 %v1231
        %2776 = vmatprep.subr.bf16.mxu0 %v1234
        %2777 = vmatpush1.bf16.msra.mxu0 %v1233
        %2778 = vmatprep.subr.bf16.mxu0 %v1236
        %2779 = vmatpush1.bf16.msra.mxu0 %v1235
        %2780 = vmatprep.subr.bf16.mxu0 %v1238
        %2781 = vmatpush1.bf16.msra.mxu0 %v1237
        %2782 = vmatprep.subr.bf16.mxu0 %v1240
        %2783 = vmatpush1.bf16.msra.mxu0 %v1239
        %2784 = vmatprep.subr.bf16.mxu0 %v1242
        %2785 = vmatpush1.bf16.msra.mxu0 %v1241
        %2786 = vmatprep.subr.bf16.mxu0 %v1244
        %2787 = vmatpush1.bf16.msra.mxu0 %v1243
        %2788 = vmatprep.subr.bf16.mxu0 %v1246
        %2789 = vmatpush1.bf16.msra.mxu0 %v1245
        %2790 = vmatprep.subr.bf16.mxu0 %v1248
        %2791 = vmatpush1.bf16.msra.mxu0 %v1247
        %2792 = vmatprep.subr.bf16.mxu0 %v1250
        %2793 = vmatpush1.bf16.msra.mxu0 %v1249
        %2794 = vmatprep.subr.bf16.mxu0 %v1252
        %2795 = vmatpush1.bf16.msra.mxu0 %v1251
        %2796 = vmatprep.subr.bf16.mxu0 %v1254
        %2797 = vmatpush1.bf16.msra.mxu0 %v1253
        %2798 = vmatprep.subr.bf16.mxu0 %v1256
        %2799 = vmatpush1.bf16.msra.mxu0 %v1255
        %2800 = vmatprep.subr.bf16.mxu0 %v1258
        %2801 = vmatpush1.bf16.msra.mxu0 %v1257
        %2802 = vmatprep.mubr.bf16.mxu0 %v2205
        %2803 = vmatmul.mubr.bf16.gmra.mrb[0].mxu0 %v2203
        %v2804 = vpop.f32.mrb[0].mxu0
        %v2805 = vadd.f32 %v2764, %v2804
        %v2806 = vpop.f32.mrb[0].mxu0
        %v2807 = vadd.f32 %v2766, %v2806
        %v2808 = vpop.f32.mrb[0].mxu0
        %v2809 = vpop.f32.mrb[0].mxu0
        %2810 = vdwg.mxu0
        %2811 = vmatprep.subr.bf16.mxu0 %v1260
        %2812 = vmatpush1.bf16.msra.mxu0 %v1259
        %2813 = vmatprep.subr.bf16.mxu0 %v1262
        %2814 = vmatpush1.bf16.msra.mxu0 %v1261
        %2815 = vmatprep.subr.bf16.mxu0 %v1264
        %2816 = vmatpush1.bf16.msra.mxu0 %v1263
        %2817 = vmatprep.subr.bf16.mxu0 %v1266
        %2818 = vmatpush1.bf16.msra.mxu0 %v1265
        %2819 = vmatprep.subr.bf16.mxu0 %v1268
        %2820 = vmatpush1.bf16.msra.mxu0 %v1267
        %2821 = vmatprep.subr.bf16.mxu0 %v1270
        %2822 = vmatpush1.bf16.msra.mxu0 %v1269
        %2823 = vmatprep.subr.bf16.mxu0 %v1272
        %2824 = vmatpush1.bf16.msra.mxu0 %v1271
        %2825 = vmatprep.subr.bf16.mxu0 %v1274
        %2826 = vmatpush1.bf16.msra.mxu0 %v1273
        %2827 = vmatprep.subr.bf16.mxu0 %v1276
        %2828 = vmatpush1.bf16.msra.mxu0 %v1275
        %2829 = vmatprep.subr.bf16.mxu0 %v1278
        %2830 = vmatpush1.bf16.msra.mxu0 %v1277
        %2831 = vmatprep.subr.bf16.mxu0 %v1280
        %2832 = vmatpush1.bf16.msra.mxu0 %v1279
        %2833 = vmatprep.subr.bf16.mxu0 %v1282
        %2834 = vmatpush1.bf16.msra.mxu0 %v1281
        %2835 = vmatprep.subr.bf16.mxu0 %v1284
        %2836 = vmatpush1.bf16.msra.mxu0 %v1283
        %2837 = vmatprep.subr.bf16.mxu0 %v1286
        %2838 = vmatpush1.bf16.msra.mxu0 %v1285
        %2839 = vmatprep.subr.bf16.mxu0 %v1288
        %2840 = vmatpush1.bf16.msra.mxu0 %v1287
        %2841 = vmatprep.subr.bf16.mxu0 %v1290
        %2842 = vmatpush1.bf16.msra.mxu0 %v1289
        %2843 = vmatprep.mubr.bf16.mxu0 %v2202
        %2844 = vmatmul.mubr.bf16.gmra.mrb[0].mxu0 %v2188
        %v2845 = vpop.f32.mrb[0].mxu0
        %v2846 = vadd.f32 %v2805, %v2845
        %v2847 = vpop.f32.mrb[0].mxu0
        %v2848 = vadd.f32 %v2807, %v2847
        %v2849 = vpop.f32.mrb[0].mxu0
        %v2850 = vpop.f32.mrb[0].mxu0
        %2851 = vdwg.mxu0
        %2852 = vmatprep.subr.bf16.mxu0 %v1292
        %2853 = vmatpush1.bf16.msra.mxu0 %v1291
        %2854 = vmatprep.subr.bf16.mxu0 %v1294
        %2855 = vmatpush1.bf16.msra.mxu0 %v1293
        %2856 = vmatprep.subr.bf16.mxu0 %v1296
        %2857 = vmatpush1.bf16.msra.mxu0 %v1295
        %2858 = vmatprep.subr.bf16.mxu0 %v1298
        %2859 = vmatpush1.bf16.msra.mxu0 %v1297
        %2860 = vmatprep.subr.bf16.mxu0 %v1300
        %2861 = vmatpush1.bf16.msra.mxu0 %v1299
        %2862 = vmatprep.subr.bf16.mxu0 %v1302
        %2863 = vmatpush1.bf16.msra.mxu0 %v1301
        %2864 = vmatprep.subr.bf16.mxu0 %v1304
        %2865 = vmatpush1.bf16.msra.mxu0 %v1303
        %2866 = vmatprep.subr.bf16.mxu0 %v1306
        %2867 = vmatpush1.bf16.msra.mxu0 %v1305
        %2868 = vmatprep.subr.bf16.mxu0 %v1308
        %2869 = vmatpush1.bf16.msra.mxu0 %v1307
        %2870 = vmatprep.subr.bf16.mxu0 %v1310
        %2871 = vmatpush1.bf16.msra.mxu0 %v1309
        %2872 = vmatprep.subr.bf16.mxu0 %v1312
        %2873 = vmatpush1.bf16.msra.mxu0 %v1311
        %2874 = vmatprep.subr.bf16.mxu0 %v1314
        %2875 = vmatpush1.bf16.msra.mxu0 %v1313
        %2876 = vmatprep.subr.bf16.mxu0 %v1316
        %2877 = vmatpush1.bf16.msra.mxu0 %v1315
        %2878 = vmatprep.subr.bf16.mxu0 %v1318
        %2879 = vmatpush1.bf16.msra.mxu0 %v1317
        %2880 = vmatprep.subr.bf16.mxu0 %v1320
        %2881 = vmatpush1.bf16.msra.mxu0 %v1319
        %2882 = vmatprep.subr.bf16.mxu0 %v1322
        %2883 = vmatpush1.bf16.msra.mxu0 %v1321
        %2884 = vmatprep.mubr.bf16.mxu0 %v2206
        %2885 = vmatmul.mubr.bf16.gmra.mrb[0].mxu0 %v2204
        %v2886 = vpop.f32.mrb[0].mxu0
        %v2887 = vadd.f32 %v2846, %v2886
        %v2888 = vpop.f32.mrb[0].mxu0
        %v2889 = vadd.f32 %v2848, %v2888
        %v2890 = vpop.f32.mrb[0].mxu0
        %v2891 = vpop.f32.mrb[0].mxu0
        %2892 = vdwg.mxu0
        %2893 = vmatprep.subr.bf16.mxu0 %v1324
        %2894 = vmatpush1.bf16.msra.mxu0 %v1323
        %2895 = vmatprep.subr.bf16.mxu0 %v1326
        %2896 = vmatpush1.bf16.msra.mxu0 %v1325
        %2897 = vmatprep.subr.bf16.mxu0 %v1328
        %2898 = vmatpush1.bf16.msra.mxu0 %v1327
        %2899 = vmatprep.subr.bf16.mxu0 %v1330
        %2900 = vmatpush1.bf16.msra.mxu0 %v1329
        %2901 = vmatprep.subr.bf16.mxu0 %v1332
        %2902 = vmatpush1.bf16.msra.mxu0 %v1331
        %2903 = vmatprep.subr.bf16.mxu0 %v1334
        %2904 = vmatpush1.bf16.msra.mxu0 %v1333
        %2905 = vmatprep.subr.bf16.mxu0 %v1336
        %2906 = vmatpush1.bf16.msra.mxu0 %v1335
        %2907 = vmatprep.subr.bf16.mxu0 %v1338
        %2908 = vmatpush1.bf16.msra.mxu0 %v1337
        %2909 = vmatprep.subr.bf16.mxu0 %v1340
        %2910 = vmatpush1.bf16.msra.mxu0 %v1339
        %2911 = vmatprep.subr.bf16.mxu0 %v1342
        %2912 = vmatpush1.bf16.msra.mxu0 %v1341
        %2913 = vmatprep.subr.bf16.mxu0 %v1344
        %2914 = vmatpush1.bf16.msra.mxu0 %v1343
        %2915 = vmatprep.subr.bf16.mxu0 %v1346
        %2916 = vmatpush1.bf16.msra.mxu0 %v1345
        %2917 = vmatprep.subr.bf16.mxu0 %v1348
        %2918 = vmatpush1.bf16.msra.mxu0 %v1347
        %2919 = vmatprep.subr.bf16.mxu0 %v1350
        %2920 = vmatpush1.bf16.msra.mxu0 %v1349
        %2921 = vmatprep.subr.bf16.mxu0 %v1352
        %2922 = vmatpush1.bf16.msra.mxu0 %v1351
        %2923 = vmatprep.subr.bf16.mxu0 %v1354
        %2924 = vmatpush1.bf16.msra.mxu0 %v1353
        %2925 = vmatprep.mubr.bf16.mxu0 %v2244
        %2926 = vmatmul.mubr.bf16.gmra.mrb[0].mxu0 %v2230
        %v2927 = vpop.f32.mrb[0].mxu0
        %v2928 = vadd.f32 %v2887, %v2927
        %v2929 = vpop.f32.mrb[0].mxu0
        %v2930 = vadd.f32 %v2889, %v2929
        %v2931 = vpop.f32.mrb[0].mxu0
        %v2932 = vpop.f32.mrb[0].mxu0
        %2933 = vdwg.mxu0
        %2934 = vmatprep.subr.bf16.mxu0 %v1356
        %2935 = vmatpush1.bf16.msra.mxu0 %v1355
        %2936 = vmatprep.subr.bf16.mxu0 %v1358
        %2937 = vmatpush1.bf16.msra.mxu0 %v1357
        %2938 = vmatprep.subr.bf16.mxu0 %v1360
        %2939 = vmatpush1.bf16.msra.mxu0 %v1359
        %2940 = vmatprep.subr.bf16.mxu0 %v1362
        %2941 = vmatpush1.bf16.msra.mxu0 %v1361
        %2942 = vmatprep.subr.bf16.mxu0 %v1364
        %2943 = vmatpush1.bf16.msra.mxu0 %v1363
        %2944 = vmatprep.subr.bf16.mxu0 %v1366
        %2945 = vmatpush1.bf16.msra.mxu0 %v1365
        %2946 = vmatprep.subr.bf16.mxu0 %v1368
        %2947 = vmatpush1.bf16.msra.mxu0 %v1367
        %2948 = vmatprep.subr.bf16.mxu0 %v1370
        %2949 = vmatpush1.bf16.msra.mxu0 %v1369
        %2950 = vmatprep.subr.bf16.mxu0 %v1372
        %2951 = vmatpush1.bf16.msra.mxu0 %v1371
        %2952 = vmatprep.subr.bf16.mxu0 %v1374
        %2953 = vmatpush1.bf16.msra.mxu0 %v1373
        %2954 = vmatprep.subr.bf16.mxu0 %v1376
        %2955 = vmatpush1.bf16.msra.mxu0 %v1375
        %2956 = vmatprep.subr.bf16.mxu0 %v1378
        %2957 = vmatpush1.bf16.msra.mxu0 %v1377
        %2958 = vmatprep.subr.bf16.mxu0 %v1380
        %2959 = vmatpush1.bf16.msra.mxu0 %v1379
        %2960 = vmatprep.subr.bf16.mxu0 %v1382
        %2961 = vmatpush1.bf16.msra.mxu0 %v1381
        %2962 = vmatprep.subr.bf16.mxu0 %v1384
        %2963 = vmatpush1.bf16.msra.mxu0 %v1383
        %2964 = vmatprep.subr.bf16.mxu0 %v1386
        %2965 = vmatpush1.bf16.msra.mxu0 %v1385
        %2966 = vmatprep.mubr.bf16.mxu0 %v2254
        %2967 = vmatmul.mubr.bf16.gmra.mrb[0].mxu0 %v2252
        %v2968 = vpop.f32.mrb[0].mxu0
        %v2969 = vadd.f32 %v2928, %v2968
        %v2970 = vpop.f32.mrb[0].mxu0
        %v2971 = vadd.f32 %v2930, %v2970
        %v2972 = vpop.f32.mrb[0].mxu0
        %v2973 = vpop.f32.mrb[0].mxu0
        %2974 = vdwg.mxu0
        %2975 = vmatprep.subr.bf16.mxu0 %v1388
        %2976 = vmatpush1.bf16.msra.mxu0 %v1387
        %2977 = vmatprep.subr.bf16.mxu0 %v1390
        %2978 = vmatpush1.bf16.msra.mxu0 %v1389
        %2979 = vmatprep.subr.bf16.mxu0 %v1392
        %2980 = vmatpush1.bf16.msra.mxu0 %v1391
        %2981 = vmatprep.subr.bf16.mxu0 %v1394
        %2982 = vmatpush1.bf16.msra.mxu0 %v1393
        %2983 = vmatprep.subr.bf16.mxu0 %v1396
        %2984 = vmatpush1.bf16.msra.mxu0 %v1395
        %2985 = vmatprep.subr.bf16.mxu0 %v1398
        %2986 = vmatpush1.bf16.msra.mxu0 %v1397
        %2987 = vmatprep.subr.bf16.mxu0 %v1400
        %2988 = vmatpush1.bf16.msra.mxu0 %v1399
        %2989 = vmatprep.subr.bf16.mxu0 %v1402
        %2990 = vmatpush1.bf16.msra.mxu0 %v1401
        %2991 = vmatprep.subr.bf16.mxu0 %v1404
        %2992 = vmatpush1.bf16.msra.mxu0 %v1403
        %2993 = vmatprep.subr.bf16.mxu0 %v1406
        %2994 = vmatpush1.bf16.msra.mxu0 %v1405
        %2995 = vmatprep.subr.bf16.mxu0 %v1408
        %2996 = vmatpush1.bf16.msra.mxu0 %v1407
        %2997 = vmatprep.subr.bf16.mxu0 %v1410
        %2998 = vmatpush1.bf16.msra.mxu0 %v1409
        %2999 = vmatprep.subr.bf16.mxu0 %v1412
        %3000 = vmatpush1.bf16.msra.mxu0 %v1411
        %3001 = vmatprep.subr.bf16.mxu0 %v1414
        %3002 = vmatpush1.bf16.msra.mxu0 %v1413
        %3003 = vmatprep.subr.bf16.mxu0 %v1416
        %3004 = vmatpush1.bf16.msra.mxu0 %v1415
        %3005 = vmatprep.subr.bf16.mxu0 %v1418
        %3006 = vmatpush1.bf16.msra.mxu0 %v1417
        %3007 = vmatprep.mubr.bf16.mxu0 %v2251
        %3008 = vmatmul.mubr.bf16.gmra.mrb[0].mxu0 %v2237
        %v3009 = vpop.f32.mrb[0].mxu0
        %v3010 = vadd.f32 %v2969, %v3009
        %v3011 = vpop.f32.mrb[0].mxu0
        %v3012 = vadd.f32 %v2971, %v3011
        %v3013 = vpop.f32.mrb[0].mxu0
        %v3014 = vpop.f32.mrb[0].mxu0
        %3015 = vdwg.mxu0
        %3016 = vmatprep.subr.bf16.mxu0 %v1420
        %3017 = vmatpush1.bf16.msra.mxu0 %v1419
        %3018 = vmatprep.subr.bf16.mxu0 %v1422
        %3019 = vmatpush1.bf16.msra.mxu0 %v1421
        %3020 = vmatprep.subr.bf16.mxu0 %v1424
        %3021 = vmatpush1.bf16.msra.mxu0 %v1423
        %3022 = vmatprep.subr.bf16.mxu0 %v1426
        %3023 = vmatpush1.bf16.msra.mxu0 %v1425
        %3024 = vmatprep.subr.bf16.mxu0 %v1428
        %3025 = vmatpush1.bf16.msra.mxu0 %v1427
        %3026 = vmatprep.subr.bf16.mxu0 %v1430
        %3027 = vmatpush1.bf16.msra.mxu0 %v1429
        %3028 = vmatprep.subr.bf16.mxu0 %v1432
        %3029 = vmatpush1.bf16.msra.mxu0 %v1431
        %3030 = vmatprep.subr.bf16.mxu0 %v1434
        %3031 = vmatpush1.bf16.msra.mxu0 %v1433
        %3032 = vmatprep.subr.bf16.mxu0 %v1436
        %3033 = vmatpush1.bf16.msra.mxu0 %v1435
        %3034 = vmatprep.subr.bf16.mxu0 %v1438
        %3035 = vmatpush1.bf16.msra.mxu0 %v1437
        %3036 = vmatprep.subr.bf16.mxu0 %v1440
        %3037 = vmatpush1.bf16.msra.mxu0 %v1439
        %3038 = vmatprep.subr.bf16.mxu0 %v1442
        %3039 = vmatpush1.bf16.msra.mxu0 %v1441
        %3040 = vmatprep.subr.bf16.mxu0 %v1444
        %3041 = vmatpush1.bf16.msra.mxu0 %v1443
        %3042 = vmatprep.subr.bf16.mxu0 %v1446
        %3043 = vmatpush1.bf16.msra.mxu0 %v1445
        %3044 = vmatprep.subr.bf16.mxu0 %v1448
        %3045 = vmatpush1.bf16.msra.mxu0 %v1447
        %3046 = vmatprep.subr.bf16.mxu0 %v1450
        %3047 = vmatpush1.bf16.msra.mxu0 %v1449
        %3048 = vmatprep.mubr.bf16.mxu0 %v2255
        %3049 = vmatmul.mubr.bf16.gmra.mrb[0].mxu0 %v2253
        %v3050 = vpop.f32.mrb[0].mxu0
        %v3051 = vadd.f32 %v3010, %v3050
        %v3052 = vpop.f32.mrb[0].mxu0
        %v3053 = vadd.f32 %v3012, %v3052
        %v3054 = vpop.f32.mrb[0].mxu0
        %v3055 = vpop.f32.mrb[0].mxu0
        %3056 = vdwg.mxu0
        %3057 = vmatprep.subr.bf16.mxu0 %v1452
        %3058 = vmatpush1.bf16.msra.mxu0 %v1451
        %3059 = vmatprep.subr.bf16.mxu0 %v1454
        %3060 = vmatpush1.bf16.msra.mxu0 %v1453
        %3061 = vmatprep.subr.bf16.mxu0 %v1456
        %3062 = vmatpush1.bf16.msra.mxu0 %v1455
        %3063 = vmatprep.subr.bf16.mxu0 %v1458
        %3064 = vmatpush1.bf16.msra.mxu0 %v1457
        %3065 = vmatprep.subr.bf16.mxu0 %v1460
        %3066 = vmatpush1.bf16.msra.mxu0 %v1459
        %3067 = vmatprep.subr.bf16.mxu0 %v1462
        %3068 = vmatpush1.bf16.msra.mxu0 %v1461
        %3069 = vmatprep.subr.bf16.mxu0 %v1464
        %3070 = vmatpush1.bf16.msra.mxu0 %v1463
        %3071 = vmatprep.subr.bf16.mxu0 %v1466
        %3072 = vmatpush1.bf16.msra.mxu0 %v1465
        %3073 = vmatprep.subr.bf16.mxu0 %v1468
        %3074 = vmatpush1.bf16.msra.mxu0 %v1467
        %3075 = vmatprep.subr.bf16.mxu0 %v1470
        %3076 = vmatpush1.bf16.msra.mxu0 %v1469
        %3077 = vmatprep.subr.bf16.mxu0 %v1472
        %3078 = vmatpush1.bf16.msra.mxu0 %v1471
        %3079 = vmatprep.subr.bf16.mxu0 %v1474
        %3080 = vmatpush1.bf16.msra.mxu0 %v1473
        %3081 = vmatprep.subr.bf16.mxu0 %v1476
        %3082 = vmatpush1.bf16.msra.mxu0 %v1475
        %3083 = vmatprep.subr.bf16.mxu0 %v1478
        %3084 = vmatpush1.bf16.msra.mxu0 %v1477
        %3085 = vmatprep.subr.bf16.mxu0 %v1480
        %3086 = vmatpush1.bf16.msra.mxu0 %v1479
        %3087 = vmatprep.subr.bf16.mxu0 %v1482
        %3088 = vmatpush1.bf16.msra.mxu0 %v1481
        %3089 = vmatprep.mubr.bf16.mxu0 %v2293
        %3090 = vmatmul.mubr.bf16.gmra.mrb[0].mxu0 %v2279
        %v3091 = vpop.f32.mrb[0].mxu0
        %v3092 = vadd.f32 %v3051, %v3091
        %v3093 = vpop.f32.mrb[0].mxu0
        %v3094 = vadd.f32 %v3053, %v3093
        %v3095 = vpop.f32.mrb[0].mxu0
        %v3096 = vpop.f32.mrb[0].mxu0
        %3097 = vdwg.mxu0
        %3098 = vmatprep.subr.bf16.mxu0 %v1484
        %3099 = vmatpush1.bf16.msra.mxu0 %v1483
        %3100 = vmatprep.subr.bf16.mxu0 %v1486
        %3101 = vmatpush1.bf16.msra.mxu0 %v1485
        %3102 = vmatprep.subr.bf16.mxu0 %v1488
        %3103 = vmatpush1.bf16.msra.mxu0 %v1487
        %3104 = vmatprep.subr.bf16.mxu0 %v1490
        %3105 = vmatpush1.bf16.msra.mxu0 %v1489
        %3106 = vmatprep.subr.bf16.mxu0 %v1492
        %3107 = vmatpush1.bf16.msra.mxu0 %v1491
        %3108 = vmatprep.subr.bf16.mxu0 %v1494
        %3109 = vmatpush1.bf16.msra.mxu0 %v1493
        %3110 = vmatprep.subr.bf16.mxu0 %v1496
        %3111 = vmatpush1.bf16.msra.mxu0 %v1495
        %3112 = vmatprep.subr.bf16.mxu0 %v1498
        %3113 = vmatpush1.bf16.msra.mxu0 %v1497
        %3114 = vmatprep.subr.bf16.mxu0 %v1500
        %3115 = vmatpush1.bf16.msra.mxu0 %v1499
        %3116 = vmatprep.subr.bf16.mxu0 %v1502
        %3117 = vmatpush1.bf16.msra.mxu0 %v1501
        %3118 = vmatprep.subr.bf16.mxu0 %v1504
        %3119 = vmatpush1.bf16.msra.mxu0 %v1503
        %3120 = vmatprep.subr.bf16.mxu0 %v1506
        %3121 = vmatpush1.bf16.msra.mxu0 %v1505
        %3122 = vmatprep.subr.bf16.mxu0 %v1508
        %3123 = vmatpush1.bf16.msra.mxu0 %v1507
        %3124 = vmatprep.subr.bf16.mxu0 %v1510
        %3125 = vmatpush1.bf16.msra.mxu0 %v1509
        %3126 = vmatprep.subr.bf16.mxu0 %v1512
        %3127 = vmatpush1.bf16.msra.mxu0 %v1511
        %3128 = vmatprep.subr.bf16.mxu0 %v1514
        %3129 = vmatpush1.bf16.msra.mxu0 %v1513
        %3130 = vmatprep.mubr.bf16.mxu0 %v2303
        %3131 = vmatmul.mubr.bf16.gmra.mrb[0].mxu0 %v2301
        %v3132 = vpop.f32.mrb[0].mxu0
        %v3133 = vadd.f32 %v3092, %v3132
        %v3134 = vpop.f32.mrb[0].mxu0
        %v3135 = vadd.f32 %v3094, %v3134
        %v3136 = vpop.f32.mrb[0].mxu0
        %v3137 = vpop.f32.mrb[0].mxu0
        %3138 = vdwg.mxu0
        %3139 = vmatprep.subr.bf16.mxu0 %v1516
        %3140 = vmatpush1.bf16.msra.mxu0 %v1515
        %3141 = vmatprep.subr.bf16.mxu0 %v1518
        %3142 = vmatpush1.bf16.msra.mxu0 %v1517
        %3143 = vmatprep.subr.bf16.mxu0 %v1520
        %3144 = vmatpush1.bf16.msra.mxu0 %v1519
        %3145 = vmatprep.subr.bf16.mxu0 %v1522
        %3146 = vmatpush1.bf16.msra.mxu0 %v1521
        %3147 = vmatprep.subr.bf16.mxu0 %v1524
        %3148 = vmatpush1.bf16.msra.mxu0 %v1523
        %3149 = vmatprep.subr.bf16.mxu0 %v1526
        %3150 = vmatpush1.bf16.msra.mxu0 %v1525
        %3151 = vmatprep.subr.bf16.mxu0 %v1528
        %3152 = vmatpush1.bf16.msra.mxu0 %v1527
        %3153 = vmatprep.subr.bf16.mxu0 %v1530
        %3154 = vmatpush1.bf16.msra.mxu0 %v1529
        %3155 = vmatprep.subr.bf16.mxu0 %v1532
        %3156 = vmatpush1.bf16.msra.mxu0 %v1531
        %3157 = vmatprep.subr.bf16.mxu0 %v1534
        %3158 = vmatpush1.bf16.msra.mxu0 %v1533
        %3159 = vmatprep.subr.bf16.mxu0 %v1536
        %3160 = vmatpush1.bf16.msra.mxu0 %v1535
        %3161 = vmatprep.subr.bf16.mxu0 %v1538
        %3162 = vmatpush1.bf16.msra.mxu0 %v1537
        %3163 = vmatprep.subr.bf16.mxu0 %v1540
        %3164 = vmatpush1.bf16.msra.mxu0 %v1539
        %3165 = vmatprep.subr.bf16.mxu0 %v1542
        %3166 = vmatpush1.bf16.msra.mxu0 %v1541
        %3167 = vmatprep.subr.bf16.mxu0 %v1544
        %3168 = vmatpush1.bf16.msra.mxu0 %v1543
        %3169 = vmatprep.subr.bf16.mxu0 %v1546
        %3170 = vmatpush1.bf16.msra.mxu0 %v1545
        %3171 = vmatprep.mubr.bf16.mxu0 %v2300
        %3172 = vmatmul.mubr.bf16.gmra.mrb[0].mxu0 %v2286
        %v3173 = vpop.f32.mrb[0].mxu0
        %v3174 = vadd.f32 %v3133, %v3173
        %v3175 = vpop.f32.mrb[0].mxu0
        %v3176 = vadd.f32 %v3135, %v3175
        %v3177 = vpop.f32.mrb[0].mxu0
        %v3178 = vpop.f32.mrb[0].mxu0
        %3179 = vdwg.mxu0
        %3180 = vmatprep.subr.bf16.mxu0 %v1548
        %3181 = vmatpush1.bf16.msra.mxu0 %v1547
        %3182 = vmatprep.subr.bf16.mxu0 %v1550
        %3183 = vmatpush1.bf16.msra.mxu0 %v1549
        %3184 = vmatprep.subr.bf16.mxu0 %v1552
        %3185 = vmatpush1.bf16.msra.mxu0 %v1551
        %3186 = vmatprep.subr.bf16.mxu0 %v1554
        %3187 = vmatpush1.bf16.msra.mxu0 %v1553
        %3188 = vmatprep.subr.bf16.mxu0 %v1556
        %3189 = vmatpush1.bf16.msra.mxu0 %v1555
        %3190 = vmatprep.subr.bf16.mxu0 %v1558
        %3191 = vmatpush1.bf16.msra.mxu0 %v1557
        %3192 = vmatprep.subr.bf16.mxu0 %v1560
        %3193 = vmatpush1.bf16.msra.mxu0 %v1559
        %3194 = vmatprep.subr.bf16.mxu0 %v1562
        %3195 = vmatpush1.bf16.msra.mxu0 %v1561
        %3196 = vmatprep.subr.bf16.mxu0 %v1564
        %3197 = vmatpush1.bf16.msra.mxu0 %v1563
        %3198 = vmatprep.subr.bf16.mxu0 %v1566
        %3199 = vmatpush1.bf16.msra.mxu0 %v1565
        %3200 = vmatprep.subr.bf16.mxu0 %v1568
        %3201 = vmatpush1.bf16.msra.mxu0 %v1567
        %3202 = vmatprep.subr.bf16.mxu0 %v1570
        %3203 = vmatpush1.bf16.msra.mxu0 %v1569
        %3204 = vmatprep.subr.bf16.mxu0 %v1572
        %3205 = vmatpush1.bf16.msra.mxu0 %v1571
        %3206 = vmatprep.subr.bf16.mxu0 %v1574
        %3207 = vmatpush1.bf16.msra.mxu0 %v1573
        %3208 = vmatprep.subr.bf16.mxu0 %v1576
        %3209 = vmatpush1.bf16.msra.mxu0 %v1575
        %3210 = vmatprep.subr.bf16.mxu0 %v1578
        %3211 = vmatpush1.bf16.msra.mxu0 %v1577
        %3212 = vmatprep.mubr.bf16.mxu0 %v2304
        %3213 = vmatmul.mubr.bf16.gmra.mrb[0].mxu0 %v2302
        %v3214 = vpop.f32.mrb[0].mxu0
        %v3215 = vadd.f32 %v3174, %v3214
        %v3216 = vpop.f32.mrb[0].mxu0
        %v3217 = vadd.f32 %v3176, %v3216
        %v3218 = vpop.f32.mrb[0].mxu0
        %v3219 = vpop.f32.mrb[0].mxu0
        %3220 = vdwg.mxu0
        %3221 = vmatprep.subr.bf16.mxu0 %v1580
        %3222 = vmatpush1.bf16.msra.mxu0 %v1579
        %3223 = vmatprep.subr.bf16.mxu0 %v1582
        %3224 = vmatpush1.bf16.msra.mxu0 %v1581
        %3225 = vmatprep.subr.bf16.mxu0 %v1584
        %3226 = vmatpush1.bf16.msra.mxu0 %v1583
        %3227 = vmatprep.subr.bf16.mxu0 %v1586
        %3228 = vmatpush1.bf16.msra.mxu0 %v1585
        %3229 = vmatprep.subr.bf16.mxu0 %v1588
        %3230 = vmatpush1.bf16.msra.mxu0 %v1587
        %3231 = vmatprep.subr.bf16.mxu0 %v1590
        %3232 = vmatpush1.bf16.msra.mxu0 %v1589
        %3233 = vmatprep.subr.bf16.mxu0 %v1592
        %3234 = vmatpush1.bf16.msra.mxu0 %v1591
        %3235 = vmatprep.subr.bf16.mxu0 %v1594
        %3236 = vmatpush1.bf16.msra.mxu0 %v1593
        %3237 = vmatprep.subr.bf16.mxu0 %v1596
        %3238 = vmatpush1.bf16.msra.mxu0 %v1595
        %3239 = vmatprep.subr.bf16.mxu0 %v1598
        %3240 = vmatpush1.bf16.msra.mxu0 %v1597
        %3241 = vmatprep.subr.bf16.mxu0 %v1600
        %3242 = vmatpush1.bf16.msra.mxu0 %v1599
        %3243 = vmatprep.subr.bf16.mxu0 %v1602
        %3244 = vmatpush1.bf16.msra.mxu0 %v1601
        %3245 = vmatprep.subr.bf16.mxu0 %v1604
        %3246 = vmatpush1.bf16.msra.mxu0 %v1603
        %3247 = vmatprep.subr.bf16.mxu0 %v1606
        %3248 = vmatpush1.bf16.msra.mxu0 %v1605
        %3249 = vmatprep.subr.bf16.mxu0 %v1608
        %3250 = vmatpush1.bf16.msra.mxu0 %v1607
        %3251 = vmatprep.subr.bf16.mxu0 %v1610
        %3252 = vmatpush1.bf16.msra.mxu0 %v1609
        %3253 = vmatprep.mubr.bf16.mxu0 %v2342
        %3254 = vmatmul.mubr.bf16.gmra.mrb[0].mxu0 %v2328
        %v3255 = vpop.f32.mrb[0].mxu0
        %v3256 = vadd.f32 %v3215, %v3255
        %v3257 = vpop.f32.mrb[0].mxu0
        %v3258 = vadd.f32 %v3217, %v3257
        %v3259 = vpop.f32.mrb[0].mxu0
        %v3260 = vpop.f32.mrb[0].mxu0
        %3261 = vdwg.mxu0
        %3262 = vmatprep.subr.bf16.mxu0 %v1612
        %3263 = vmatpush1.bf16.msra.mxu0 %v1611
        %3264 = vmatprep.subr.bf16.mxu0 %v1614
        %3265 = vmatpush1.bf16.msra.mxu0 %v1613
        %3266 = vmatprep.subr.bf16.mxu0 %v1616
        %3267 = vmatpush1.bf16.msra.mxu0 %v1615
        %3268 = vmatprep.subr.bf16.mxu0 %v1618
        %3269 = vmatpush1.bf16.msra.mxu0 %v1617
        %3270 = vmatprep.subr.bf16.mxu0 %v1620
        %3271 = vmatpush1.bf16.msra.mxu0 %v1619
        %3272 = vmatprep.subr.bf16.mxu0 %v1622
        %3273 = vmatpush1.bf16.msra.mxu0 %v1621
        %3274 = vmatprep.subr.bf16.mxu0 %v1624
        %3275 = vmatpush1.bf16.msra.mxu0 %v1623
        %3276 = vmatprep.subr.bf16.mxu0 %v1626
        %3277 = vmatpush1.bf16.msra.mxu0 %v1625
        %3278 = vmatprep.subr.bf16.mxu0 %v1628
        %3279 = vmatpush1.bf16.msra.mxu0 %v1627
        %3280 = vmatprep.subr.bf16.mxu0 %v1630
        %3281 = vmatpush1.bf16.msra.mxu0 %v1629
        %3282 = vmatprep.subr.bf16.mxu0 %v1632
        %3283 = vmatpush1.bf16.msra.mxu0 %v1631
        %3284 = vmatprep.subr.bf16.mxu0 %v1634
        %3285 = vmatpush1.bf16.msra.mxu0 %v1633
        %3286 = vmatprep.subr.bf16.mxu0 %v1636
        %3287 = vmatpush1.bf16.msra.mxu0 %v1635
        %3288 = vmatprep.subr.bf16.mxu0 %v1638
        %3289 = vmatpush1.bf16.msra.mxu0 %v1637
        %3290 = vmatprep.subr.bf16.mxu0 %v1640
        %3291 = vmatpush1.bf16.msra.mxu0 %v1639
        %3292 = vmatprep.subr.bf16.mxu0 %v1642
        %3293 = vmatpush1.bf16.msra.mxu0 %v1641
        %3294 = vmatprep.mubr.bf16.mxu0 %v2352
        %3295 = vmatmul.mubr.bf16.gmra.mrb[0].mxu0 %v2350
        %v3296 = vpop.f32.mrb[0].mxu0
        %v3297 = vadd.f32 %v3256, %v3296
        %v3298 = vpop.f32.mrb[0].mxu0
        %v3299 = vadd.f32 %v3258, %v3298
        %v3300 = vpop.f32.mrb[0].mxu0
        %v3301 = vpop.f32.mrb[0].mxu0
        %3302 = vdwg.mxu0
        %3303 = vmatprep.subr.bf16.mxu0 %v1644
        %3304 = vmatpush1.bf16.msra.mxu0 %v1643
        %3305 = vmatprep.subr.bf16.mxu0 %v1646
        %3306 = vmatpush1.bf16.msra.mxu0 %v1645
        %3307 = vmatprep.subr.bf16.mxu0 %v1648
        %3308 = vmatpush1.bf16.msra.mxu0 %v1647
        %3309 = vmatprep.subr.bf16.mxu0 %v1650
        %3310 = vmatpush1.bf16.msra.mxu0 %v1649
        %3311 = vmatprep.subr.bf16.mxu0 %v1652
        %3312 = vmatpush1.bf16.msra.mxu0 %v1651
        %3313 = vmatprep.subr.bf16.mxu0 %v1654
        %3314 = vmatpush1.bf16.msra.mxu0 %v1653
        %3315 = vmatprep.subr.bf16.mxu0 %v1656
        %3316 = vmatpush1.bf16.msra.mxu0 %v1655
        %3317 = vmatprep.subr.bf16.mxu0 %v1658
        %3318 = vmatpush1.bf16.msra.mxu0 %v1657
        %3319 = vmatprep.subr.bf16.mxu0 %v1660
        %3320 = vmatpush1.bf16.msra.mxu0 %v1659
        %3321 = vmatprep.subr.bf16.mxu0 %v1662
        %3322 = vmatpush1.bf16.msra.mxu0 %v1661
        %3323 = vmatprep.subr.bf16.mxu0 %v1664
        %3324 = vmatpush1.bf16.msra.mxu0 %v1663
        %3325 = vmatprep.subr.bf16.mxu0 %v1666
        %3326 = vmatpush1.bf16.msra.mxu0 %v1665
        %3327 = vmatprep.subr.bf16.mxu0 %v1668
        %3328 = vmatpush1.bf16.msra.mxu0 %v1667
        %3329 = vmatprep.subr.bf16.mxu0 %v1670
        %3330 = vmatpush1.bf16.msra.mxu0 %v1669
        %3331 = vmatprep.subr.bf16.mxu0 %v1672
        %3332 = vmatpush1.bf16.msra.mxu0 %v1671
        %3333 = vmatprep.subr.bf16.mxu0 %v1674
        %3334 = vmatpush1.bf16.msra.mxu0 %v1673
        %3335 = vmatprep.mubr.bf16.mxu0 %v2349
        %3336 = vmatmul.mubr.bf16.gmra.mrb[0].mxu0 %v2335
        %v3337 = vpop.f32.mrb[0].mxu0
        %v3338 = vadd.f32 %v3297, %v3337
        %v3339 = vpop.f32.mrb[0].mxu0
        %v3340 = vadd.f32 %v3299, %v3339
        %v3341 = vpop.f32.mrb[0].mxu0
        %v3342 = vpop.f32.mrb[0].mxu0
        %3343 = vdwg.mxu0
        %3344 = vmatprep.subr.bf16.mxu0 %v1676
        %3345 = vmatpush1.bf16.msra.mxu0 %v1675
        %3346 = vmatprep.subr.bf16.mxu0 %v1678
        %3347 = vmatpush1.bf16.msra.mxu0 %v1677
        %3348 = vmatprep.subr.bf16.mxu0 %v1680
        %3349 = vmatpush1.bf16.msra.mxu0 %v1679
        %3350 = vmatprep.subr.bf16.mxu0 %v1682
        %3351 = vmatpush1.bf16.msra.mxu0 %v1681
        %3352 = vmatprep.subr.bf16.mxu0 %v1684
        %3353 = vmatpush1.bf16.msra.mxu0 %v1683
        %3354 = vmatprep.subr.bf16.mxu0 %v1686
        %3355 = vmatpush1.bf16.msra.mxu0 %v1685
        %3356 = vmatprep.subr.bf16.mxu0 %v1688
        %3357 = vmatpush1.bf16.msra.mxu0 %v1687
        %3358 = vmatprep.subr.bf16.mxu0 %v1690
        %3359 = vmatpush1.bf16.msra.mxu0 %v1689
        %3360 = vmatprep.subr.bf16.mxu0 %v1692
        %3361 = vmatpush1.bf16.msra.mxu0 %v1691
        %3362 = vmatprep.subr.bf16.mxu0 %v1694
        %3363 = vmatpush1.bf16.msra.mxu0 %v1693
        %3364 = vmatprep.subr.bf16.mxu0 %v1696
        %3365 = vmatpush1.bf16.msra.mxu0 %v1695
        %3366 = vmatprep.subr.bf16.mxu0 %v1698
        %3367 = vmatpush1.bf16.msra.mxu0 %v1697
        %3368 = vmatprep.subr.bf16.mxu0 %v1700
        %3369 = vmatpush1.bf16.msra.mxu0 %v1699
        %3370 = vmatprep.subr.bf16.mxu0 %v1702
        %3371 = vmatpush1.bf16.msra.mxu0 %v1701
        %3372 = vmatprep.subr.bf16.mxu0 %v1704
        %3373 = vmatpush1.bf16.msra.mxu0 %v1703
        %3374 = vmatprep.subr.bf16.mxu0 %v1706
        %3375 = vmatpush1.bf16.msra.mxu0 %v1705
        %3376 = vmatprep.mubr.bf16.mxu0 %v2353
        %3377 = vmatmul.mubr.bf16.gmra.mrb[0].mxu0 %v2351
        %v3378 = vpop.f32.mrb[0].mxu0
        %v3379 = vadd.f32 %v3338, %v3378
        %v3380 = vpop.f32.mrb[0].mxu0
        %v3381 = vadd.f32 %v3340, %v3380
        %v3382 = vpop.f32.mrb[0].mxu0
        %v3383 = vpop.f32.mrb[0].mxu0
        %3384 = vdwg.mxu0
        %3385 = vmatprep.subr.bf16.mxu0 %v1708
        %3386 = vmatpush1.bf16.msra.mxu0 %v1707
        %3387 = vmatprep.subr.bf16.mxu0 %v1710
        %3388 = vmatpush1.bf16.msra.mxu0 %v1709
        %3389 = vmatprep.subr.bf16.mxu0 %v1712
        %3390 = vmatpush1.bf16.msra.mxu0 %v1711
        %3391 = vmatprep.subr.bf16.mxu0 %v1714
        %3392 = vmatpush1.bf16.msra.mxu0 %v1713
        %3393 = vmatprep.subr.bf16.mxu0 %v1716
        %3394 = vmatpush1.bf16.msra.mxu0 %v1715
        %3395 = vmatprep.subr.bf16.mxu0 %v1718
        %3396 = vmatpush1.bf16.msra.mxu0 %v1717
        %3397 = vmatprep.subr.bf16.mxu0 %v1720
        %3398 = vmatpush1.bf16.msra.mxu0 %v1719
        %3399 = vmatprep.subr.bf16.mxu0 %v1722
        %3400 = vmatpush1.bf16.msra.mxu0 %v1721
        %3401 = vmatprep.subr.bf16.mxu0 %v1724
        %3402 = vmatpush1.bf16.msra.mxu0 %v1723
        %3403 = vmatprep.subr.bf16.mxu0 %v1726
        %3404 = vmatpush1.bf16.msra.mxu0 %v1725
        %3405 = vmatprep.subr.bf16.mxu0 %v1728
        %3406 = vmatpush1.bf16.msra.mxu0 %v1727
        %3407 = vmatprep.subr.bf16.mxu0 %v1730
        %3408 = vmatpush1.bf16.msra.mxu0 %v1729
        %3409 = vmatprep.subr.bf16.mxu0 %v1732
        %3410 = vmatpush1.bf16.msra.mxu0 %v1731
        %3411 = vmatprep.subr.bf16.mxu0 %v1734
        %3412 = vmatpush1.bf16.msra.mxu0 %v1733
        %3413 = vmatprep.subr.bf16.mxu0 %v1736
        %3414 = vmatpush1.bf16.msra.mxu0 %v1735
        %3415 = vmatprep.subr.bf16.mxu0 %v1738
        %3416 = vmatpush1.bf16.msra.mxu0 %v1737
        %3417 = vmatprep.mubr.bf16.mxu0 %v2391
        %3418 = vmatmul.mubr.bf16.gmra.mrb[0].mxu0 %v2377
        %v3419 = vpop.f32.mrb[0].mxu0
        %v3420 = vadd.f32 %v3379, %v3419
        %v3421 = vpop.f32.mrb[0].mxu0
        %v3422 = vadd.f32 %v3381, %v3421
        %v3423 = vpop.f32.mrb[0].mxu0
        %v3424 = vpop.f32.mrb[0].mxu0
        %3425 = vdwg.mxu0
        %3426 = vmatprep.subr.bf16.mxu0 %v1740
        %3427 = vmatpush1.bf16.msra.mxu0 %v1739
        %3428 = vmatprep.subr.bf16.mxu0 %v1742
        %3429 = vmatpush1.bf16.msra.mxu0 %v1741
        %3430 = vmatprep.subr.bf16.mxu0 %v1744
        %3431 = vmatpush1.bf16.msra.mxu0 %v1743
        %3432 = vmatprep.subr.bf16.mxu0 %v1746
        %3433 = vmatpush1.bf16.msra.mxu0 %v1745
        %3434 = vmatprep.subr.bf16.mxu0 %v1748
        %3435 = vmatpush1.bf16.msra.mxu0 %v1747
        %3436 = vmatprep.subr.bf16.mxu0 %v1750
        %3437 = vmatpush1.bf16.msra.mxu0 %v1749
        %3438 = vmatprep.subr.bf16.mxu0 %v1752
        %3439 = vmatpush1.bf16.msra.mxu0 %v1751
        %3440 = vmatprep.subr.bf16.mxu0 %v1754
        %3441 = vmatpush1.bf16.msra.mxu0 %v1753
        %3442 = vmatprep.subr.bf16.mxu0 %v1756
        %3443 = vmatpush1.bf16.msra.mxu0 %v1755
        %3444 = vmatprep.subr.bf16.mxu0 %v1758
        %3445 = vmatpush1.bf16.msra.mxu0 %v1757
        %3446 = vmatprep.subr.bf16.mxu0 %v1760
        %3447 = vmatpush1.bf16.msra.mxu0 %v1759
        %3448 = vmatprep.subr.bf16.mxu0 %v1762
        %3449 = vmatpush1.bf16.msra.mxu0 %v1761
        %3450 = vmatprep.subr.bf16.mxu0 %v1764
        %3451 = vmatpush1.bf16.msra.mxu0 %v1763
        %3452 = vmatprep.subr.bf16.mxu0 %v1766
        %3453 = vmatpush1.bf16.msra.mxu0 %v1765
        %3454 = vmatprep.subr.bf16.mxu0 %v1768
        %3455 = vmatpush1.bf16.msra.mxu0 %v1767
        %3456 = vmatprep.subr.bf16.mxu0 %v1770
        %3457 = vmatpush1.bf16.msra.mxu0 %v1769
        %3458 = vmatprep.mubr.bf16.mxu0 %v2401
        %3459 = vmatmul.mubr.bf16.gmra.mrb[0].mxu0 %v2399
        %v3460 = vpop.f32.mrb[0].mxu0
        %v3461 = vadd.f32 %v3420, %v3460
        %v3462 = vpop.f32.mrb[0].mxu0
        %v3463 = vadd.f32 %v3422, %v3462
        %v3464 = vpop.f32.mrb[0].mxu0
        %v3465 = vpop.f32.mrb[0].mxu0
        %3466 = vdwg.mxu0
        %3467 = vmatprep.subr.bf16.mxu0 %v1772
        %3468 = vmatpush1.bf16.msra.mxu0 %v1771
        %3469 = vmatprep.subr.bf16.mxu0 %v1774
        %3470 = vmatpush1.bf16.msra.mxu0 %v1773
        %3471 = vmatprep.subr.bf16.mxu0 %v1776
        %3472 = vmatpush1.bf16.msra.mxu0 %v1775
        %3473 = vmatprep.subr.bf16.mxu0 %v1778
        %3474 = vmatpush1.bf16.msra.mxu0 %v1777
        %3475 = vmatprep.subr.bf16.mxu0 %v1780
        %3476 = vmatpush1.bf16.msra.mxu0 %v1779
        %3477 = vmatprep.subr.bf16.mxu0 %v1782
        %3478 = vmatpush1.bf16.msra.mxu0 %v1781
        %3479 = vmatprep.subr.bf16.mxu0 %v1784
        %3480 = vmatpush1.bf16.msra.mxu0 %v1783
        %3481 = vmatprep.subr.bf16.mxu0 %v1786
        %3482 = vmatpush1.bf16.msra.mxu0 %v1785
        %3483 = vmatprep.subr.bf16.mxu0 %v1788
        %3484 = vmatpush1.bf16.msra.mxu0 %v1787
        %3485 = vmatprep.subr.bf16.mxu0 %v1790
        %3486 = vmatpush1.bf16.msra.mxu0 %v1789
        %3487 = vmatprep.subr.bf16.mxu0 %v1792
        %3488 = vmatpush1.bf16.msra.mxu0 %v1791
        %3489 = vmatprep.subr.bf16.mxu0 %v1794
        %3490 = vmatpush1.bf16.msra.mxu0 %v1793
        %3491 = vmatprep.subr.bf16.mxu0 %v1796
        %3492 = vmatpush1.bf16.msra.mxu0 %v1795
        %3493 = vmatprep.subr.bf16.mxu0 %v1798
        %3494 = vmatpush1.bf16.msra.mxu0 %v1797
        %3495 = vmatprep.subr.bf16.mxu0 %v1800
        %3496 = vmatpush1.bf16.msra.mxu0 %v1799
        %3497 = vmatprep.subr.bf16.mxu0 %v1802
        %3498 = vmatpush1.bf16.msra.mxu0 %v1801
        %3499 = vmatprep.mubr.bf16.mxu0 %v2398
        %3500 = vmatmul.mubr.bf16.gmra.mrb[0].mxu0 %v2384
        %v3501 = vpop.f32.mrb[0].mxu0
        %v3502 = vadd.f32 %v3461, %v3501
        %v3503 = vpop.f32.mrb[0].mxu0
        %v3504 = vadd.f32 %v3463, %v3503
        %v3505 = vpop.f32.mrb[0].mxu0
        %v3506 = vpop.f32.mrb[0].mxu0
        %3507 = vdwg.mxu0
        %3508 = vmatprep.subr.bf16.mxu0 %v1804
        %3509 = vmatpush1.bf16.msra.mxu0 %v1803
        %3510 = vmatprep.subr.bf16.mxu0 %v1806
        %3511 = vmatpush1.bf16.msra.mxu0 %v1805
        %3512 = vmatprep.subr.bf16.mxu0 %v1808
        %3513 = vmatpush1.bf16.msra.mxu0 %v1807
        %3514 = vmatprep.subr.bf16.mxu0 %v1810
        %3515 = vmatpush1.bf16.msra.mxu0 %v1809
        %3516 = vmatprep.subr.bf16.mxu0 %v1812
        %3517 = vmatpush1.bf16.msra.mxu0 %v1811
        %3518 = vmatprep.subr.bf16.mxu0 %v1814
        %3519 = vmatpush1.bf16.msra.mxu0 %v1813
        %3520 = vmatprep.subr.bf16.mxu0 %v1816
        %3521 = vmatpush1.bf16.msra.mxu0 %v1815
        %3522 = vmatprep.subr.bf16.mxu0 %v1818
        %3523 = vmatpush1.bf16.msra.mxu0 %v1817
        %3524 = vmatprep.subr.bf16.mxu0 %v1820
        %3525 = vmatpush1.bf16.msra.mxu0 %v1819
        %3526 = vmatprep.subr.bf16.mxu0 %v1822
        %3527 = vmatpush1.bf16.msra.mxu0 %v1821
        %3528 = vmatprep.subr.bf16.mxu0 %v1824
        %3529 = vmatpush1.bf16.msra.mxu0 %v1823
        %3530 = vmatprep.subr.bf16.mxu0 %v1826
        %3531 = vmatpush1.bf16.msra.mxu0 %v1825
        %3532 = vmatprep.subr.bf16.mxu0 %v1828
        %3533 = vmatpush1.bf16.msra.mxu0 %v1827
        %3534 = vmatprep.subr.bf16.mxu0 %v1830
        %3535 = vmatpush1.bf16.msra.mxu0 %v1829
        %3536 = vmatprep.subr.bf16.mxu0 %v1832
        %3537 = vmatpush1.bf16.msra.mxu0 %v1831
        %3538 = vmatprep.subr.bf16.mxu0 %v1834
        %3539 = vmatpush1.bf16.msra.mxu0 %v1833
        %3540 = vmatprep.mubr.bf16.mxu0 %v2402
        %3541 = vmatmul.mubr.bf16.gmra.mrb[0].mxu0 %v2400
        %v3542 = vpop.f32.mrb[0].mxu0
        %v3543 = vadd.f32 %v3502, %v3542
        %v3544 = vpop.f32.mrb[0].mxu0
        %v3545 = vadd.f32 %v3504, %v3544
        %v3546 = vpop.f32.mrb[0].mxu0
        %v3547 = vpop.f32.mrb[0].mxu0
        %3548 = vdwg.mxu0
        %3549 = vmatprep.subr.bf16.mxu0 %v1836
        %3550 = vmatpush1.bf16.msra.mxu0 %v1835
        %3551 = vmatprep.subr.bf16.mxu0 %v1838
        %3552 = vmatpush1.bf16.msra.mxu0 %v1837
        %3553 = vmatprep.subr.bf16.mxu0 %v1840
        %3554 = vmatpush1.bf16.msra.mxu0 %v1839
        %3555 = vmatprep.subr.bf16.mxu0 %v1842
        %3556 = vmatpush1.bf16.msra.mxu0 %v1841
        %3557 = vmatprep.subr.bf16.mxu0 %v1844
        %3558 = vmatpush1.bf16.msra.mxu0 %v1843
        %3559 = vmatprep.subr.bf16.mxu0 %v1846
        %3560 = vmatpush1.bf16.msra.mxu0 %v1845
        %3561 = vmatprep.subr.bf16.mxu0 %v1848
        %3562 = vmatpush1.bf16.msra.mxu0 %v1847
        %3563 = vmatprep.subr.bf16.mxu0 %v1850
        %3564 = vmatpush1.bf16.msra.mxu0 %v1849
        %3565 = vmatprep.subr.bf16.mxu0 %v1852
        %3566 = vmatpush1.bf16.msra.mxu0 %v1851
        %3567 = vmatprep.subr.bf16.mxu0 %v1854
        %3568 = vmatpush1.bf16.msra.mxu0 %v1853
        %3569 = vmatprep.subr.bf16.mxu0 %v1856
        %3570 = vmatpush1.bf16.msra.mxu0 %v1855
        %3571 = vmatprep.subr.bf16.mxu0 %v1858
        %3572 = vmatpush1.bf16.msra.mxu0 %v1857
        %3573 = vmatprep.subr.bf16.mxu0 %v1860
        %3574 = vmatpush1.bf16.msra.mxu0 %v1859
        %3575 = vmatprep.subr.bf16.mxu0 %v1862
        %3576 = vmatpush1.bf16.msra.mxu0 %v1861
        %3577 = vmatprep.subr.bf16.mxu0 %v1864
        %3578 = vmatpush1.bf16.msra.mxu0 %v1863
        %3579 = vmatprep.subr.bf16.mxu0 %v1866
        %3580 = vmatpush1.bf16.msra.mxu0 %v1865
        %3581 = vmatprep.mubr.bf16.mxu0 %v2440
        %3582 = vmatmul.mubr.bf16.gmra.mrb[0].mxu0 %v2426
        %v3583 = vpop.f32.mrb[0].mxu0
        %v3584 = vadd.f32 %v3543, %v3583
        %v3585 = vpop.f32.mrb[0].mxu0
        %v3586 = vadd.f32 %v3545, %v3585
        %v3587 = vpop.f32.mrb[0].mxu0
        %v3588 = vpop.f32.mrb[0].mxu0
        %3589 = vdwg.mxu0
        %3590 = vmatprep.subr.bf16.mxu0 %v1868
        %3591 = vmatpush1.bf16.msra.mxu0 %v1867
        %3592 = vmatprep.subr.bf16.mxu0 %v1870
        %3593 = vmatpush1.bf16.msra.mxu0 %v1869
        %3594 = vmatprep.subr.bf16.mxu0 %v1872
        %3595 = vmatpush1.bf16.msra.mxu0 %v1871
        %3596 = vmatprep.subr.bf16.mxu0 %v1874
        %3597 = vmatpush1.bf16.msra.mxu0 %v1873
        %3598 = vmatprep.subr.bf16.mxu0 %v1876
        %3599 = vmatpush1.bf16.msra.mxu0 %v1875
        %3600 = vmatprep.subr.bf16.mxu0 %v1878
        %3601 = vmatpush1.bf16.msra.mxu0 %v1877
        %3602 = vmatprep.subr.bf16.mxu0 %v1880
        %3603 = vmatpush1.bf16.msra.mxu0 %v1879
        %3604 = vmatprep.subr.bf16.mxu0 %v1882
        %3605 = vmatpush1.bf16.msra.mxu0 %v1881
        %3606 = vmatprep.subr.bf16.mxu0 %v1884
        %3607 = vmatpush1.bf16.msra.mxu0 %v1883
        %3608 = vmatprep.subr.bf16.mxu0 %v1886
        %3609 = vmatpush1.bf16.msra.mxu0 %v1885
        %3610 = vmatprep.subr.bf16.mxu0 %v1888
        %3611 = vmatpush1.bf16.msra.mxu0 %v1887
        %3612 = vmatprep.subr.bf16.mxu0 %v1890
        %3613 = vmatpush1.bf16.msra.mxu0 %v1889
        %3614 = vmatprep.subr.bf16.mxu0 %v1892
        %3615 = vmatpush1.bf16.msra.mxu0 %v1891
        %3616 = vmatprep.subr.bf16.mxu0 %v1894
        %3617 = vmatpush1.bf16.msra.mxu0 %v1893
        %3618 = vmatprep.subr.bf16.mxu0 %v1896
        %3619 = vmatpush1.bf16.msra.mxu0 %v1895
        %3620 = vmatprep.subr.bf16.mxu0 %v1898
        %3621 = vmatpush1.bf16.msra.mxu0 %v1897
        %3622 = vmatprep.mubr.bf16.mxu0 %v2450
        %3623 = vmatmul.mubr.bf16.gmra.mrb[0].mxu0 %v2448
        %v3624 = vpop.f32.mrb[0].mxu0
        %v3625 = vadd.f32 %v3584, %v3624
        %v3626 = vpop.f32.mrb[0].mxu0
        %v3627 = vadd.f32 %v3586, %v3626
        %v3628 = vpop.f32.mrb[0].mxu0
        %v3629 = vpop.f32.mrb[0].mxu0
        %3630 = vdwg.mxu0
        %3631 = vmatprep.subr.bf16.mxu0 %v1900
        %3632 = vmatpush1.bf16.msra.mxu0 %v1899
        %3633 = vmatprep.subr.bf16.mxu0 %v1902
        %3634 = vmatpush1.bf16.msra.mxu0 %v1901
        %3635 = vmatprep.subr.bf16.mxu0 %v1904
        %3636 = vmatpush1.bf16.msra.mxu0 %v1903
        %3637 = vmatprep.subr.bf16.mxu0 %v1906
        %3638 = vmatpush1.bf16.msra.mxu0 %v1905
        %3639 = vmatprep.subr.bf16.mxu0 %v1908
        %3640 = vmatpush1.bf16.msra.mxu0 %v1907
        %3641 = vmatprep.subr.bf16.mxu0 %v1910
        %3642 = vmatpush1.bf16.msra.mxu0 %v1909
        %3643 = vmatprep.subr.bf16.mxu0 %v1912
        %3644 = vmatpush1.bf16.msra.mxu0 %v1911
        %3645 = vmatprep.subr.bf16.mxu0 %v1914
        %3646 = vmatpush1.bf16.msra.mxu0 %v1913
        %3647 = vmatprep.subr.bf16.mxu0 %v1916
        %3648 = vmatpush1.bf16.msra.mxu0 %v1915
        %3649 = vmatprep.subr.bf16.mxu0 %v1918
        %3650 = vmatpush1.bf16.msra.mxu0 %v1917
        %3651 = vmatprep.subr.bf16.mxu0 %v1920
        %3652 = vmatpush1.bf16.msra.mxu0 %v1919
        %3653 = vmatprep.subr.bf16.mxu0 %v1922
        %3654 = vmatpush1.bf16.msra.mxu0 %v1921
        %3655 = vmatprep.subr.bf16.mxu0 %v1924
        %3656 = vmatpush1.bf16.msra.mxu0 %v1923
        %3657 = vmatprep.subr.bf16.mxu0 %v1926
        %3658 = vmatpush1.bf16.msra.mxu0 %v1925
        %3659 = vmatprep.subr.bf16.mxu0 %v1928
        %3660 = vmatpush1.bf16.msra.mxu0 %v1927
        %3661 = vmatprep.subr.bf16.mxu0 %v1930
        %3662 = vmatpush1.bf16.msra.mxu0 %v1929
        %3663 = vmatprep.mubr.bf16.mxu0 %v2447
        %3664 = vmatmul.mubr.bf16.gmra.mrb[0].mxu0 %v2433
        %v3665 = vpop.f32.mrb[0].mxu0
        %v3666 = vadd.f32 %v3625, %v3665
        %v3667 = vpop.f32.mrb[0].mxu0
        %v3668 = vadd.f32 %v3627, %v3667
        %v3669 = vpop.f32.mrb[0].mxu0
        %v3670 = vpop.f32.mrb[0].mxu0
        %3671 = vdwg.mxu0
        %3672 = vmatprep.subr.bf16.mxu0 %v1932
        %3673 = vmatpush1.bf16.msra.mxu0 %v1931
        %3674 = vmatprep.subr.bf16.mxu0 %v1934
        %3675 = vmatpush1.bf16.msra.mxu0 %v1933
        %3676 = vmatprep.subr.bf16.mxu0 %v1936
        %3677 = vmatpush1.bf16.msra.mxu0 %v1935
        %3678 = vmatprep.subr.bf16.mxu0 %v1938
        %3679 = vmatpush1.bf16.msra.mxu0 %v1937
        %3680 = vmatprep.subr.bf16.mxu0 %v1940
        %3681 = vmatpush1.bf16.msra.mxu0 %v1939
        %3682 = vmatprep.subr.bf16.mxu0 %v1942
        %3683 = vmatpush1.bf16.msra.mxu0 %v1941
        %3684 = vmatprep.subr.bf16.mxu0 %v1944
        %3685 = vmatpush1.bf16.msra.mxu0 %v1943
        %3686 = vmatprep.subr.bf16.mxu0 %v1946
        %3687 = vmatpush1.bf16.msra.mxu0 %v1945
        %3688 = vmatprep.subr.bf16.mxu0 %v1948
        %3689 = vmatpush1.bf16.msra.mxu0 %v1947
        %3690 = vmatprep.subr.bf16.mxu0 %v1950
        %3691 = vmatpush1.bf16.msra.mxu0 %v1949
        %3692 = vmatprep.subr.bf16.mxu0 %v1952
        %3693 = vmatpush1.bf16.msra.mxu0 %v1951
        %3694 = vmatprep.subr.bf16.mxu0 %v1954
        %3695 = vmatpush1.bf16.msra.mxu0 %v1953
        %3696 = vmatprep.subr.bf16.mxu0 %v1956
        %3697 = vmatpush1.bf16.msra.mxu0 %v1955
        %3698 = vmatprep.subr.bf16.mxu0 %v1958
        %3699 = vmatpush1.bf16.msra.mxu0 %v1957
        %3700 = vmatprep.subr.bf16.mxu0 %v1960
        %3701 = vmatpush1.bf16.msra.mxu0 %v1959
        %3702 = vmatprep.subr.bf16.mxu0 %v1962
        %3703 = vmatpush1.bf16.msra.mxu0 %v1961
        %3704 = vmatprep.mubr.bf16.mxu0 %v2451
        %3705 = vmatmul.mubr.bf16.gmra.mrb[0].mxu0 %v2449
        %v3706 = vpop.f32.mrb[0].mxu0
        %v3707 = vadd.f32 %v3666, %v3706
        %v3708 = vpop.f32.mrb[0].mxu0
        %v3709 = vadd.f32 %v3668, %v3708
        %v3710 = vpop.f32.mrb[0].mxu0
        %v3711 = vpop.f32.mrb[0].mxu0
        %3712 = vdwg.mxu0
        %3713 = vmatprep.subr.bf16.mxu0 %v1964
        %3714 = vmatpush1.bf16.msra.mxu0 %v1963
        %3715 = vmatprep.subr.bf16.mxu0 %v1966
        %3716 = vmatpush1.bf16.msra.mxu0 %v1965
        %3717 = vmatprep.subr.bf16.mxu0 %v1968
        %3718 = vmatpush1.bf16.msra.mxu0 %v1967
        %3719 = vmatprep.subr.bf16.mxu0 %v1970
        %3720 = vmatpush1.bf16.msra.mxu0 %v1969
        %3721 = vmatprep.subr.bf16.mxu0 %v1972
        %3722 = vmatpush1.bf16.msra.mxu0 %v1971
        %3723 = vmatprep.subr.bf16.mxu0 %v1974
        %3724 = vmatpush1.bf16.msra.mxu0 %v1973
        %3725 = vmatprep.subr.bf16.mxu0 %v1976
        %3726 = vmatpush1.bf16.msra.mxu0 %v1975
        %3727 = vmatprep.subr.bf16.mxu0 %v1978
        %3728 = vmatpush1.bf16.msra.mxu0 %v1977
        %3729 = vmatprep.subr.bf16.mxu0 %v1980
        %3730 = vmatpush1.bf16.msra.mxu0 %v1979
        %3731 = vmatprep.subr.bf16.mxu0 %v1982
        %3732 = vmatpush1.bf16.msra.mxu0 %v1981
        %3733 = vmatprep.subr.bf16.mxu0 %v1984
        %3734 = vmatpush1.bf16.msra.mxu0 %v1983
        %3735 = vmatprep.subr.bf16.mxu0 %v1986
        %3736 = vmatpush1.bf16.msra.mxu0 %v1985
        %3737 = vmatprep.subr.bf16.mxu0 %v1988
        %3738 = vmatpush1.bf16.msra.mxu0 %v1987
        %3739 = vmatprep.subr.bf16.mxu0 %v1990
        %3740 = vmatpush1.bf16.msra.mxu0 %v1989
        %3741 = vmatprep.subr.bf16.mxu0 %v1992
        %3742 = vmatpush1.bf16.msra.mxu0 %v1991
        %3743 = vmatprep.subr.bf16.mxu0 %v1994
        %3744 = vmatpush1.bf16.msra.mxu0 %v1993
        %3745 = vmatprep.mubr.bf16.mxu0 %v2489
        %3746 = vmatmul.mubr.bf16.gmra.mrb[0].mxu0 %v2475
        %v3747 = vpop.f32.mrb[0].mxu0
        %v3748 = vadd.f32 %v3707, %v3747
        %v3749 = vpop.f32.mrb[0].mxu0
        %v3750 = vadd.f32 %v3709, %v3749
        %v3751 = vpop.f32.mrb[0].mxu0
        %v3752 = vpop.f32.mrb[0].mxu0
        %3753 = vdwg.mxu0
        %3754 = vmatprep.subr.bf16.mxu0 %v1996
        %3755 = vmatpush1.bf16.msra.mxu0 %v1995
        %3756 = vmatprep.subr.bf16.mxu0 %v1998
        %3757 = vmatpush1.bf16.msra.mxu0 %v1997
        %3758 = vmatprep.subr.bf16.mxu0 %v2000
        %3759 = vmatpush1.bf16.msra.mxu0 %v1999
        %3760 = vmatprep.subr.bf16.mxu0 %v2002
        %3761 = vmatpush1.bf16.msra.mxu0 %v2001
        %3762 = vmatprep.subr.bf16.mxu0 %v2004
        %3763 = vmatpush1.bf16.msra.mxu0 %v2003
        %3764 = vmatprep.subr.bf16.mxu0 %v2006
        %3765 = vmatpush1.bf16.msra.mxu0 %v2005
        %3766 = vmatprep.subr.bf16.mxu0 %v2008
        %3767 = vmatpush1.bf16.msra.mxu0 %v2007
        %3768 = vmatprep.subr.bf16.mxu0 %v2010
        %3769 = vmatpush1.bf16.msra.mxu0 %v2009
        %3770 = vmatprep.subr.bf16.mxu0 %v2012
        %3771 = vmatpush1.bf16.msra.mxu0 %v2011
        %3772 = vmatprep.subr.bf16.mxu0 %v2014
        %3773 = vmatpush1.bf16.msra.mxu0 %v2013
        %3774 = vmatprep.subr.bf16.mxu0 %v2016
        %3775 = vmatpush1.bf16.msra.mxu0 %v2015
        %3776 = vmatprep.subr.bf16.mxu0 %v2018
        %3777 = vmatpush1.bf16.msra.mxu0 %v2017
        %3778 = vmatprep.subr.bf16.mxu0 %v2020
        %3779 = vmatpush1.bf16.msra.mxu0 %v2019
        %3780 = vmatprep.subr.bf16.mxu0 %v2022
        %3781 = vmatpush1.bf16.msra.mxu0 %v2021
        %3782 = vmatprep.subr.bf16.mxu0 %v2024
        %3783 = vmatpush1.bf16.msra.mxu0 %v2023
        %3784 = vmatprep.subr.bf16.mxu0 %v2026
        %3785 = vmatpush1.bf16.msra.mxu0 %v2025
        %3786 = vmatprep.mubr.bf16.mxu0 %v2499
        %3787 = vmatmul.mubr.bf16.gmra.mrb[0].mxu0 %v2497
        %v3788 = vpop.f32.mrb[0].mxu0
        %v3789 = vadd.f32 %v3748, %v3788
        %v3790 = vpop.f32.mrb[0].mxu0
        %v3791 = vadd.f32 %v3750, %v3790
        %v3792 = vpop.f32.mrb[0].mxu0
        %v3793 = vpop.f32.mrb[0].mxu0
        %3794 = vdwg.mxu0
        %3795 = vmatprep.subr.bf16.mxu0 %v2028
        %3796 = vmatpush1.bf16.msra.mxu0 %v2027
        %3797 = vmatprep.subr.bf16.mxu0 %v2030
        %3798 = vmatpush1.bf16.msra.mxu0 %v2029
        %3799 = vmatprep.subr.bf16.mxu0 %v2032
        %3800 = vmatpush1.bf16.msra.mxu0 %v2031
        %3801 = vmatprep.subr.bf16.mxu0 %v2034
        %3802 = vmatpush1.bf16.msra.mxu0 %v2033
        %3803 = vmatprep.subr.bf16.mxu0 %v2036
        %3804 = vmatpush1.bf16.msra.mxu0 %v2035
        %3805 = vmatprep.subr.bf16.mxu0 %v2038
        %3806 = vmatpush1.bf16.msra.mxu0 %v2037
        %3807 = vmatprep.subr.bf16.mxu0 %v2040
        %3808 = vmatpush1.bf16.msra.mxu0 %v2039
        %3809 = vmatprep.subr.bf16.mxu0 %v2042
        %3810 = vmatpush1.bf16.msra.mxu0 %v2041
        %3811 = vmatprep.subr.bf16.mxu0 %v2044
        %3812 = vmatpush1.bf16.msra.mxu0 %v2043
        %3813 = vmatprep.subr.bf16.mxu0 %v2046
        %3814 = vmatpush1.bf16.msra.mxu0 %v2045
        %3815 = vmatprep.subr.bf16.mxu0 %v2048
        %3816 = vmatpush1.bf16.msra.mxu0 %v2047
        %3817 = vmatprep.subr.bf16.mxu0 %v2050
        %3818 = vmatpush1.bf16.msra.mxu0 %v2049
        %3819 = vmatprep.subr.bf16.mxu0 %v2052
        %3820 = vmatpush1.bf16.msra.mxu0 %v2051
        %3821 = vmatprep.subr.bf16.mxu0 %v2054
        %3822 = vmatpush1.bf16.msra.mxu0 %v2053
        %3823 = vmatprep.subr.bf16.mxu0 %v2056
        %3824 = vmatpush1.bf16.msra.mxu0 %v2055
        %3825 = vmatprep.subr.bf16.mxu0 %v2058
        %3826 = vmatpush1.bf16.msra.mxu0 %v2057
        %3827 = vmatprep.mubr.bf16.mxu0 %v2496
        %3828 = vmatmul.mubr.bf16.gmra.mrb[0].mxu0 %v2482
        %v3829 = vpop.f32.mrb[0].mxu0
        %v3830 = vadd.f32 %v3789, %v3829
        %v3831 = vpop.f32.mrb[0].mxu0
        %v3832 = vadd.f32 %v3791, %v3831
        %v3833 = vpop.f32.mrb[0].mxu0
        %v3834 = vpop.f32.mrb[0].mxu0
        %3835 = vdwg.mxu0
        %3836 = vmatprep.subr.bf16.mxu0 %v2060
        %3837 = vmatpush1.bf16.msra.mxu0 %v2059
        %3838 = vmatprep.subr.bf16.mxu0 %v2062
        %3839 = vmatpush1.bf16.msra.mxu0 %v2061
        %3840 = vmatprep.subr.bf16.mxu0 %v2064
        %3841 = vmatpush1.bf16.msra.mxu0 %v2063
        %3842 = vmatprep.subr.bf16.mxu0 %v2066
        %3843 = vmatpush1.bf16.msra.mxu0 %v2065
        %3844 = vmatprep.subr.bf16.mxu0 %v2068
        %3845 = vmatpush1.bf16.msra.mxu0 %v2067
        %3846 = vmatprep.subr.bf16.mxu0 %v2070
        %3847 = vmatpush1.bf16.msra.mxu0 %v2069
        %3848 = vmatprep.subr.bf16.mxu0 %v2072
        %3849 = vmatpush1.bf16.msra.mxu0 %v2071
        %3850 = vmatprep.subr.bf16.mxu0 %v2074
        %3851 = vmatpush1.bf16.msra.mxu0 %v2073
        %3852 = vmatprep.subr.bf16.mxu0 %v2076
        %3853 = vmatpush1.bf16.msra.mxu0 %v2075
        %3854 = vmatprep.subr.bf16.mxu0 %v2078
        %3855 = vmatpush1.bf16.msra.mxu0 %v2077
        %3856 = vmatprep.subr.bf16.mxu0 %v2080
        %3857 = vmatpush1.bf16.msra.mxu0 %v2079
        %3858 = vmatprep.subr.bf16.mxu0 %v2082
        %3859 = vmatpush1.bf16.msra.mxu0 %v2081
        %3860 = vmatprep.subr.bf16.mxu0 %v2084
        %3861 = vmatpush1.bf16.msra.mxu0 %v2083
        %3862 = vmatprep.subr.bf16.mxu0 %v2086
        %3863 = vmatpush1.bf16.msra.mxu0 %v2085
        %3864 = vmatprep.subr.bf16.mxu0 %v2088
        %3865 = vmatpush1.bf16.msra.mxu0 %v2087
        %3866 = vmatprep.subr.bf16.mxu0 %v2090
        %3867 = vmatpush1.bf16.msra.mxu0 %v2089
        %3868 = vmatprep.mubr.bf16.mxu0 %v2500
        %3869 = vmatmul.mubr.bf16.gmra.mrb[0].mxu0 %v2498
        %v3870 = vpop.f32.mrb[0].mxu0
        %v3871 = vadd.f32 %v3830, %v3870
        %v3872 = vpop.f32.mrb[0].mxu0
        %v3873 = vadd.f32 %v3832, %v3872
        %v3874 = vpop.f32.mrb[0].mxu0
        %v3875 = vpop.f32.mrb[0].mxu0
        %3876 = vdwg.mxu0
        %v3878 = vlaneseq
        %v3879 = vshrl.u32 %v3878, 7
        %v3880 = vsub.s32 0, %v3879
        %v3881 = vrot.slane %v2092, %v3880
        %v3882 = vlaneseq
        %v3883 = vshrl.u32 %v3882, 7
        %v3884 = vsub.s32 1, %v3883
        %v3885 = vrot.slane %v2092, %v3884
        %v3888 = vmul.f32 %v3881, %v3871
        %v3889 = vmul.f32 %v3885, %v3873
        %v3892 = vcombine.low %v3888, %v3889
        %v3894 = vunpack.c.l.s4 1983009808
        %v3895 = vunpack.c.0.s8 %v3894
        %v3896 = vlaneseq
        %v3897 = vshrl.u32 %v3896, 7
        %v3898 = vsub.s32 %v3895, %v3897
        %v3899 = vrot.slane %v3892, %v3898
        %v3901 = vadd.f32 %v2091, %v3899
        %3902 = vst [vmem:[#allocation2] sm:$0xf] %v3901
        %p3903 = scmp.eq.s32.totalorder %s26, 1
        // Predicated region
        $region81: #{dqn_fully_forward.1} parent=51 // pred_check
          %p3904 = pneg %p3903
        $region82: #{dqn_fully_forward.1} parent=51 // pred_check_branch
          %3906 = sbr.rel (%p3904) target = $region84
        $region83: #{dqn_fully_forward.1} parent=51 // pred_region
          %v3907 = vld [vmem:[#allocation2] sm:$0xf]
          %v3908 = vld [vmem:[#allocation9] sm:$0x3]
          %v3910 = vlaneseq
          %v3911 = vshrl.u32 %v3910, 7
          %v3912 = vsub.s32 0, %v3911
          %v3913 = vrot.slane %v3908, %v3912
          %v3914 = vlaneseq
          %v3915 = vshrl.u32 %v3914, 7
          %v3916 = vsub.s32 1, %v3915
          %v3917 = vrot.slane %v3908, %v3916
          %v3918 = vcombine.low %v3913, %v3917
          %v3920 = vunpack.c.l.s4 1983009808
          %v3921 = vunpack.c.0.s8 %v3920
          %v3922 = vlaneseq
          %v3923 = vshrl.u32 %v3922, 7
          %v3924 = vsub.s32 %v3921, %v3923
          %v3925 = vrot.slane %v3918, %v3924
          %v3927 = vadd.f32 %v3907, %v3925
          %v3928 = vmax.f32 %v3927, 0.0
          %v3929 = vld [vmem:[#allocation11] sm:$0xff]
          %v3930 = vld [vmem:[#allocation11 + $0x8] sm:$0xff]
          %v3931 = vld [vmem:[#allocation11 + $0x10] sm:$0xff]
          %v3932 = vld [vmem:[#allocation11 + $0x18] sm:$0xff]
          %v3933 = vld [vmem:[#allocation11 + $0x20] sm:$0xff]
          %v3934 = vld [vmem:[#allocation11 + $0x28] sm:$0xff]
          %v3935 = vld [vmem:[#allocation11 + $0x30] sm:$0xff]
          %v3936 = vld [vmem:[#allocation11 + $0x38] sm:$0xff]
          %v3937 = vld [vmem:[#allocation11 + $0x40] sm:$0xff]
          %v3938 = vld [vmem:[#allocation11 + $0x48] sm:$0xff]
          %v3939 = vld [vmem:[#allocation11 + $0x50] sm:$0xff]
          %v3940 = vld [vmem:[#allocation11 + $0x58] sm:$0xff]
          %v3941 = vld [vmem:[#allocation11 + $0x60] sm:$0xff]
          %v3942 = vld [vmem:[#allocation11 + $0x68] sm:$0xff]
          %v3943 = vld [vmem:[#allocation11 + $0x70] sm:$0xff]
          %v3944 = vld [vmem:[#allocation11 + $0x78] sm:$0xff]
          %v3945 = vld [vmem:[#allocation11 + $0x80] sm:$0xff]
          %v3946 = vld [vmem:[#allocation11 + $0x88] sm:$0xff]
          %v3947 = vld [vmem:[#allocation11 + $0x90] sm:$0xff]
          %v3948 = vld [vmem:[#allocation11 + $0x98] sm:$0xff]
          %v3949 = vld [vmem:[#allocation11 + $0xa0] sm:$0xff]
          %v3950 = vld [vmem:[#allocation11 + $0xa8] sm:$0xff]
          %v3951 = vld [vmem:[#allocation11 + $0xb0] sm:$0xff]
          %v3952 = vld [vmem:[#allocation11 + $0xb8] sm:$0xff]
          %v3953 = vld [vmem:[#allocation11 + $0xc0] sm:$0xff]
          %v3954 = vld [vmem:[#allocation11 + $0xc8] sm:$0xff]
          %v3955 = vld [vmem:[#allocation11 + $0xd0] sm:$0xff]
          %v3956 = vld [vmem:[#allocation11 + $0xd8] sm:$0xff]
          %v3957 = vld [vmem:[#allocation11 + $0xe0] sm:$0xff]
          %v3958 = vld [vmem:[#allocation11 + $0xe8] sm:$0xff]
          %v3959 = vld [vmem:[#allocation11 + $0xf0] sm:$0xff]
          %v3960 = vld [vmem:[#allocation11 + $0xf8] sm:$0xff]
          %v3961 = vld [vmem:[#allocation12] sm:$0x1]
          %v3963 = vlaneseq
          %v3964 = vshrl.u32 %v3963, 7
          %v3965 = vsub.s32 0, %v3964
          %v3966 = vrot.slane %v3961, %v3965
          %v3970 = vunpack.c.l.s4 1983009808
          %v3971 = vunpack.c.0.s8 %v3970
          %v3972 = vlaneseq
          %v3973 = vshrl.u32 %v3972, 7
          %v3974 = vsub.s32 %v3971, %v3973
          %v3975 = vrot.slane %v3928, %v3974
          %v3976 = vcombine.high %v3975, %v3975
          %3979 = vmatprep.subr.mxu0 0.0
          %3980 = vmatpush1.msra.mxu0 %v3929
          %3981 = vmatprep.subr.mxu0 0.0
          %3982 = vmatpush1.msra.mxu0 %v3930
          %3983 = vmatprep.subr.mxu0 0.0
          %3984 = vmatpush1.msra.mxu0 %v3931
          %3985 = vmatprep.subr.mxu0 0.0
          %3986 = vmatpush1.msra.mxu0 %v3932
          %3987 = vmatprep.subr.mxu0 0.0
          %3988 = vmatpush1.msra.mxu0 %v3933
          %3989 = vmatprep.subr.mxu0 0.0
          %3990 = vmatpush1.msra.mxu0 %v3934
          %3991 = vmatprep.subr.mxu0 0.0
          %3992 = vmatpush1.msra.mxu0 %v3935
          %3993 = vmatprep.subr.mxu0 0.0
          %3994 = vmatpush1.msra.mxu0 %v3936
          %3995 = vmatprep.subr.mxu0 0.0
          %3996 = vmatpush1.msra.mxu0 %v3937
          %3997 = vmatprep.subr.mxu0 0.0
          %3998 = vmatpush1.msra.mxu0 %v3938
          %3999 = vmatprep.subr.mxu0 0.0
          %4000 = vmatpush1.msra.mxu0 %v3939
          %4001 = vmatprep.subr.mxu0 0.0
          %4002 = vmatpush1.msra.mxu0 %v3940
          %4003 = vmatprep.subr.mxu0 0.0
          %4004 = vmatpush1.msra.mxu0 %v3941
          %4005 = vmatprep.subr.mxu0 0.0
          %4006 = vmatpush1.msra.mxu0 %v3942
          %4007 = vmatprep.subr.mxu0 0.0
          %4008 = vmatpush1.msra.mxu0 %v3943
          %4009 = vmatprep.subr.mxu0 0.0
          %4010 = vmatpush1.msra.mxu0 %v3944
          %4011 = vmatprep.subr.mxu0 0.0
          %4012 = vmatpush1.msra.mxu0 %v3945
          %4013 = vmatprep.subr.mxu0 0.0
          %4014 = vmatpush1.msra.mxu0 %v3946
          %4015 = vmatprep.subr.mxu0 0.0
          %4016 = vmatpush1.msra.mxu0 %v3947
          %4017 = vmatprep.subr.mxu0 0.0
          %4018 = vmatpush1.msra.mxu0 %v3948
          %4019 = vmatprep.subr.mxu0 0.0
          %4020 = vmatpush1.msra.mxu0 %v3949
          %4021 = vmatprep.subr.mxu0 0.0
          %4022 = vmatpush1.msra.mxu0 %v3950
          %4023 = vmatprep.subr.mxu0 0.0
          %4024 = vmatpush1.msra.mxu0 %v3951
          %4025 = vmatprep.subr.mxu0 0.0
          %4026 = vmatpush1.msra.mxu0 %v3952
          %4027 = vmatprep.subr.mxu0 0.0
          %4028 = vmatpush1.msra.mxu0 %v3953
          %4029 = vmatprep.subr.mxu0 0.0
          %4030 = vmatpush1.msra.mxu0 %v3954
          %4031 = vmatprep.subr.mxu0 0.0
          %4032 = vmatpush1.msra.mxu0 %v3955
          %4033 = vmatprep.subr.mxu0 0.0
          %4034 = vmatpush1.msra.mxu0 %v3956
          %4035 = vmatprep.subr.mxu0 0.0
          %4036 = vmatpush1.msra.mxu0 %v3957
          %4037 = vmatprep.subr.mxu0 0.0
          %4038 = vmatpush1.msra.mxu0 %v3958
          %4039 = vmatprep.subr.mxu0 0.0
          %4040 = vmatpush1.msra.mxu0 %v3959
          %4041 = vmatprep.subr.mxu0 0.0
          %4042 = vmatpush1.msra.mxu0 %v3960
          %4043 = vmatprep.mubr.f32.mxu0 %v3976
          %4044 = vmatmul.mubr.f32.gmra.mrb[0].mxu0 %v3975
          %v4045 = vpop.f32.mrb[0].mxu0
          %v4046 = vadd.f32 %v3966, %v4045
          %v4047 = vpop.f32.mrb[0].mxu0
          %4048 = vdwg.mxu0
          %4049 = vst [vmem:[#allocation14] sm:$0x3] %v4046
        $region84: #{dqn_fully_forward.1} parent=51 // pred_fallthru
          _
        // Predicated region
        $region85: #{dqn_fully_forward.1} parent=51 // pred_check
          %p4050 = pneg %p217
        $region86: #{dqn_fully_forward.1} parent=51 // pred_check_branch
          %4052 = sbr.rel (%p4050) target = $region88
        $region87: #{dqn_fully_forward.1} parent=51 // pred_region
          %s4054 = ssub.s32 32, 32
          %4055 = vsyncadd [#allocation5], %s4054
          %s4057 = sshll.u32 [#allocation14], 4
          %s4058 = int_to_ptr.vmem [resolvable:$true] %s4057
          %4060 = dma.vmem_to_hbm [thread:$0]  %s4058, 32, %s8, [#allocation5]
        $region88: #{dqn_fully_forward.1} parent=51 // pred_fallthru
          _
        // Predicated region
        $region89: #{dqn_fully_forward.1} parent=51 // pred_check
          %p4061 = pneg %p217
        $region90: #{dqn_fully_forward.1} parent=51 // pred_check_branch
          %4063 = sbr.rel (%p4061) target = $region92
        $region91: #{dqn_fully_forward.1} parent=51 // pred_region
          %4064 = dma.done [#allocation5], 32
        $region92: #{dqn_fully_forward.1} parent=51 // pred_fallthru
          _
      $region52: #{dqn_fully_forward.1} parent=5 // pred_fallthru
        _
      %p4065 = scmp.le.s32.totalorder 2, %s21
      // Predicated region
      $region93: #{dqn_fully_forward.1} parent=5 // pred_check
        %p4066 = pneg %p4065
      $region94: #{dqn_fully_forward.1} parent=5 // pred_check_branch
        %4068 = sbr.rel (%p4066) target = $region96
      $region95: #{dqn_fully_forward.1} parent=5 // pred_region
        %s4069 = ssub.s32 %s21, 2
      $region96: #{dqn_fully_forward.1} parent=5 // pred_fallthru
        _
    $region6: #{dqn_fully_forward.1} parent=1 // loop_footer
      %s25 = sadd.s32 1, %s21
    $region7: #{dqn_fully_forward.1} parent=1 // loop_footer_branch
      %20 = sbr.rel target = $region3
    $region8: #{dqn_fully_forward.1} parent=1 // loop_exit
      _
    %4070 = vsyncpa [#allocation4], 1
    %s4071 = scalar_lea.sflag [#allocation4], 1
    %4072 = vsyncpa %s4071, 1
    %4073 = vsyncpa [#allocation7], 1
    %4074 = vsyncpa [#allocation10], 1
    %4075 = vsyncpa [#allocation13], 1
    %4076 = vsyncpa [#allocation5], 1
    %s4077 = scalar_lea.sflag [#allocation5], 1
    %4078 = vsyncpa %s4077, 1

</llo_original>
